<compile_context>
chip_gen: v7x
topology: tpu7x:2x2x1
jax: 0.10.0
libtpu: 0.0.40
codegen_flags: <defaults>
</compile_context>

<pallas_src>
import functools

import jax
import jax.numpy as jnp
from jax.experimental import pallas as pl
from jax.experimental.pallas import tpu as pltpu

BN_EPS = 1e-5
LANE = 128
MAX_ROW_TILE = 512

_CPARAMS_1D = pltpu.CompilerParams(
    dimension_semantics=("parallel",),
    vmem_limit_bytes=32 * 1024 * 1024,
)


def _round_up(x, m):
    return (x + m - 1) // m * m


def _silu(x):
    return x * jax.nn.sigmoid(x)


def _row_tiling(n):
    """Row tile: multiple of 8, <= MAX_ROW_TILE, >= 2 grid steps when possible."""
    rt = min(MAX_ROW_TILE, max(8, _round_up((n + 1) // 2, 8)))
    return rt, _round_up(n, rt)


# ----------------------------------------------------------------------------
# Fused cv1 + cv2: 1x1 conv + folded BN + SiLU, one matmul, two outputs.
# ----------------------------------------------------------------------------
def _pw_dual_kernel(x_ref, w_ref, scale_ref, bias_ref, a_ref, b_ref):
    y = jnp.dot(x_ref[...], w_ref[...], preferred_element_type=jnp.float32)
    y = _silu(y * scale_ref[...] + bias_ref[...])
    cp = a_ref.shape[-1]                       # lane-aligned split (cp % 128 == 0)
    a_ref[...] = y[:, :cp].astype(a_ref.dtype)
    b_ref[...] = y[:, cp:].astype(b_ref.dtype)


def pw_dual_conv(x2d, w, scale, bias, row_tile):
    n, cin = x2d.shape
    two_cp = w.shape[1]
    cp = two_cp // 2
    return pl.pallas_call(
        _pw_dual_kernel,
        out_shape=(jax.ShapeDtypeStruct((n, cp), jnp.bfloat16),
                   jax.ShapeDtypeStruct((n, cp), jnp.bfloat16)),
        grid=(n // row_tile,),
        in_specs=[
            pl.BlockSpec((row_tile, cin), lambda i: (i, 0)),
            pl.BlockSpec((cin, two_cp), lambda i: (0, 0)),
            pl.BlockSpec((1, two_cp), lambda i: (0, 0)),
            pl.BlockSpec((1, two_cp), lambda i: (0, 0)),
        ],
        out_specs=(pl.BlockSpec((row_tile, cp), lambda i: (i, 0)),
                   pl.BlockSpec((row_tile, cp), lambda i: (i, 0))),
        compiler_params=_CPARAMS_1D,
    )(x2d, w, scale, bias)


# ----------------------------------------------------------------------------
# cv3: 1x1 conv over the (y, b) concat without materializing the concat.
# ----------------------------------------------------------------------------
def _pw_cat_kernel(y_ref, b_ref, wy_ref, wb_ref, scale_ref, bias_ref, o_ref):
    acc = jnp.dot(y_ref[...], wy_ref[...], preferred_element_type=jnp.float32)
    acc = acc + jnp.dot(b_ref[...], wb_ref[...], preferred_element_type=jnp.float32)
    o_ref[...] = _silu(acc * scale_ref[...] + bias_ref[...]).astype(o_ref.dtype)


def pw_cat_conv(y2d, b2d, wy, wb, scale, bias, row_tile):
    n, cp = y2d.shape
    cout = wy.shape[1]
    return pl.pallas_call(
        _pw_cat_kernel,
        out_shape=jax.ShapeDtypeStruct((n, cout), jnp.bfloat16),
        grid=(n // row_tile,),
        in_specs=[
            pl.BlockSpec((row_tile, cp), lambda i: (i, 0)),
            pl.BlockSpec((row_tile, cp), lambda i: (i, 0)),
            pl.BlockSpec((cp, cout), lambda i: (0, 0)),
            pl.BlockSpec((cp, cout), lambda i: (0, 0)),
            pl.BlockSpec((1, cout), lambda i: (0, 0)),
            pl.BlockSpec((1, cout), lambda i: (0, 0)),
        ],
        out_specs=pl.BlockSpec((row_tile, cout), lambda i: (i, 0)),
        compiler_params=_CPARAMS_1D,
    )(y2d, b2d, wy, wb, scale, bias)


# ----------------------------------------------------------------------------
# 3x3 conv (pad=1, stride=1) + folded BN + SiLU + per-batch spatial sum.
# Input is spatially padded once in XLA; the im2col slab is built in VMEM and a
# single matmul with K = 9*Cin is issued per slab (no 9x HBM tap traffic).
# ----------------------------------------------------------------------------
def _conv3_kernel(xp_ref, w_ref, scale_ref, bias_ref, o_ref, ps_ref, *, H, W, h_tile):
    cout = o_ref.shape[-1]
    ps = jnp.zeros((1, cout), jnp.float32)
    for r0 in range(0, H, h_tile):
        hs = min(h_tile, H - r0)
        # 9 shifted (hs, W, Cin) views from VMEM, concat along the 128-aligned
        # channel axis -> (hs, W, 9*Cin) -> (hs*W, 9*Cin).
        taps = [xp_ref[0, r0 + dy:r0 + dy + hs, dx:dx + W, :]
                for dy in range(3) for dx in range(3)]
        xt = jnp.concatenate(taps, axis=-1).reshape(hs * W, -1)
        acc = jnp.dot(xt, w_ref[...], preferred_element_type=jnp.float32)
        y = _silu(acc * scale_ref[...] + bias_ref[...])
        ps = ps + jnp.sum(y, axis=0, keepdims=True)
        o_ref[0, r0 * W:(r0 + hs) * W, :] = y.astype(o_ref.dtype)
    ps_ref[...] = ps[None]


def conv3x3_bn_silu_pool(x_nhwc, w9, scale, bias):
    B, H, W, cin = x_nhwc.shape
    cout = w9.shape[-1]
    xp = jnp.pad(x_nhwc, ((0, 0), (1, 1), (1, 1), (0, 0)))
    h_tile = max(1, min(H, 1024 // max(W, 1)))   # bound the VMEM im2col slab
    kern = functools.partial(_conv3_kernel, H=H, W=W, h_tile=h_tile)
    out, psum = pl.pallas_call(
        kern,
        out_shape=(jax.ShapeDtypeStruct((B, H * W, cout), jnp.bfloat16),
                   jax.ShapeDtypeStruct((B, 1, cout), jnp.float32)),
        grid=(B,),
        in_specs=[
            pl.BlockSpec((1, H + 2, W + 2, cin), lambda b: (b, 0, 0, 0)),
            pl.BlockSpec((9 * cin, cout), lambda b: (0, 0)),
            pl.BlockSpec((1, cout), lambda b: (0, 0)),
            pl.BlockSpec((1, cout), lambda b: (0, 0)),
        ],
        out_specs=(pl.BlockSpec((1, H * W, cout), lambda b: (b, 0, 0)),
                   pl.BlockSpec((1, 1, cout), lambda b: (b, 0, 0))),
        compiler_params=_CPARAMS_1D,
    )(xp, w9, scale, bias)
    return out, psum[:, 0, :]                   # (B, HW, Cout) bf16, (B, Cout) f32


# ----------------------------------------------------------------------------
# SELayerV2 channel re-scale (+ optional bottleneck residual add).
# ----------------------------------------------------------------------------
def _se_scale_add_kernel(x_ref, sc_ref, s_ref, o_ref):
    x = x_ref[...].astype(jnp.float32)
    o_ref[...] = (x * s_ref[...] + sc_ref[...].astype(jnp.float32)).astype(o_ref.dtype)


def _se_scale_kernel(x_ref, s_ref, o_ref):
    o_ref[...] = (x_ref[...].astype(jnp.float32) * s_ref[...]).astype(o_ref.dtype)


def se_scale(x3d, s, shortcut=None):
    B, HW, C = x3d.shape
    s3 = s.reshape(B, 1, C).astype(jnp.float32)
    x_spec = pl.BlockSpec((1, HW, C), lambda b: (b, 0, 0))
    s_spec = pl.BlockSpec((1, 1, C), lambda b: (b, 0, 0))
    out_shape = jax.ShapeDtypeStruct((B, HW, C), jnp.bfloat16)
    if shortcut is not None:
        return pl.pallas_call(
            _se_scale_add_kernel, out_shape=out_shape, grid=(B,),
            in_specs=[x_spec, x_spec, s_spec], out_specs=x_spec,
            compiler_params=_CPARAMS_1D,
        )(x3d, shortcut, s3)
    return pl.pallas_call(
        _se_scale_kernel, out_shape=out_shape, grid=(B,),
        in_specs=[x_spec, s_spec], out_specs=x_spec,
        compiler_params=_CPARAMS_1D,
    )(x3d, s3)


# ----------------------------------------------------------------------------
# Deterministic parameter construction (same shapes/math as the PyTorch module,
# BatchNorm folded in eval mode, channel dims zero-padded to multiples of 128).
# ----------------------------------------------------------------------------
def _fold_bn(key, cout, cpad):
    kg, kb, km, kv = jax.random.split(key, 4)
    gamma = 1.0 + 0.1 * jax.random.normal(kg, (cout,), jnp.float32)
    beta = 0.1 * jax.random.normal(kb, (cout,), jnp.float32)
    mean = 0.1 * jax.random.normal(km, (cout,), jnp.float32)
    var = 1.0 + 0.1 * jnp.abs(jax.random.normal(kv, (cout,), jnp.float32))
    scale = gamma / jnp.sqrt(var + BN_EPS)
    bias = beta - mean * scale
    scale = jnp.concatenate([scale, jnp.ones((cpad - cout,), jnp.float32)])
    bias = jnp.concatenate([bias, jnp.zeros((cpad - cout,), jnp.float32)])
    return scale[None, :], bias[None, :]


def _fused_cv12_params(key, c1, c_, c_p):
    k1, k2, kb1, kb2 = jax.random.split(key, 4)
    w1 = (jax.random.normal(k1, (c_, c1), jnp.float32) / jnp.sqrt(c1)).T
    w2 = (jax.random.normal(k2, (c_, c1), jnp.float32) / jnp.sqrt(c1)).T
    w = jnp.zeros((c1, 2 * c_p), jnp.float32)
    w = w.at[:, :c_].set(w1).at[:, c_p:c_p + c_].set(w2)
    s1, b1 = _fold_bn(kb1, c_, c_p)
    s2, b2 = _fold_bn(kb2, c_, c_p)
    return (w.astype(jnp.bfloat16),
            jnp.concatenate([s1, s2], axis=1),
            jnp.concatenate([b1, b2], axis=1))


def _conv3_params(key, cin, cout, cin_p, cout_p):
    kw, kbn = jax.random.split(key)
    w = jax.random.normal(kw, (cout, cin, 3, 3), jnp.float32) / jnp.sqrt(cin * 9)
    wt = jnp.transpose(w, (2, 3, 1, 0))                    # (kh, kw, cin, cout)
    wp = jnp.zeros((3, 3, cin_p, cout_p), jnp.float32).at[:, :, :cin, :cout].set(wt)
    scale, bias = _fold_bn(kbn, cout, cout_p)
    return wp.reshape(9 * cin_p, cout_p).astype(jnp.bfloat16), scale, bias


def _se_params(key, c, c_p, reduction=16):
    cr = c // reduction
    keys = jax.random.split(key, 5)
    ws = [jax.random.normal(keys[i], (cr, c), jnp.float32) / jnp.sqrt(c)
          for i in range(4)]
    wcat = jnp.concatenate([w.T for w in ws], axis=1)      # (c, 4*cr)
    wcat_p = jnp.zeros((c_p, 4 * cr), jnp.float32).at[:c, :].set(wcat)
    wfc = jax.random.normal(keys[4], (c, 4 * cr), jnp.float32) / jnp.sqrt(4 * cr)
    wfc_p = jnp.zeros((4 * cr, c_p), jnp.float32).at[:, :c].set(wfc.T)
    return wcat_p, wfc_p


def _cv3_params(key, c_, c2, c_p, c2_p):
    kw, kbn = jax.random.split(key)
    w = jax.random.normal(kw, (c2, 2 * c_), jnp.float32) / jnp.sqrt(2 * c_)
    wt = w.T                                               # (2*c_, c2)
    wy = jnp.zeros((c_p, c2_p), jnp.float32).at[:c_, :c2].set(wt[:c_])
    wb = jnp.zeros((c_p, c2_p), jnp.float32).at[:c_, :c2].set(wt[c_:])
    scale, bias = _fold_bn(kbn, c2, c2_p)
    return wy.astype(jnp.bfloat16), wb.astype(jnp.bfloat16), scale, bias


def init_params(key, c1, c2, n=1, shortcut=True, e=0.5):
    c_ = int(c2 * e)
    assert c_ >= 16 and c_ % 16 == 0, "SELayerV2 requires c_ >= 16 and c_ % 16 == 0"
    c_p = _round_up(c_, LANE)
    c2_p = _round_up(c2, LANE)
    keys = jax.random.split(key, 2 + n)
    params = {
        "c_": c_, "c_p": c_p, "c2": c2, "c2_p": c2_p,
        "cv12": _fused_cv12_params(keys[0], c1, c_, c_p),
        "cv3": _cv3_params(keys[1], c_, c2, c_p, c2_p),
        "m": [],
    }
    for i in range(n):
        bk = jax.random.split(keys[2 + i], 3)
        params["m"].append({
            "cv1": _conv3_params(bk[0], c_, c_, c_p, c_p),   # Bottleneck.cv1 (3x3)
            "cv2": _conv3_params(bk[1], c_, c_, c_p, c_p),   # Bottleneck.cv2 (3x3), g=1
            "se": _se_params(bk[2], c_, c_p),
            "add": bool(shortcut),        # c1 == c2 (== c_) inside Bottleneck (e=1.0)
        })
    return params


# ----------------------------------------------------------------------------
# Full C3_SENetV2 forward (NCHW in / NCHW out, like the PyTorch module).
# ----------------------------------------------------------------------------
def c3_senetv2(x_nchw, params):
    B, c1, H, W = x_nchw.shape
    c_p, c2, c2_p = params["c_p"], params["c2"], params["c2_p"]
    N = B * H * W
    rt, n_pad = _row_tiling(N)

    x = jnp.transpose(x_nchw, (0, 2, 3, 1)).astype(jnp.bfloat16)    # NHWC bf16
    x2d = x.reshape(N, c1)
    if n_pad != N:
        x2d = jnp.pad(x2d, ((0, n_pad - N), (0, 0)))

    # cv1 + cv2 fused: x read once, one wide matmul, two lane-dense outputs.
    a2d, b2d = pw_dual_conv(x2d, *params["cv12"], row_tile=rt)
    a2d_real = a2d[:N] if n_pad != N else a2d
    y = a2d_real.reshape(B, H * W, c_p)                             # cv1(x)

    for bp in params["m"]:                                          # Bottlenecks
        y4 = y.reshape(B, H, W, c_p)
        t1, _ = conv3x3_bn_silu_pool(y4, *bp["cv1"])
        t2, psum = conv3x3_bn_silu_pool(t1.reshape(B, H, W, c_p), *bp["cv2"])
        pooled = psum / float(H * W)                                # global avg pool
        wcat, wfc = bp["se"]
        hfc = jnp.maximum(pooled @ wcat, 0.0)                       # 4x (FC + ReLU)
        s = jax.nn.sigmoid(hfc @ wfc)                               # FC + sigmoid
        y = se_scale(t2, s, shortcut=y if bp["add"] else None)      # x*s (+ residual)

    # cv3 over the implicit concat(y, b).
    y2d = y.reshape(N, c_p)
    if n_pad != N:
        y2d = jnp.pad(y2d, ((0, n_pad - N), (0, 0)))
    out2d = pw_cat_conv(y2d, b2d, *params["cv3"], row_tile=rt)      # (n_pad, c2_p)
    out = out2d[:N, :c2].reshape(B, H, W, c2)
    return jnp.transpose(out, (0, 3, 1, 2)).astype(jnp.float32)     # NCHW f32


if __name__ == "__main__":
    key = jax.random.PRNGKey(0)
    kx, kp = jax.random.split(key)

    B, c1, c2, H, W = 2, 32, 32, 8, 8          # c_ = 16 (SELayerV2 reduction = 16)
    x = jax.random.normal(kx, (B, c1, H, W), jnp.float32)
    params = init_params(kp, c1, c2, n=1, shortcut=True, e=0.5)

    fwd = jax.jit(lambda xx: c3_senetv2(xx, params))
    out = jax.block_until_ready(fwd(x))
    assert out.shape == (B, c2, H, W), out.shape
    assert bool(jnp.all(jnp.isfinite(out)))
    print("KERNEL_OK")
</pallas_src>

<mosaic_0001>
module attributes {stable_mosaic.version = 11 : i64} {
  func.func @_pw_dual_kernel(%arg0: i32, %arg1: memref<64x32xbf16, #tpu.memory_space<vmem>>, %arg2: memref<32x256xbf16, #tpu.memory_space<vmem>>, %arg3: memref<1x256xf32, #tpu.memory_space<vmem>>, %arg4: memref<1x256xf32, #tpu.memory_space<vmem>>, %arg5: memref<64x128xbf16, #tpu.memory_space<vmem>>, %arg6: memref<64x128xbf16, #tpu.memory_space<vmem>>) attributes {dimension_semantics = [#tpu.dimension_semantics<parallel>], iteration_bounds = array<i64: 2>, scalar_prefetch = 0 : i64, scratch_operands = 0 : i64, tpu.core_type = #tpu.core_type<tc>, window_params = [{transform_indices = @transform_0, window_bounds = array<i64: 64, 32>}, {pipeline_mode = #tpu.pipeline_mode<synchronous>, transform_indices = @transform_1, window_bounds = array<i64: 32, 256>}, {pipeline_mode = #tpu.pipeline_mode<synchronous>, transform_indices = @transform_2, window_bounds = array<i64: 1, 256>}, {pipeline_mode = #tpu.pipeline_mode<synchronous>, transform_indices = @transform_3, window_bounds = array<i64: 1, 256>}, {transform_indices = @transform_4, window_bounds = array<i64: 64, 128>}, {transform_indices = @transform_5, window_bounds = array<i64: 64, 128>}]} {
    %c0 = arith.constant 0 : index
    %c0_0 = arith.constant 0 : index
    %0 = vector.load %arg1[%c0, %c0_0] : memref<64x32xbf16, #tpu.memory_space<vmem>>, vector<64x32xbf16>
    %c0_1 = arith.constant 0 : index
    %c0_2 = arith.constant 0 : index
    %1 = vector.load %arg2[%c0_1, %c0_2] : memref<32x256xbf16, #tpu.memory_space<vmem>>, vector<32x256xbf16>
    %cst = arith.constant dense<0.000000e+00> : vector<64x256xf32>
    %2 = tpu.matmul %0, %1, %cst {dimension_numbers = #tpu.dot_dimension_numbers<[1], [0], [0], [1], [0, 0, 1, 1], [], []>} : vector<64x32xbf16>, vector<32x256xbf16>, vector<64x256xf32> -> vector<64x256xf32>
    %c0_3 = arith.constant 0 : index
    %c0_4 = arith.constant 0 : index
    %3 = vector.load %arg3[%c0_3, %c0_4] : memref<1x256xf32, #tpu.memory_space<vmem>>, vector<1x256xf32>
    %4 = vector.broadcast %3 : vector<1x256xf32> to vector<64x256xf32>
    %5 = arith.mulf %2, %4 : vector<64x256xf32>
    %c0_5 = arith.constant 0 : index
    %c0_6 = arith.constant 0 : index
    %6 = vector.load %arg4[%c0_5, %c0_6] : memref<1x256xf32, #tpu.memory_space<vmem>>, vector<1x256xf32>
    %7 = vector.broadcast %6 : vector<1x256xf32> to vector<64x256xf32>
    %8 = arith.addf %5, %7 : vector<64x256xf32>
    %9 = arith.negf %8 : vector<64x256xf32>
    %10 = math.exp %9 : vector<64x256xf32>
    %cst_7 = arith.constant 1.000000e+00 : f32
    %11 = vector.broadcast %cst_7 : f32 to vector<64x256xf32>
    %12 = arith.addf %11, %10 : vector<64x256xf32>
    %13 = arith.divf %11, %12 : vector<64x256xf32>
    %14 = arith.mulf %8, %13 : vector<64x256xf32>
    %15 = vector.extract_strided_slice %14 {offsets = [0, 0], sizes = [64, 128], strides = [1, 1]} : vector<64x256xf32> to vector<64x128xf32>
    %16 = arith.truncf %15 : vector<64x128xf32> to vector<64x128xbf16>
    %c0_8 = arith.constant 0 : index
    %c0_9 = arith.constant 0 : index
    %17 = vector.load %arg5[%c0_8, %c0_9] : memref<64x128xbf16, #tpu.memory_space<vmem>>, vector<64x128xbf16>
    tpu.vector_store %arg5[%c0_8, %c0_9], %16 {strides = array<i32>} : memref<64x128xbf16, #tpu.memory_space<vmem>>, vector<64x128xbf16>,
    %18 = vector.extract_strided_slice %14 {offsets = [0, 128], sizes = [64, 128], strides = [1, 1]} : vector<64x256xf32> to vector<64x128xf32>
    %19 = arith.truncf %18 : vector<64x128xf32> to vector<64x128xbf16>
    %c0_10 = arith.constant 0 : index
    %c0_11 = arith.constant 0 : index
    %20 = vector.load %arg6[%c0_10, %c0_11] : memref<64x128xbf16, #tpu.memory_space<vmem>>, vector<64x128xbf16>
    tpu.vector_store %arg6[%c0_10, %c0_11], %19 {strides = array<i32>} : memref<64x128xbf16, #tpu.memory_space<vmem>>, vector<64x128xbf16>,
    return
  }
  func.func @transform_0(%arg0: i32) -> (i32, i32) {
    %c0_i32 = arith.constant 0 : i32
    %c0_i32_0 = arith.constant 0 : i32
    return %arg0, %c0_i32 : i32, i32
  }
  func.func @transform_1(%arg0: i32) -> (i32, i32) {
    %c0_i32 = arith.constant 0 : i32
    %c0_i32_0 = arith.constant 0 : i32
    %c0_i32_1 = arith.constant 0 : i32
    return %c0_i32, %c0_i32_0 : i32, i32
  }
  func.func @transform_2(%arg0: i32) -> (i32, i32) {
    %c0_i32 = arith.constant 0 : i32
    %c0_i32_0 = arith.constant 0 : i32
    %c0_i32_1 = arith.constant 0 : i32
    return %c0_i32, %c0_i32_0 : i32, i32
  }
  func.func @transform_3(%arg0: i32) -> (i32, i32) {
    %c0_i32 = arith.constant 0 : i32
    %c0_i32_0 = arith.constant 0 : i32
    %c0_i32_1 = arith.constant 0 : i32
    return %c0_i32, %c0_i32_0 : i32, i32
  }
  func.func @transform_4(%arg0: i32) -> (i32, i32) {
    %c0_i32 = arith.constant 0 : i32
    %c0_i32_0 = arith.constant 0 : i32
    return %arg0, %c0_i32 : i32, i32
  }
  func.func @transform_5(%arg0: i32) -> (i32, i32) {
    %c0_i32 = arith.constant 0 : i32
    %c0_i32_0 = arith.constant 0 : i32
    return %arg0, %c0_i32 : i32, i32
  }
}

module attributes {stable_mosaic.version = 11 : i64} {
  func.func @_conv3_kernel(%arg0: i32, %arg1: memref<1x10x10x128xbf16, #tpu.memory_space<vmem>>, %arg2: memref<1152x128xbf16, #tpu.memory_space<vmem>>, %arg3: memref<1x128xf32, #tpu.memory_space<vmem>>, %arg4: memref<1x128xf32, #tpu.memory_space<vmem>>, %arg5: memref<1x64x128xbf16, #tpu.memory_space<vmem>>, %arg6: memref<1x1x128xf32, #tpu.memory_space<vmem>>) attributes {dimension_semantics = [#tpu.dimension_semantics<parallel>], iteration_bounds = array<i64: 2>, scalar_prefetch = 0 : i64, scratch_operands = 0 : i64, tpu.core_type = #tpu.core_type<tc>, window_params = [{transform_indices = @transform_0, window_bounds = array<i64: 1, 10, 10, 128>}, {pipeline_mode = #tpu.pipeline_mode<synchronous>, transform_indices = @transform_1, window_bounds = array<i64: 1152, 128>}, {pipeline_mode = #tpu.pipeline_mode<synchronous>, transform_indices = @transform_2, window_bounds = array<i64: 1, 128>}, {pipeline_mode = #tpu.pipeline_mode<synchronous>, transform_indices = @transform_3, window_bounds = array<i64: 1, 128>}, {transform_indices = @transform_4, window_bounds = array<i64: 1, 64, 128>}, {transform_indices = @transform_5, window_bounds = array<i64: 1, 1, 128>}]} {
    %cst = arith.constant 0.000000e+00 : f32
    %0 = vector.broadcast %cst : f32 to vector<1x128xf32>
    %c0 = arith.constant 0 : index
    %c0_0 = arith.constant 0 : index
    %c0_1 = arith.constant 0 : index
    %c0_2 = arith.constant 0 : index
    %1 = vector.load %arg1[%c0, %c0_0, %c0_1, %c0_2] : memref<1x10x10x128xbf16, #tpu.memory_space<vmem>>, vector<1x8x8x128xbf16>
    %2 = vector.shape_cast %1 : vector<1x8x8x128xbf16> to vector<8x8x128xbf16>
    %c0_3 = arith.constant 0 : index
    %c0_4 = arith.constant 0 : index
    %c1 = arith.constant 1 : index
    %c0_5 = arith.constant 0 : index
    %3 = vector.load %arg1[%c0_3, %c0_4, %c1, %c0_5] : memref<1x10x10x128xbf16, #tpu.memory_space<vmem>>, vector<1x8x8x128xbf16>
    %4 = vector.shape_cast %3 : vector<1x8x8x128xbf16> to vector<8x8x128xbf16>
    %c0_6 = arith.constant 0 : index
    %c0_7 = arith.constant 0 : index
    %c2 = arith.constant 2 : index
    %c0_8 = arith.constant 0 : index
    %5 = vector.load %arg1[%c0_6, %c0_7, %c2, %c0_8] : memref<1x10x10x128xbf16, #tpu.memory_space<vmem>>, vector<1x8x8x128xbf16>
    %6 = vector.shape_cast %5 : vector<1x8x8x128xbf16> to vector<8x8x128xbf16>
    %c0_9 = arith.constant 0 : index
    %c1_10 = arith.constant 1 : index
    %c0_11 = arith.constant 0 : index
    %c0_12 = arith.constant 0 : index
    %7 = vector.load %arg1[%c0_9, %c1_10, %c0_11, %c0_12] : memref<1x10x10x128xbf16, #tpu.memory_space<vmem>>, vector<1x8x8x128xbf16>
    %8 = vector.shape_cast %7 : vector<1x8x8x128xbf16> to vector<8x8x128xbf16>
    %c0_13 = arith.constant 0 : index
    %c1_14 = arith.constant 1 : index
    %c1_15 = arith.constant 1 : index
    %c0_16 = arith.constant 0 : index
    %9 = vector.load %arg1[%c0_13, %c1_14, %c1_15, %c0_16] : memref<1x10x10x128xbf16, #tpu.memory_space<vmem>>, vector<1x8x8x128xbf16>
    %10 = vector.shape_cast %9 : vector<1x8x8x128xbf16> to vector<8x8x128xbf16>
    %c0_17 = arith.constant 0 : index
    %c1_18 = arith.constant 1 : index
    %c2_19 = arith.constant 2 : index
    %c0_20 = arith.constant 0 : index
    %11 = vector.load %arg1[%c0_17, %c1_18, %c2_19, %c0_20] : memref<1x10x10x128xbf16, #tpu.memory_space<vmem>>, vector<1x8x8x128xbf16>
    %12 = vector.shape_cast %11 : vector<1x8x8x128xbf16> to vector<8x8x128xbf16>
    %c0_21 = arith.constant 0 : index
    %c2_22 = arith.constant 2 : index
    %c0_23 = arith.constant 0 : index
    %c0_24 = arith.constant 0 : index
    %13 = vector.load %arg1[%c0_21, %c2_22, %c0_23, %c0_24] : memref<1x10x10x128xbf16, #tpu.memory_space<vmem>>, vector<1x8x8x128xbf16>
    %14 = vector.shape_cast %13 : vector<1x8x8x128xbf16> to vector<8x8x128xbf16>
    %c0_25 = arith.constant 0 : index
    %c2_26 = arith.constant 2 : index
    %c1_27 = arith.constant 1 : index
    %c0_28 = arith.constant 0 : index
    %15 = vector.load %arg1[%c0_25, %c2_26, %c1_27, %c0_28] : memref<1x10x10x128xbf16, #tpu.memory_space<vmem>>, vector<1x8x8x128xbf16>
    %16 = vector.shape_cast %15 : vector<1x8x8x128xbf16> to vector<8x8x128xbf16>
    %c0_29 = arith.constant 0 : index
    %c2_30 = arith.constant 2 : index
    %c2_31 = arith.constant 2 : index
    %c0_32 = arith.constant 0 : index
    %17 = vector.load %arg1[%c0_29, %c2_30, %c2_31, %c0_32] : memref<1x10x10x128xbf16, #tpu.memory_space<vmem>>, vector<1x8x8x128xbf16>
    %18 = vector.shape_cast %17 : vector<1x8x8x128xbf16> to vector<8x8x128xbf16>
    %19 = tpu.concatenate %2, %4, %6, %8, %10, %12, %14, %16, %18 in 2 : vector<8x8x128xbf16>, vector<8x8x128xbf16>, vector<8x8x128xbf16>, vector<8x8x128xbf16>, vector<8x8x128xbf16>, vector<8x8x128xbf16>, vector<8x8x128xbf16>, vector<8x8x128xbf16>, vector<8x8x128xbf16> -> vector<8x8x1152xbf16>
    %20 = vector.shape_cast %19 : vector<8x8x1152xbf16> to vector<64x1152xbf16>
    %c0_33 = arith.constant 0 : index
    %c0_34 = arith.constant 0 : index
    %21 = vector.load %arg2[%c0_33, %c0_34] : memref<1152x128xbf16, #tpu.memory_space<vmem>>, vector<1152x128xbf16>
    %cst_35 = arith.constant dense<0.000000e+00> : vector<64x128xf32>
    %22 = tpu.matmul %20, %21, %cst_35 {dimension_numbers = #tpu.dot_dimension_numbers<[1], [0], [0], [1], [0, 0, 1, 1], [], []>} : vector<64x1152xbf16>, vector<1152x128xbf16>, vector<64x128xf32> -> vector<64x128xf32>
    %c0_36 = arith.constant 0 : index
    %c0_37 = arith.constant 0 : index
    %23 = vector.load %arg3[%c0_36, %c0_37] : memref<1x128xf32, #tpu.memory_space<vmem>>, vector<1x128xf32>
    %24 = vector.broadcast %23 : vector<1x128xf32> to vector<64x128xf32>
    %25 = arith.mulf %22, %24 : vector<64x128xf32>
    %c0_38 = arith.constant 0 : index
    %c0_39 = arith.constant 0 : index
    %26 = vector.load %arg4[%c0_38, %c0_39] : memref<1x128xf32, #tpu.memory_space<vmem>>, vector<1x128xf32>
    %27 = vector.broadcast %26 : vector<1x128xf32> to vector<64x128xf32>
    %28 = arith.addf %25, %27 : vector<64x128xf32>
    %29 = arith.negf %28 : vector<64x128xf32>
    %30 = math.exp %29 : vector<64x128xf32>
    %cst_40 = arith.constant 1.000000e+00 : f32
    %31 = vector.broadcast %cst_40 : f32 to vector<64x128xf32>
    %32 = arith.addf %31, %30 : vector<64x128xf32>
    %33 = arith.divf %31, %32 : vector<64x128xf32>
    %34 = arith.mulf %28, %33 : vector<64x128xf32>
    %cst_41 = arith.constant dense<0.000000e+00> : vector<128xf32>
    %35 = vector.multi_reduction <add>, %34, %cst_41 [0] : vector<64x128xf32> to vector<128xf32>
    %36 = vector.shape_cast %35 : vector<128xf32> to vector<1x128xf32>
    %37 = arith.addf %0, %36 : vector<1x128xf32>
    %38 = arith.truncf %34 : vector<64x128xf32> to vector<64x128xbf16>
    %c0_42 = arith.constant 0 : index
    %c0_43 = arith.constant 0 : index
    %c0_44 = arith.constant 0 : index
    %39 = vector.load %arg5[%c0_42, %c0_43, %c0_44] : memref<1x64x128xbf16, #tpu.memory_space<vmem>>, vector<1x64x128xbf16>
    %40 = vector.shape_cast %39 : vector<1x64x128xbf16> to vector<64x128xbf16>
    %41 = vector.shape_cast %38 : vector<64x128xbf16> to vector<1x64x128xbf16>
    tpu.vector_store %arg5[%c0_42, %c0_43, %c0_44], %41 {strides = array<i32>} : memref<1x64x128xbf16, #tpu.memory_space<vmem>>, vector<1x64x128xbf16>,
    %42 = vector.shape_cast %37 : vector<1x128xf32> to vector<1x1x128xf32>
    %c0_45 = arith.constant 0 : index
    %c0_46 = arith.constant 0 : index
    %c0_47 = arith.constant 0 : index
    %43 = vector.load %arg6[%c0_45, %c0_46, %c0_47] : memref<1x1x128xf32, #tpu.memory_space<vmem>>, vector<1x1x128xf32>
    tpu.vector_store %arg6[%c0_45, %c0_46, %c0_47], %42 {strides = array<i32>} : memref<1x1x128xf32, #tpu.memory_space<vmem>>, vector<1x1x128xf32>,
    return
  }
  func.func @transform_0(%arg0: i32) -> (i32, i32, i32, i32) {
    %c0_i32 = arith.constant 0 : i32
    %c0_i32_0 = arith.constant 0 : i32
    %c0_i32_1 = arith.constant 0 : i32
    %c0_i32_2 = arith.constant 0 : i32
    return %arg0, %c0_i32, %c0_i32_0, %c0_i32_1 : i32, i32, i32, i32
  }
  func.func @transform_1(%arg0: i32) -> (i32, i32) {
    %c0_i32 = arith.constant 0 : i32
    %c0_i32_0 = arith.constant 0 : i32
    %c0_i32_1 = arith.constant 0 : i32
    return %c0_i32, %c0_i32_0 : i32, i32
  }
  func.func @transform_2(%arg0: i32) -> (i32, i32) {
    %c0_i32 = arith.constant 0 : i32
    %c0_i32_0 = arith.constant 0 : i32
    %c0_i32_1 = arith.constant 0 : i32
    return %c0_i32, %c0_i32_0 : i32, i32
  }
  func.func @transform_3(%arg0: i32) -> (i32, i32) {
    %c0_i32 = arith.constant 0 : i32
    %c0_i32_0 = arith.constant 0 : i32
    %c0_i32_1 = arith.constant 0 : i32
    return %c0_i32, %c0_i32_0 : i32, i32
  }
  func.func @transform_4(%arg0: i32) -> (i32, i32, i32) {
    %c0_i32 = arith.constant 0 : i32
    %c0_i32_0 = arith.constant 0 : i32
    %c0_i32_1 = arith.constant 0 : i32
    return %arg0, %c0_i32, %c0_i32_0 : i32, i32, i32
  }
  func.func @transform_5(%arg0: i32) -> (i32, i32, i32) {
    %c0_i32 = arith.constant 0 : i32
    %c0_i32_0 = arith.constant 0 : i32
    %c0_i32_1 = arith.constant 0 : i32
    return %arg0, %c0_i32, %c0_i32_0 : i32, i32, i32
  }
}

module attributes {stable_mosaic.version = 11 : i64} {
  func.func @_conv3_kernel(%arg0: i32, %arg1: memref<1x10x10x128xbf16, #tpu.memory_space<vmem>>, %arg2: memref<1152x128xbf16, #tpu.memory_space<vmem>>, %arg3: memref<1x128xf32, #tpu.memory_space<vmem>>, %arg4: memref<1x128xf32, #tpu.memory_space<vmem>>, %arg5: memref<1x64x128xbf16, #tpu.memory_space<vmem>>, %arg6: memref<1x1x128xf32, #tpu.memory_space<vmem>>) attributes {dimension_semantics = [#tpu.dimension_semantics<parallel>], iteration_bounds = array<i64: 2>, scalar_prefetch = 0 : i64, scratch_operands = 0 : i64, tpu.core_type = #tpu.core_type<tc>, window_params = [{transform_indices = @transform_0, window_bounds = array<i64: 1, 10, 10, 128>}, {pipeline_mode = #tpu.pipeline_mode<synchronous>, transform_indices = @transform_1, window_bounds = array<i64: 1152, 128>}, {pipeline_mode = #tpu.pipeline_mode<synchronous>, transform_indices = @transform_2, window_bounds = array<i64: 1, 128>}, {pipeline_mode = #tpu.pipeline_mode<synchronous>, transform_indices = @transform_3, window_bounds = array<i64: 1, 128>}, {transform_indices = @transform_4, window_bounds = array<i64: 1, 64, 128>}, {transform_indices = @transform_5, window_bounds = array<i64: 1, 1, 128>}]} {
    %cst = arith.constant 0.000000e+00 : f32
    %0 = vector.broadcast %cst : f32 to vector<1x128xf32>
    %c0 = arith.constant 0 : index
    %c0_0 = arith.constant 0 : index
    %c0_1 = arith.constant 0 : index
    %c0_2 = arith.constant 0 : index
    %1 = vector.load %arg1[%c0, %c0_0, %c0_1, %c0_2] : memref<1x10x10x128xbf16, #tpu.memory_space<vmem>>, vector<1x8x8x128xbf16>
    %2 = vector.shape_cast %1 : vector<1x8x8x128xbf16> to vector<8x8x128xbf16>
    %c0_3 = arith.constant 0 : index
    %c0_4 = arith.constant 0 : index
    %c1 = arith.constant 1 : index
    %c0_5 = arith.constant 0 : index
    %3 = vector.load %arg1[%c0_3, %c0_4, %c1, %c0_5] : memref<1x10x10x128xbf16, #tpu.memory_space<vmem>>, vector<1x8x8x128xbf16>
    %4 = vector.shape_cast %3 : vector<1x8x8x128xbf16> to vector<8x8x128xbf16>
    %c0_6 = arith.constant 0 : index
    %c0_7 = arith.constant 0 : index
    %c2 = arith.constant 2 : index
    %c0_8 = arith.constant 0 : index
    %5 = vector.load %arg1[%c0_6, %c0_7, %c2, %c0_8] : memref<1x10x10x128xbf16, #tpu.memory_space<vmem>>, vector<1x8x8x128xbf16>
    %6 = vector.shape_cast %5 : vector<1x8x8x128xbf16> to vector<8x8x128xbf16>
    %c0_9 = arith.constant 0 : index
    %c1_10 = arith.constant 1 : index
    %c0_11 = arith.constant 0 : index
    %c0_12 = arith.constant 0 : index
    %7 = vector.load %arg1[%c0_9, %c1_10, %c0_11, %c0_12] : memref<1x10x10x128xbf16, #tpu.memory_space<vmem>>, vector<1x8x8x128xbf16>
    %8 = vector.shape_cast %7 : vector<1x8x8x128xbf16> to vector<8x8x128xbf16>
    %c0_13 = arith.constant 0 : index
    %c1_14 = arith.constant 1 : index
    %c1_15 = arith.constant 1 : index
    %c0_16 = arith.constant 0 : index
    %9 = vector.load %arg1[%c0_13, %c1_14, %c1_15, %c0_16] : memref<1x10x10x128xbf16, #tpu.memory_space<vmem>>, vector<1x8x8x128xbf16>
    %10 = vector.shape_cast %9 : vector<1x8x8x128xbf16> to vector<8x8x128xbf16>
    %c0_17 = arith.constant 0 : index
    %c1_18 = arith.constant 1 : index
    %c2_19 = arith.constant 2 : index
    %c0_20 = arith.constant 0 : index
    %11 = vector.load %arg1[%c0_17, %c1_18, %c2_19, %c0_20] : memref<1x10x10x128xbf16, #tpu.memory_space<vmem>>, vector<1x8x8x128xbf16>
    %12 = vector.shape_cast %11 : vector<1x8x8x128xbf16> to vector<8x8x128xbf16>
    %c0_21 = arith.constant 0 : index
    %c2_22 = arith.constant 2 : index
    %c0_23 = arith.constant 0 : index
    %c0_24 = arith.constant 0 : index
    %13 = vector.load %arg1[%c0_21, %c2_22, %c0_23, %c0_24] : memref<1x10x10x128xbf16, #tpu.memory_space<vmem>>, vector<1x8x8x128xbf16>
    %14 = vector.shape_cast %13 : vector<1x8x8x128xbf16> to vector<8x8x128xbf16>
    %c0_25 = arith.constant 0 : index
    %c2_26 = arith.constant 2 : index
    %c1_27 = arith.constant 1 : index
    %c0_28 = arith.constant 0 : index
    %15 = vector.load %arg1[%c0_25, %c2_26, %c1_27, %c0_28] : memref<1x10x10x128xbf16, #tpu.memory_space<vmem>>, vector<1x8x8x128xbf16>
    %16 = vector.shape_cast %15 : vector<1x8x8x128xbf16> to vector<8x8x128xbf16>
    %c0_29 = arith.constant 0 : index
    %c2_30 = arith.constant 2 : index
    %c2_31 = arith.constant 2 : index
    %c0_32 = arith.constant 0 : index
    %17 = vector.load %arg1[%c0_29, %c2_30, %c2_31, %c0_32] : memref<1x10x10x128xbf16, #tpu.memory_space<vmem>>, vector<1x8x8x128xbf16>
    %18 = vector.shape_cast %17 : vector<1x8x8x128xbf16> to vector<8x8x128xbf16>
    %19 = tpu.concatenate %2, %4, %6, %8, %10, %12, %14, %16, %18 in 2 : vector<8x8x128xbf16>, vector<8x8x128xbf16>, vector<8x8x128xbf16>, vector<8x8x128xbf16>, vector<8x8x128xbf16>, vector<8x8x128xbf16>, vector<8x8x128xbf16>, vector<8x8x128xbf16>, vector<8x8x128xbf16> -> vector<8x8x1152xbf16>
    %20 = vector.shape_cast %19 : vector<8x8x1152xbf16> to vector<64x1152xbf16>
    %c0_33 = arith.constant 0 : index
    %c0_34 = arith.constant 0 : index
    %21 = vector.load %arg2[%c0_33, %c0_34] : memref<1152x128xbf16, #tpu.memory_space<vmem>>, vector<1152x128xbf16>
    %cst_35 = arith.constant dense<0.000000e+00> : vector<64x128xf32>
    %22 = tpu.matmul %20, %21, %cst_35 {dimension_numbers = #tpu.dot_dimension_numbers<[1], [0], [0], [1], [0, 0, 1, 1], [], []>} : vector<64x1152xbf16>, vector<1152x128xbf16>, vector<64x128xf32> -> vector<64x128xf32>
    %c0_36 = arith.constant 0 : index
    %c0_37 = arith.constant 0 : index
    %23 = vector.load %arg3[%c0_36, %c0_37] : memref<1x128xf32, #tpu.memory_space<vmem>>, vector<1x128xf32>
    %24 = vector.broadcast %23 : vector<1x128xf32> to vector<64x128xf32>
    %25 = arith.mulf %22, %24 : vector<64x128xf32>
    %c0_38 = arith.constant 0 : index
    %c0_39 = arith.constant 0 : index
    %26 = vector.load %arg4[%c0_38, %c0_39] : memref<1x128xf32, #tpu.memory_space<vmem>>, vector<1x128xf32>
    %27 = vector.broadcast %26 : vector<1x128xf32> to vector<64x128xf32>
    %28 = arith.addf %25, %27 : vector<64x128xf32>
    %29 = arith.negf %28 : vector<64x128xf32>
    %30 = math.exp %29 : vector<64x128xf32>
    %cst_40 = arith.constant 1.000000e+00 : f32
    %31 = vector.broadcast %cst_40 : f32 to vector<64x128xf32>
    %32 = arith.addf %31, %30 : vector<64x128xf32>
    %33 = arith.divf %31, %32 : vector<64x128xf32>
    %34 = arith.mulf %28, %33 : vector<64x128xf32>
    %cst_41 = arith.constant dense<0.000000e+00> : vector<128xf32>
    %35 = vector.multi_reduction <add>, %34, %cst_41 [0] : vector<64x128xf32> to vector<128xf32>
    %36 = vector.shape_cast %35 : vector<128xf32> to vector<1x128xf32>
    %37 = arith.addf %0, %36 : vector<1x128xf32>
    %38 = arith.truncf %34 : vector<64x128xf32> to vector<64x128xbf16>
    %c0_42 = arith.constant 0 : index
    %c0_43 = arith.constant 0 : index
    %c0_44 = arith.constant 0 : index
    %39 = vector.load %arg5[%c0_42, %c0_43, %c0_44] : memref<1x64x128xbf16, #tpu.memory_space<vmem>>, vector<1x64x128xbf16>
    %40 = vector.shape_cast %39 : vector<1x64x128xbf16> to vector<64x128xbf16>
    %41 = vector.shape_cast %38 : vector<64x128xbf16> to vector<1x64x128xbf16>
    tpu.vector_store %arg5[%c0_42, %c0_43, %c0_44], %41 {strides = array<i32>} : memref<1x64x128xbf16, #tpu.memory_space<vmem>>, vector<1x64x128xbf16>,
    %42 = vector.shape_cast %37 : vector<1x128xf32> to vector<1x1x128xf32>
    %c0_45 = arith.constant 0 : index
    %c0_46 = arith.constant 0 : index
    %c0_47 = arith.constant 0 : index
    %43 = vector.load %arg6[%c0_45, %c0_46, %c0_47] : memref<1x1x128xf32, #tpu.memory_space<vmem>>, vector<1x1x128xf32>
    tpu.vector_store %arg6[%c0_45, %c0_46, %c0_47], %42 {strides = array<i32>} : memref<1x1x128xf32, #tpu.memory_space<vmem>>, vector<1x1x128xf32>,
    return
  }
  func.func @transform_0(%arg0: i32) -> (i32, i32, i32, i32) {
    %c0_i32 = arith.constant 0 : i32
    %c0_i32_0 = arith.constant 0 : i32
    %c0_i32_1 = arith.constant 0 : i32
    %c0_i32_2 = arith.constant 0 : i32
    return %arg0, %c0_i32, %c0_i32_0, %c0_i32_1 : i32, i32, i32, i32
  }
  func.func @transform_1(%arg0: i32) -> (i32, i32) {
    %c0_i32 = arith.constant 0 : i32
    %c0_i32_0 = arith.constant 0 : i32
    %c0_i32_1 = arith.constant 0 : i32
    return %c0_i32, %c0_i32_0 : i32, i32
  }
  func.func @transform_2(%arg0: i32) -> (i32, i32) {
    %c0_i32 = arith.constant 0 : i32
    %c0_i32_0 = arith.constant 0 : i32
    %c0_i32_1 = arith.constant 0 : i32
    return %c0_i32, %c0_i32_0 : i32, i32
  }
  func.func @transform_3(%arg0: i32) -> (i32, i32) {
    %c0_i32 = arith.constant 0 : i32
    %c0_i32_0 = arith.constant 0 : i32
    %c0_i32_1 = arith.constant 0 : i32
    return %c0_i32, %c0_i32_0 : i32, i32
  }
  func.func @transform_4(%arg0: i32) -> (i32, i32, i32) {
    %c0_i32 = arith.constant 0 : i32
    %c0_i32_0 = arith.constant 0 : i32
    %c0_i32_1 = arith.constant 0 : i32
    return %arg0, %c0_i32, %c0_i32_0 : i32, i32, i32
  }
  func.func @transform_5(%arg0: i32) -> (i32, i32, i32) {
    %c0_i32 = arith.constant 0 : i32
    %c0_i32_0 = arith.constant 0 : i32
    %c0_i32_1 = arith.constant 0 : i32
    return %arg0, %c0_i32, %c0_i32_0 : i32, i32, i32
  }
}

module attributes {stable_mosaic.version = 11 : i64} {
  func.func @_se_scale_add_kernel(%arg0: i32, %arg1: memref<1x64x128xbf16, #tpu.memory_space<vmem>>, %arg2: memref<1x64x128xbf16, #tpu.memory_space<vmem>>, %arg3: memref<1x1x128xf32, #tpu.memory_space<vmem>>, %arg4: memref<1x64x128xbf16, #tpu.memory_space<vmem>>) attributes {dimension_semantics = [#tpu.dimension_semantics<parallel>], iteration_bounds = array<i64: 2>, scalar_prefetch = 0 : i64, scratch_operands = 0 : i64, tpu.core_type = #tpu.core_type<tc>, window_params = [{transform_indices = @transform_0, window_bounds = array<i64: 1, 64, 128>}, {transform_indices = @transform_1, window_bounds = array<i64: 1, 64, 128>}, {transform_indices = @transform_2, window_bounds = array<i64: 1, 1, 128>}, {transform_indices = @transform_3, window_bounds = array<i64: 1, 64, 128>}]} {
    %c0 = arith.constant 0 : index
    %c0_0 = arith.constant 0 : index
    %c0_1 = arith.constant 0 : index
    %0 = vector.load %arg1[%c0, %c0_0, %c0_1] : memref<1x64x128xbf16, #tpu.memory_space<vmem>>, vector<1x64x128xbf16>
    %1 = arith.extf %0 : vector<1x64x128xbf16> to vector<1x64x128xf32>
    %c0_2 = arith.constant 0 : index
    %c0_3 = arith.constant 0 : index
    %c0_4 = arith.constant 0 : index
    %2 = vector.load %arg3[%c0_2, %c0_3, %c0_4] : memref<1x1x128xf32, #tpu.memory_space<vmem>>, vector<1x1x128xf32>
    %3 = vector.broadcast %2 : vector<1x1x128xf32> to vector<1x64x128xf32>
    %4 = arith.mulf %1, %3 : vector<1x64x128xf32>
    %c0_5 = arith.constant 0 : index
    %c0_6 = arith.constant 0 : index
    %c0_7 = arith.constant 0 : index
    %5 = vector.load %arg2[%c0_5, %c0_6, %c0_7] : memref<1x64x128xbf16, #tpu.memory_space<vmem>>, vector<1x64x128xbf16>
    %6 = arith.extf %5 : vector<1x64x128xbf16> to vector<1x64x128xf32>
    %7 = arith.addf %4, %6 : vector<1x64x128xf32>
    %8 = arith.truncf %7 : vector<1x64x128xf32> to vector<1x64x128xbf16>
    %c0_8 = arith.constant 0 : index
    %c0_9 = arith.constant 0 : index
    %c0_10 = arith.constant 0 : index
    %9 = vector.load %arg4[%c0_8, %c0_9, %c0_10] : memref<1x64x128xbf16, #tpu.memory_space<vmem>>, vector<1x64x128xbf16>
    tpu.vector_store %arg4[%c0_8, %c0_9, %c0_10], %8 {strides = array<i32>} : memref<1x64x128xbf16, #tpu.memory_space<vmem>>, vector<1x64x128xbf16>,
    return
  }
  func.func @transform_0(%arg0: i32) -> (i32, i32, i32) {
    %c0_i32 = arith.constant 0 : i32
    %c0_i32_0 = arith.constant 0 : i32
    %c0_i32_1 = arith.constant 0 : i32
    return %arg0, %c0_i32, %c0_i32_0 : i32, i32, i32
  }
  func.func @transform_1(%arg0: i32) -> (i32, i32, i32) {
    %c0_i32 = arith.constant 0 : i32
    %c0_i32_0 = arith.constant 0 : i32
    %c0_i32_1 = arith.constant 0 : i32
    return %arg0, %c0_i32, %c0_i32_0 : i32, i32, i32
  }
  func.func @transform_2(%arg0: i32) -> (i32, i32, i32) {
    %c0_i32 = arith.constant 0 : i32
    %c0_i32_0 = arith.constant 0 : i32
    %c0_i32_1 = arith.constant 0 : i32
    return %arg0, %c0_i32, %c0_i32_0 : i32, i32, i32
  }
  func.func @transform_3(%arg0: i32) -> (i32, i32, i32) {
    %c0_i32 = arith.constant 0 : i32
    %c0_i32_0 = arith.constant 0 : i32
    %c0_i32_1 = arith.constant 0 : i32
    return %arg0, %c0_i32, %c0_i32_0 : i32, i32, i32
  }
}

module attributes {stable_mosaic.version = 11 : i64} {
  func.func @_pw_cat_kernel(%arg0: i32, %arg1: memref<64x128xbf16, #tpu.memory_space<vmem>>, %arg2: memref<64x128xbf16, #tpu.memory_space<vmem>>, %arg3: memref<128x128xbf16, #tpu.memory_space<vmem>>, %arg4: memref<128x128xbf16, #tpu.memory_space<vmem>>, %arg5: memref<1x128xf32, #tpu.memory_space<vmem>>, %arg6: memref<1x128xf32, #tpu.memory_space<vmem>>, %arg7: memref<64x128xbf16, #tpu.memory_space<vmem>>) attributes {dimension_semantics = [#tpu.dimension_semantics<parallel>], iteration_bounds = array<i64: 2>, scalar_prefetch = 0 : i64, scratch_operands = 0 : i64, tpu.core_type = #tpu.core_type<tc>, window_params = [{transform_indices = @transform_0, window_bounds = array<i64: 64, 128>}, {transform_indices = @transform_1, window_bounds = array<i64: 64, 128>}, {pipeline_mode = #tpu.pipeline_mode<synchronous>, transform_indices = @transform_2, window_bounds = array<i64: 128, 128>}, {pipeline_mode = #tpu.pipeline_mode<synchronous>, transform_indices = @transform_3, window_bounds = array<i64: 128, 128>}, {pipeline_mode = #tpu.pipeline_mode<synchronous>, transform_indices = @transform_4, window_bounds = array<i64: 1, 128>}, {pipeline_mode = #tpu.pipeline_mode<synchronous>, transform_indices = @transform_5, window_bounds = array<i64: 1, 128>}, {transform_indices = @transform_6, window_bounds = array<i64: 64, 128>}]} {
    %c0 = arith.constant 0 : index
    %c0_0 = arith.constant 0 : index
    %0 = vector.load %arg1[%c0, %c0_0] : memref<64x128xbf16, #tpu.memory_space<vmem>>, vector<64x128xbf16>
    %c0_1 = arith.constant 0 : index
    %c0_2 = arith.constant 0 : index
    %1 = vector.load %arg3[%c0_1, %c0_2] : memref<128x128xbf16, #tpu.memory_space<vmem>>, vector<128x128xbf16>
    %cst = arith.constant dense<0.000000e+00> : vector<64x128xf32>
    %2 = tpu.matmul %0, %1, %cst {dimension_numbers = #tpu.dot_dimension_numbers<[1], [0], [0], [1], [0, 0, 1, 1], [], []>} : vector<64x128xbf16>, vector<128x128xbf16>, vector<64x128xf32> -> vector<64x128xf32>
    %c0_3 = arith.constant 0 : index
    %c0_4 = arith.constant 0 : index
    %3 = vector.load %arg2[%c0_3, %c0_4] : memref<64x128xbf16, #tpu.memory_space<vmem>>, vector<64x128xbf16>
    %c0_5 = arith.constant 0 : index
    %c0_6 = arith.constant 0 : index
    %4 = vector.load %arg4[%c0_5, %c0_6] : memref<128x128xbf16, #tpu.memory_space<vmem>>, vector<128x128xbf16>
    %cst_7 = arith.constant dense<0.000000e+00> : vector<64x128xf32>
    %5 = tpu.matmul %3, %4, %cst_7 {dimension_numbers = #tpu.dot_dimension_numbers<[1], [0], [0], [1], [0, 0, 1, 1], [], []>} : vector<64x128xbf16>, vector<128x128xbf16>, vector<64x128xf32> -> vector<64x128xf32>
    %6 = arith.addf %2, %5 : vector<64x128xf32>
    %c0_8 = arith.constant 0 : index
    %c0_9 = arith.constant 0 : index
    %7 = vector.load %arg5[%c0_8, %c0_9] : memref<1x128xf32, #tpu.memory_space<vmem>>, vector<1x128xf32>
    %8 = vector.broadcast %7 : vector<1x128xf32> to vector<64x128xf32>
    %9 = arith.mulf %6, %8 : vector<64x128xf32>
    %c0_10 = arith.constant 0 : index
    %c0_11 = arith.constant 0 : index
    %10 = vector.load %arg6[%c0_10, %c0_11] : memref<1x128xf32, #tpu.memory_space<vmem>>, vector<1x128xf32>
    %11 = vector.broadcast %10 : vector<1x128xf32> to vector<64x128xf32>
    %12 = arith.addf %9, %11 : vector<64x128xf32>
    %13 = arith.negf %12 : vector<64x128xf32>
    %14 = math.exp %13 : vector<64x128xf32>
    %cst_12 = arith.constant 1.000000e+00 : f32
    %15 = vector.broadcast %cst_12 : f32 to vector<64x128xf32>
    %16 = arith.addf %15, %14 : vector<64x128xf32>
    %17 = arith.divf %15, %16 : vector<64x128xf32>
    %18 = arith.mulf %12, %17 : vector<64x128xf32>
    %19 = arith.truncf %18 : vector<64x128xf32> to vector<64x128xbf16>
    %c0_13 = arith.constant 0 : index
    %c0_14 = arith.constant 0 : index
    %20 = vector.load %arg7[%c0_13, %c0_14] : memref<64x128xbf16, #tpu.memory_space<vmem>>, vector<64x128xbf16>
    tpu.vector_store %arg7[%c0_13, %c0_14], %19 {strides = array<i32>} : memref<64x128xbf16, #tpu.memory_space<vmem>>, vector<64x128xbf16>,
    return
  }
  func.func @transform_0(%arg0: i32) -> (i32, i32) {
    %c0_i32 = arith.constant 0 : i32
    %c0_i32_0 = arith.constant 0 : i32
    return %arg0, %c0_i32 : i32, i32
  }
  func.func @transform_1(%arg0: i32) -> (i32, i32) {
    %c0_i32 = arith.constant 0 : i32
    %c0_i32_0 = arith.constant 0 : i32
    return %arg0, %c0_i32 : i32, i32
  }
  func.func @transform_2(%arg0: i32) -> (i32, i32) {
    %c0_i32 = arith.constant 0 : i32
    %c0_i32_0 = arith.constant 0 : i32
    %c0_i32_1 = arith.constant 0 : i32
    return %c0_i32, %c0_i32_0 : i32, i32
  }
  func.func @transform_3(%arg0: i32) -> (i32, i32) {
    %c0_i32 = arith.constant 0 : i32
    %c0_i32_0 = arith.constant 0 : i32
    %c0_i32_1 = arith.constant 0 : i32
    return %c0_i32, %c0_i32_0 : i32, i32
  }
  func.func @transform_4(%arg0: i32) -> (i32, i32) {
    %c0_i32 = arith.constant 0 : i32
    %c0_i32_0 = arith.constant 0 : i32
    %c0_i32_1 = arith.constant 0 : i32
    return %c0_i32, %c0_i32_0 : i32, i32
  }
  func.func @transform_5(%arg0: i32) -> (i32, i32) {
    %c0_i32 = arith.constant 0 : i32
    %c0_i32_0 = arith.constant 0 : i32
    %c0_i32_1 = arith.constant 0 : i32
    return %c0_i32, %c0_i32_0 : i32, i32
  }
  func.func @transform_6(%arg0: i32) -> (i32, i32) {
    %c0_i32 = arith.constant 0 : i32
    %c0_i32_0 = arith.constant 0 : i32
    return %arg0, %c0_i32 : i32, i32
  }
}

</mosaic_0001>

<llo_original>
// kernel: _lambda_.5
$region0: #{_lambda_.5}
  #allocation0 [shape = 'u32[]', space=smem, size = 0x4, offset = 0x4, fixed_abs, tag = 'smem constant byte address 0x4 - core index']
  #allocation1 [shape = 'u32[144,128]{1,0:T(1,128)}', space=vmem, size = 0x12000, scoped, tag = 'internal scratch']
  %s0 = inlined_call_operand.vmem [shape: bf16[128,32], index: 0, kind: input, shape index: {}]
  %s1 = inlined_call_operand.vmem [shape: bf16[32,256], index: 1, kind: input, shape index: {}]
  %s2 = inlined_call_operand.hbm [shape: f32[1,256], index: 2, kind: input, shape index: {}]
  %s3 = inlined_call_operand.hbm [shape: f32[1,256], index: 3, kind: input, shape index: {}]
  %s4 = inlined_call_operand.vmem [shape: bf16[128,128], index: 4, kind: output, shape index: {0}]
  %s5 = inlined_call_operand.vmem [shape: bf16[128,128], index: 5, kind: output, shape index: {1}]
  %6 = xla_tuple %s4, %s5
  %s7 = sld [smem:[#allocation0]]
  $region65: #{_lambda_.5} parent=0
    _
  %s9 = ssub.s32 1, %s7
  %s10 = scalar_select 0, %s9, %s7
  $region1: #{_lambda_.5} parent=0
    #allocation2 [shape = 'u8[1024]{0}', space=vmem, size = 0x400, scoped, tag = 'input window, operand 2, single buffered']
    #allocation3 [shape = 's32[2]{0}', space=sflag, size = 0x8, scoped, tag = 'scoped memory for _lambda_.5']
    #allocation4 [shape = 'u8[1024]{0}', space=vmem, size = 0x400, scoped, tag = 'input window, operand 3, single buffered']
    #allocation5 [shape = 's32[1]{0}', space=sflag, size = 0x4, scoped, tag = 'scoped memory for _lambda_.5']
    %11 = vsyncpa [#allocation3], 0
    %12 = vsyncpa [#allocation5], 0
    loop: start=0, step=1, limit=4
    $region2: #{_lambda_.5} parent=1 // loop_pre_header
      _
    $region3: #{_lambda_.5} parent=1 // loop_header
      %s14 = sphi 0, %s18
      %p15 = scmp.ge.s32.totalorder %s14, 4
      %s24 = sphi 0, %s26
      %s27 = sphi 0, %s24
      %s28 = sphi 0, %s27
      %s44 = sphi 0, %s28
      %s48 = sphi 0, %s48
      %s50 = sphi 0, %s48
      %s51 = sphi 0, %s50
      %s65 = sphi 0, %s51
      %s69 = sphi 0, %s69
      %s71 = sphi 0, %s69
      %s72 = sphi 0, %s71
      %s86 = sphi 0, %s72
      %s90 = sphi 0, %s90
      %s92 = sphi 0, %s90
      %s93 = sphi 0, %s92
      %s107 = sphi 0, %s93
      %s113 = sphi 0, %s115
      %s116 = sphi 0, %s113
      %s117 = sphi 0, %s116
      %s133 = sphi 0, %s117
      %s139 = sphi 0, %s141
      %s142 = sphi 0, %s139
      %s143 = sphi 0, %s142
      %s159 = sphi 0, %s143
    $region4: #{_lambda_.5} parent=1 // loop_header_branch
      %17 = sbr.rel (%p15) target = $region8
    $region5: #{_lambda_.5} parent=1 // loop_body
      %s19 = ssub.s32 %s14, 1
      %s20 = ssub.s32 %s14, 2
      %s21 = sadd.s32 %s14, 1
      %s22 = ssub.s32 %s14, %s21
      %p23 = scmp.eq.s32.totalorder %s22, 0
      %s25 = sadd.s32 %s24, 1
      %s26 = scalar_select %p23, %s24, %s25
      %p29 = pneg %p23
      %p30 = scmp.eq.s32.totalorder %s14, 1
      %p31 = por %p29, %p30
      %p32 = scmp.ne.s32.totalorder %s24, %s27
      %p33 = scmp.eq.s32.totalorder %s14, 0
      %p34 = por %p32, %p33
      %p35 = scmp.ne.s32.totalorder %s24, %s27
      %p36 = scmp.eq.s32.totalorder %s19, 1
      %p37 = por %p35, %p36
      %p38 = scmp.ne.s32.totalorder %s27, %s28
      %p39 = scmp.eq.s32.totalorder %s19, 0
      %p40 = por %p38, %p39
      %p41 = scmp.ne.s32.totalorder %s27, %s28
      %p42 = scmp.eq.s32.totalorder %s20, 1
      %p43 = por %p41, %p42
      %p45 = scmp.ne.s32.totalorder %s28, %s44
      %p46 = scmp.eq.s32.totalorder %s20, 0
      %p47 = por %p45, %p46
      %s49 = sadd.s32 %s48, 1
      %p52 = scmp.eq.s32.totalorder %s14, 1
      %p53 = scmp.ne.s32.totalorder %s48, %s50
      %p54 = scmp.eq.s32.totalorder %s14, 0
      %p55 = por %p53, %p54
      %p56 = scmp.ne.s32.totalorder %s48, %s50
      %p57 = scmp.eq.s32.totalorder %s19, 1
      %p58 = por %p56, %p57
      %p59 = scmp.ne.s32.totalorder %s50, %s51
      %p60 = scmp.eq.s32.totalorder %s19, 0
      %p61 = por %p59, %p60
      %p62 = scmp.ne.s32.totalorder %s50, %s51
      %p63 = scmp.eq.s32.totalorder %s20, 1
      %p64 = por %p62, %p63
      %p66 = scmp.ne.s32.totalorder %s51, %s65
      %p67 = scmp.eq.s32.totalorder %s20, 0
      %p68 = por %p66, %p67
      %s70 = sadd.s32 %s69, 1
      %p73 = scmp.eq.s32.totalorder %s14, 1
      %p74 = scmp.ne.s32.totalorder %s69, %s71
      %p75 = scmp.eq.s32.totalorder %s14, 0
      %p76 = por %p74, %p75
      %p77 = scmp.ne.s32.totalorder %s69, %s71
      %p78 = scmp.eq.s32.totalorder %s19, 1
      %p79 = por %p77, %p78
      %p80 = scmp.ne.s32.totalorder %s71, %s72
      %p81 = scmp.eq.s32.totalorder %s19, 0
      %p82 = por %p80, %p81
      %p83 = scmp.ne.s32.totalorder %s71, %s72
      %p84 = scmp.eq.s32.totalorder %s20, 1
      %p85 = por %p83, %p84
      %p87 = scmp.ne.s32.totalorder %s72, %s86
      %p88 = scmp.eq.s32.totalorder %s20, 0
      %p89 = por %p87, %p88
      %s91 = sadd.s32 %s90, 1
      %p94 = scmp.eq.s32.totalorder %s14, 1
      %p95 = scmp.ne.s32.totalorder %s90, %s92
      %p96 = scmp.eq.s32.totalorder %s14, 0
      %p97 = por %p95, %p96
      %p98 = scmp.ne.s32.totalorder %s90, %s92
      %p99 = scmp.eq.s32.totalorder %s19, 1
      %p100 = por %p98, %p99
      %p101 = scmp.ne.s32.totalorder %s92, %s93
      %p102 = scmp.eq.s32.totalorder %s19, 0
      %p103 = por %p101, %p102
      %p104 = scmp.ne.s32.totalorder %s92, %s93
      %p105 = scmp.eq.s32.totalorder %s20, 1
      %p106 = por %p104, %p105
      %p108 = scmp.ne.s32.totalorder %s93, %s107
      %p109 = scmp.eq.s32.totalorder %s20, 0
      %p110 = por %p108, %p109
      %s111 = ssub.s32 %s14, %s21
      %p112 = scmp.eq.s32.totalorder %s111, 0
      %s114 = sadd.s32 %s113, 1
      %s115 = scalar_select %p112, %s113, %s114
      %p118 = pneg %p112
      %p119 = scmp.eq.s32.totalorder %s14, 1
      %p120 = por %p118, %p119
      %p121 = scmp.ne.s32.totalorder %s113, %s116
      %p122 = scmp.eq.s32.totalorder %s14, 0
      %p123 = por %p121, %p122
      %p124 = scmp.ne.s32.totalorder %s113, %s116
      %p125 = scmp.eq.s32.totalorder %s19, 1
      %p126 = por %p124, %p125
      %p127 = scmp.ne.s32.totalorder %s116, %s117
      %p128 = scmp.eq.s32.totalorder %s19, 0
      %p129 = por %p127, %p128
      %p130 = scmp.ne.s32.totalorder %s116, %s117
      %p131 = scmp.eq.s32.totalorder %s20, 1
      %p132 = por %p130, %p131
      %p134 = scmp.ne.s32.totalorder %s117, %s133
      %p135 = scmp.eq.s32.totalorder %s20, 0
      %p136 = por %p134, %p135
      %s137 = ssub.s32 %s14, %s21
      %p138 = scmp.eq.s32.totalorder %s137, 0
      %s140 = sadd.s32 %s139, 1
      %s141 = scalar_select %p138, %s139, %s140
      %p144 = pneg %p138
      %p145 = scmp.eq.s32.totalorder %s14, 1
      %p146 = por %p144, %p145
      %p147 = scmp.ne.s32.totalorder %s139, %s142
      %p148 = scmp.eq.s32.totalorder %s14, 0
      %p149 = por %p147, %p148
      %p150 = scmp.ne.s32.totalorder %s139, %s142
      %p151 = scmp.eq.s32.totalorder %s19, 1
      %p152 = por %p150, %p151
      %p153 = scmp.ne.s32.totalorder %s142, %s143
      %p154 = scmp.eq.s32.totalorder %s19, 0
      %p155 = por %p153, %p154
      %p156 = scmp.ne.s32.totalorder %s142, %s143
      %p157 = scmp.eq.s32.totalorder %s20, 1
      %p158 = por %p156, %p157
      %p160 = scmp.ne.s32.totalorder %s143, %s159
      %p161 = scmp.eq.s32.totalorder %s20, 0
      %p162 = por %p160, %p161
      %p163 = scmp.le.s32.totalorder 1, %s14
      %p164 = scmp.lt.s32.totalorder %s14, 3
      %p165 = pnand %p163, %p164
      %p166 = pneg %p165
      // Predicated region
      $region9: #{_lambda_.5} parent=5 // pred_check
        _
      $region10: #{_lambda_.5} parent=5 // pred_check_branch
        %168 = sbr.rel (%p165) target = $region12
      $region11: #{_lambda_.5} parent=5 // pred_region
        %s169 = ssub.s32 %s14, 1
        // Predicated region
        $region13: #{_lambda_.5} parent=11 // pred_check
          %p170 = pneg %p61
        $region14: #{_lambda_.5} parent=11 // pred_check_branch
          %172 = sbr.rel (%p170) target = $region16
        $region15: #{_lambda_.5} parent=11 // pred_region
          _
        $region16: #{_lambda_.5} parent=11 // pred_fallthru
          _
        // Predicated region
        $region17: #{_lambda_.5} parent=11 // pred_check
          %p173 = pneg %p82
        $region18: #{_lambda_.5} parent=11 // pred_check_branch
          %175 = sbr.rel (%p173) target = $region20
        $region19: #{_lambda_.5} parent=11 // pred_region
          %s177 = ssub.s32 32, 32
          %178 = vsyncadd [#allocation3], %s177
          %s180 = sshll.u32 [#allocation2], 4
          %s181 = int_to_ptr.vmem [resolvable:$true] %s180
          %183 = dma.hbm_to_vmem [thread:$0]  %s2, 32, %s181, [#allocation3]
        $region20: #{_lambda_.5} parent=11 // pred_fallthru
          _
        // Predicated region
        $region21: #{_lambda_.5} parent=11 // pred_check
          %p184 = pneg %p103
        $region22: #{_lambda_.5} parent=11 // pred_check_branch
          %186 = sbr.rel (%p184) target = $region24
        $region23: #{_lambda_.5} parent=11 // pred_region
          %s188 = ssub.s32 32, 32
          %189 = vsyncadd [#allocation5], %s188
          %s191 = sshll.u32 [#allocation4], 4
          %s192 = int_to_ptr.vmem [resolvable:$true] %s191
          %194 = dma.hbm_to_vmem [thread:$0]  %s3, 32, %s192, [#allocation5]
        $region24: #{_lambda_.5} parent=11 // pred_fallthru
          _
      $region12: #{_lambda_.5} parent=5 // pred_fallthru
        _
      %p195 = scmp.lt.s32.totalorder %s14, 2
      // Predicated region
      $region25: #{_lambda_.5} parent=5 // pred_check
        %p196 = pneg %p195
      $region26: #{_lambda_.5} parent=5 // pred_check_branch
        %198 = sbr.rel (%p196) target = $region28
      $region27: #{_lambda_.5} parent=5 // pred_region
        // Predicated region
        $region29: #{_lambda_.5} parent=27 // pred_check
          %p199 = pneg %p34
        $region30: #{_lambda_.5} parent=27 // pred_check_branch
          %201 = sbr.rel (%p199) target = $region32
        $region31: #{_lambda_.5} parent=27 // pred_region
          %s202 = smul.u32 8, %s14
          %p203 = scmp.lt.s32.totalorder %s202, 15
          %s204 = scalar_select %p203, %s202, 15
          %s205 = smul.addr %s204, 4
          %s206 = scalar_lea.vmem %s0, %s205
          %s207 = smul.u32 8, %s14
        $region32: #{_lambda_.5} parent=27 // pred_fallthru
          _
      $region28: #{_lambda_.5} parent=5 // pred_fallthru
        _
      %p208 = scmp.le.s32.totalorder 1, %s14
      %p209 = scmp.lt.s32.totalorder %s14, 3
      %p210 = pnand %p208, %p209
      %p211 = pneg %p210
      // Predicated region
      $region33: #{_lambda_.5} parent=5 // pred_check
        _
      $region34: #{_lambda_.5} parent=5 // pred_check_branch
        %213 = sbr.rel (%p210) target = $region36
      $region35: #{_lambda_.5} parent=5 // pred_region
        %s214 = ssub.s32 %s14, 1
        // Predicated region
        $region37: #{_lambda_.5} parent=35 // pred_check
          %p215 = pneg %p82
        $region38: #{_lambda_.5} parent=35 // pred_check_branch
          %217 = sbr.rel (%p215) target = $region40
        $region39: #{_lambda_.5} parent=35 // pred_region
          %218 = dma.done [#allocation3], 32
        $region40: #{_lambda_.5} parent=35 // pred_fallthru
          _
        // Predicated region
        $region41: #{_lambda_.5} parent=35 // pred_check
          %p219 = pneg %p103
        $region42: #{_lambda_.5} parent=35 // pred_check_branch
          %221 = sbr.rel (%p219) target = $region44
        $region43: #{_lambda_.5} parent=35 // pred_region
          %222 = dma.done [#allocation5], 32
        $region44: #{_lambda_.5} parent=35 // pred_fallthru
          _
        %s223 = smul.u32 8, %s19
        %p224 = scmp.lt.s32.totalorder %s223, 15
        %s225 = scalar_select %p224, %s223, 15
        %s226 = smul.addr %s225, 4
        %s227 = scalar_lea.vmem %s0, %s226
        %p228 = pneg %p40
        %p229 = pneg %p37
        %p230 = pneg %p61
        %p231 = pneg %p58
        %p232 = pneg %p82
        %p233 = pneg %p79
        %p234 = pneg %p103
        %p235 = pneg %p100
        %p236 = pneg %p129
        %p237 = pneg %p126
        %s238 = smul.u32 8, %s19
        %p239 = scmp.lt.s32.totalorder %s238, 15
        %s240 = scalar_select %p239, %s238, 15
        %s241 = smul.addr %s240, 4
        %s242 = scalar_lea.vmem %s4, %s241
        %p243 = pneg %p155
        %p244 = pneg %p152
        %s245 = smul.u32 8, %s19
        %p246 = scmp.lt.s32.totalorder %s245, 15
        %s247 = scalar_select %p246, %s245, 15
        %s248 = smul.addr %s247, 4
        %s249 = scalar_lea.vmem %s5, %s248
        %s250 = smul.u32 8, %s19
        %p251 = scmp.lt.s32.totalorder %s250, 15
        %s252 = scalar_select %p251, %s250, 15
        %s253 = smul.addr %s252, 4
        %s254 = scalar_lea.vmem %s0, %s253
        %s255 = smul.u32 8, %s19
        %s256 = smul.u32 8, %s19
        %p257 = scmp.lt.s32.totalorder %s256, 15
        %s258 = scalar_select %p257, %s256, 15
        %s259 = smul.addr %s258, 4
        %s260 = scalar_lea.vmem %s4, %s259
        %s261 = smul.u32 8, %s19
        %s262 = smul.u32 8, %s19
        %p263 = scmp.lt.s32.totalorder %s262, 15
        %s264 = scalar_select %p263, %s262, 15
        %s265 = smul.addr %s264, 4
        %s266 = scalar_lea.vmem %s5, %s265
        %s267 = smul.u32 8, %s19
        %v269 = vld [vmem:[%s254] sm:$0xf]
        %v270 = vld [vmem:[%s254 + $0x4] sm:$0xf]
        %v271 = vld [vmem:[%s254 + $0x8] sm:$0xf]
        %v272 = vld [vmem:[%s254 + $0xc] sm:$0xf]
        %v273 = vld [vmem:[%s254 + $0x10] sm:$0xf]
        %v274 = vld [vmem:[%s254 + $0x14] sm:$0xf]
        %v275 = vld [vmem:[%s254 + $0x18] sm:$0xf]
        %v276 = vld [vmem:[%s254 + $0x1c] sm:$0xf]
        %v277 = vld [vmem:[%s1] sm:$0xff]
        %v278 = vld [vmem:[%s1 + $0x8] sm:$0xff]
        %v279 = vld [vmem:[%s1 + $0x10] sm:$0xff]
        %v280 = vld [vmem:[%s1 + $0x18] sm:$0xff]
        %v289 = vunpack.c.l.b16 %v269
        %v290 = vunpack.c.l.b16 %v270
        %v291 = vunpack.c.l.b16 %v271
        %v292 = vunpack.c.l.b16 %v272
        %v293 = vunpack.c.l.b16 %v273
        %v294 = vunpack.c.l.b16 %v274
        %v295 = vunpack.c.l.b16 %v275
        %v296 = vunpack.c.l.b16 %v276
        %v297 = vpack.c.b16 %v290, %v289
        %v298 = vpack.c.b16 %v292, %v291
        %v299 = vpack.c.b16 %v294, %v293
        %v300 = vpack.c.b16 %v296, %v295
        %v305 = vunpack.c.l.b16 %v277
        %v306 = vunpack.c.h.b16 %v277
        %v307 = vunpack.c.l.b16 %v278
        %v308 = vunpack.c.h.b16 %v278
        %v309 = vunpack.c.l.b16 %v279
        %v310 = vunpack.c.h.b16 %v279
        %v311 = vunpack.c.l.b16 %v280
        %v312 = vunpack.c.h.b16 %v280
        %v313 = vpack.c.b16 %v307, %v305
        %v314 = vpack.c.b16 %v308, %v306
        %v315 = vpack.c.b16 %v311, %v309
        %v316 = vpack.c.b16 %v312, %v310
        %vm321 = vcmask 261120
        %v323 = vsel %vm321, %v297, 0
        %v326 = vsel %vm321, %v298, 0
        %v329 = vsel %vm321, %v299, 0
        %v332 = vsel %vm321, %v300, 0
        %334 = vmatprep.subr.bf16.mxu0 %v314
        %335 = vmatpush1.bf16.msra.mxu0 %v313
        %336 = vmatprep.subr.bf16.mxu0 %v316
        %337 = vmatpush1.bf16.msra.mxu0 %v315
        %338 = vmatprep.subr.bf16.mxu0 0
        %339 = vmatpush1.bf16.msra.mxu0 0
        %340 = vmatprep.subr.bf16.mxu0 0
        %341 = vmatpush1.bf16.msra.mxu0 0
        %342 = vmatprep.subr.bf16.mxu0 0
        %343 = vmatpush1.bf16.msra.mxu0 0
        %344 = vmatprep.subr.bf16.mxu0 0
        %345 = vmatpush1.bf16.msra.mxu0 0
        %346 = vmatprep.subr.bf16.mxu0 0
        %347 = vmatpush1.bf16.msra.mxu0 0
        %348 = vmatprep.subr.bf16.mxu0 0
        %349 = vmatpush1.bf16.msra.mxu0 0
        %350 = vmatprep.subr.bf16.mxu0 0
        %351 = vmatpush1.bf16.msra.mxu0 0
        %352 = vmatprep.subr.bf16.mxu0 0
        %353 = vmatpush1.bf16.msra.mxu0 0
        %354 = vmatprep.subr.bf16.mxu0 0
        %355 = vmatpush1.bf16.msra.mxu0 0
        %356 = vmatprep.subr.bf16.mxu0 0
        %357 = vmatpush1.bf16.msra.mxu0 0
        %358 = vmatprep.subr.bf16.mxu0 0
        %359 = vmatpush1.bf16.msra.mxu0 0
        %360 = vmatprep.subr.bf16.mxu0 0
        %361 = vmatpush1.bf16.msra.mxu0 0
        %362 = vmatprep.subr.bf16.mxu0 0
        %363 = vmatpush1.bf16.msra.mxu0 0
        %364 = vmatprep.subr.bf16.mxu0 0
        %365 = vmatpush1.bf16.msra.mxu0 0
        %366 = vmatprep.mubr.bf16.mxu0 0
        %367 = vmatmul.mubr.bf16.gmra.mrb[0].mxu0 %v323
        %v368 = vpop.f32.mrb[0].mxu0
        %v369 = vadd.f32 0.0, %v368
        %v370 = vpop.f32.mrb[0].mxu0
        %v371 = vadd.f32 0.0, %v370
        %v372 = vpop.f32.mrb[0].mxu0
        %v373 = vadd.f32 0.0, %v372
        %v374 = vpop.f32.mrb[0].mxu0
        %v375 = vadd.f32 0.0, %v374
        %376 = vmatprep.mubr.bf16.mxu0 0
        %377 = vmatmul.mubr.bf16.gmra.mrb[0].mxu0 %v326
        %v378 = vpop.f32.mrb[0].mxu0
        %v379 = vadd.f32 0.0, %v378
        %v380 = vpop.f32.mrb[0].mxu0
        %v381 = vadd.f32 0.0, %v380
        %v382 = vpop.f32.mrb[0].mxu0
        %v383 = vadd.f32 0.0, %v382
        %v384 = vpop.f32.mrb[0].mxu0
        %v385 = vadd.f32 0.0, %v384
        %386 = vmatprep.mubr.bf16.mxu0 0
        %387 = vmatmul.mubr.bf16.gmra.mrb[0].mxu0 %v329
        %v388 = vpop.f32.mrb[0].mxu0
        %v389 = vadd.f32 0.0, %v388
        %v390 = vpop.f32.mrb[0].mxu0
        %v391 = vadd.f32 0.0, %v390
        %v392 = vpop.f32.mrb[0].mxu0
        %v393 = vadd.f32 0.0, %v392
        %v394 = vpop.f32.mrb[0].mxu0
        %v395 = vadd.f32 0.0, %v394
        %396 = vmatprep.mubr.bf16.mxu0 0
        %397 = vmatmul.mubr.bf16.gmra.mrb[0].mxu0 %v332
        %v398 = vpop.f32.mrb[0].mxu0
        %v399 = vadd.f32 0.0, %v398
        %v400 = vpop.f32.mrb[0].mxu0
        %v401 = vadd.f32 0.0, %v400
        %v402 = vpop.f32.mrb[0].mxu0
        %v403 = vadd.f32 0.0, %v402
        %v404 = vpop.f32.mrb[0].mxu0
        %v405 = vadd.f32 0.0, %v404
        %406 = vdwg.mxu0
        %v407 = vld [vmem:[#allocation2] sm:$0x3]
        %v409 = vlaneseq
        %v410 = vshrl.u32 %v409, 7
        %v411 = vsub.s32 0, %v410
        %v412 = vrot.slane %v407, %v411
        %v413 = vlaneseq
        %v414 = vshrl.u32 %v413, 7
        %v415 = vsub.s32 1, %v414
        %v416 = vrot.slane %v407, %v415
        %v419 = vmul.f32 %v369, %v412
        %v420 = vmul.f32 %v371, %v416
        %v421 = vmul.f32 %v373, %v412
        %v422 = vmul.f32 %v375, %v416
        %v423 = vmul.f32 %v379, %v412
        %v424 = vmul.f32 %v381, %v416
        %v425 = vmul.f32 %v383, %v412
        %v426 = vmul.f32 %v385, %v416
        %v427 = vmul.f32 %v389, %v412
        %v428 = vmul.f32 %v391, %v416
        %v429 = vmul.f32 %v393, %v412
        %v430 = vmul.f32 %v395, %v416
        %v431 = vmul.f32 %v399, %v412
        %v432 = vmul.f32 %v401, %v416
        %v433 = vmul.f32 %v403, %v412
        %v434 = vmul.f32 %v405, %v416
        %v435 = vld [vmem:[#allocation4] sm:$0x3]
        %v437 = vlaneseq
        %v438 = vshrl.u32 %v437, 7
        %v439 = vsub.s32 0, %v438
        %v440 = vrot.slane %v435, %v439
        %v441 = vlaneseq
        %v442 = vshrl.u32 %v441, 7
        %v443 = vsub.s32 1, %v442
        %v444 = vrot.slane %v435, %v443
        %v447 = vadd.f32 %v419, %v440
        %v448 = vadd.f32 %v420, %v444
        %v449 = vadd.f32 %v421, %v440
        %v450 = vadd.f32 %v422, %v444
        %v451 = vadd.f32 %v423, %v440
        %v452 = vadd.f32 %v424, %v444
        %v453 = vadd.f32 %v425, %v440
        %v454 = vadd.f32 %v426, %v444
        %v455 = vadd.f32 %v427, %v440
        %v456 = vadd.f32 %v428, %v444
        %v457 = vadd.f32 %v429, %v440
        %v458 = vadd.f32 %v430, %v444
        %v459 = vadd.f32 %v431, %v440
        %v460 = vadd.f32 %v432, %v444
        %v461 = vadd.f32 %v433, %v440
        %v462 = vadd.f32 %v434, %v444
        %v463 = vxor.u32 %v447, 2147483648
        %v464 = vxor.u32 %v448, 2147483648
        %v465 = vxor.u32 %v449, 2147483648
        %v466 = vxor.u32 %v450, 2147483648
        %v467 = vxor.u32 %v451, 2147483648
        %v468 = vxor.u32 %v452, 2147483648
        %v469 = vxor.u32 %v453, 2147483648
        %v470 = vxor.u32 %v454, 2147483648
        %v471 = vxor.u32 %v455, 2147483648
        %v472 = vxor.u32 %v456, 2147483648
        %v473 = vxor.u32 %v457, 2147483648
        %v474 = vxor.u32 %v458, 2147483648
        %v475 = vxor.u32 %v459, 2147483648
        %v476 = vxor.u32 %v460, 2147483648
        %v477 = vxor.u32 %v461, 2147483648
        %v478 = vxor.u32 %v462, 2147483648
        %v479 = vmul.f32 %v463, 1.442695
        %v480 = vpow.pop %v479
        %v481 = vmul.f32 %v464, 1.442695
        %v482 = vpow.pop %v481
        %v483 = vmul.f32 %v465, 1.442695
        %v484 = vpow.pop %v483
        %v485 = vmul.f32 %v466, 1.442695
        %v486 = vpow.pop %v485
        %v487 = vmul.f32 %v467, 1.442695
        %v488 = vpow.pop %v487
        %v489 = vmul.f32 %v468, 1.442695
        %v490 = vpow.pop %v489
        %v491 = vmul.f32 %v469, 1.442695
        %v492 = vpow.pop %v491
        %v493 = vmul.f32 %v470, 1.442695
        %v494 = vpow.pop %v493
        %v495 = vmul.f32 %v471, 1.442695
        %v496 = vpow.pop %v495
        %v497 = vmul.f32 %v472, 1.442695
        %v498 = vpow.pop %v497
        %v499 = vmul.f32 %v473, 1.442695
        %v500 = vpow.pop %v499
        %v501 = vmul.f32 %v474, 1.442695
        %v502 = vpow.pop %v501
        %v503 = vmul.f32 %v475, 1.442695
        %v504 = vpow.pop %v503
        %v505 = vmul.f32 %v476, 1.442695
        %v506 = vpow.pop %v505
        %v507 = vmul.f32 %v477, 1.442695
        %v508 = vpow.pop %v507
        %v509 = vmul.f32 %v478, 1.442695
        %v510 = vpow.pop %v509
        %v511 = vadd.f32 %v480, 1.0
        %v512 = vadd.f32 %v482, 1.0
        %v513 = vadd.f32 %v484, 1.0
        %v514 = vadd.f32 %v486, 1.0
        %v515 = vadd.f32 %v488, 1.0
        %v516 = vadd.f32 %v490, 1.0
        %v517 = vadd.f32 %v492, 1.0
        %v518 = vadd.f32 %v494, 1.0
        %v519 = vadd.f32 %v496, 1.0
        %v520 = vadd.f32 %v498, 1.0
        %v521 = vadd.f32 %v500, 1.0
        %v522 = vadd.f32 %v502, 1.0
        %v523 = vadd.f32 %v504, 1.0
        %v524 = vadd.f32 %v506, 1.0
        %v525 = vadd.f32 %v508, 1.0
        %v526 = vadd.f32 %v510, 1.0
        %v527 = vrcp.pop %v511
        %v528 = vmul.f32 1.0, %v527
        %v529 = vrcp.pop %v512
        %v530 = vmul.f32 1.0, %v529
        %v531 = vrcp.pop %v513
        %v532 = vmul.f32 1.0, %v531
        %v533 = vrcp.pop %v514
        %v534 = vmul.f32 1.0, %v533
        %v535 = vrcp.pop %v515
        %v536 = vmul.f32 1.0, %v535
        %v537 = vrcp.pop %v516
        %v538 = vmul.f32 1.0, %v537
        %v539 = vrcp.pop %v517
        %v540 = vmul.f32 1.0, %v539
        %v541 = vrcp.pop %v518
        %v542 = vmul.f32 1.0, %v541
        %v543 = vrcp.pop %v519
        %v544 = vmul.f32 1.0, %v543
        %v545 = vrcp.pop %v520
        %v546 = vmul.f32 1.0, %v545
        %v547 = vrcp.pop %v521
        %v548 = vmul.f32 1.0, %v547
        %v549 = vrcp.pop %v522
        %v550 = vmul.f32 1.0, %v549
        %v551 = vrcp.pop %v523
        %v552 = vmul.f32 1.0, %v551
        %v553 = vrcp.pop %v524
        %v554 = vmul.f32 1.0, %v553
        %v555 = vrcp.pop %v525
        %v556 = vmul.f32 1.0, %v555
        %v557 = vrcp.pop %v526
        %v558 = vmul.f32 1.0, %v557
        %v559 = vmul.f32 %v447, %v528
        %v560 = vmul.f32 %v448, %v530
        %v561 = vmul.f32 %v449, %v532
        %v562 = vmul.f32 %v450, %v534
        %v563 = vmul.f32 %v451, %v536
        %v564 = vmul.f32 %v452, %v538
        %v565 = vmul.f32 %v453, %v540
        %v566 = vmul.f32 %v454, %v542
        %v567 = vmul.f32 %v455, %v544
        %v568 = vmul.f32 %v456, %v546
        %v569 = vmul.f32 %v457, %v548
        %v570 = vmul.f32 %v458, %v550
        %v571 = vmul.f32 %v459, %v552
        %v572 = vmul.f32 %v460, %v554
        %v573 = vmul.f32 %v461, %v556
        %v574 = vmul.f32 %v462, %v558
        %v575 = vpack.c.bf16 %v561, %v559
        %v576 = vpack.c.bf16 %v565, %v563
        %v577 = vpack.c.bf16 %v569, %v567
        %v578 = vpack.c.bf16 %v573, %v571
        %v583 = vunpack.c.l.b16 %v575
        %v584 = vunpack.c.h.b16 %v575
        %v585 = vunpack.c.l.b16 %v576
        %v586 = vunpack.c.h.b16 %v576
        %v587 = vunpack.c.l.b16 %v577
        %v588 = vunpack.c.h.b16 %v577
        %v589 = vunpack.c.l.b16 %v578
        %v590 = vunpack.c.h.b16 %v578
        %v591 = vpack.c.b16 %v583, %v583
        %v592 = vpack.c.b16 %v584, %v584
        %v593 = vpack.c.b16 %v585, %v585
        %v594 = vpack.c.b16 %v586, %v586
        %v595 = vpack.c.b16 %v587, %v587
        %v596 = vpack.c.b16 %v588, %v588
        %v597 = vpack.c.b16 %v589, %v589
        %v598 = vpack.c.b16 %v590, %v590
        %607 = vst [vmem:[%s260] sm:$0xf] %v591
        %608 = vst [vmem:[%s260 + $0x4] sm:$0xf] %v592
        %609 = vst [vmem:[%s260 + $0x8] sm:$0xf] %v593
        %610 = vst [vmem:[%s260 + $0xc] sm:$0xf] %v594
        %611 = vst [vmem:[%s260 + $0x10] sm:$0xf] %v595
        %612 = vst [vmem:[%s260 + $0x14] sm:$0xf] %v596
        %613 = vst [vmem:[%s260 + $0x18] sm:$0xf] %v597
        %614 = vst [vmem:[%s260 + $0x1c] sm:$0xf] %v598
        %v615 = vpack.c.bf16 %v562, %v560
        %v616 = vpack.c.bf16 %v566, %v564
        %v617 = vpack.c.bf16 %v570, %v568
        %v618 = vpack.c.bf16 %v574, %v572
        %v623 = vunpack.c.l.b16 %v615
        %v624 = vunpack.c.h.b16 %v615
        %v625 = vunpack.c.l.b16 %v616
        %v626 = vunpack.c.h.b16 %v616
        %v627 = vunpack.c.l.b16 %v617
        %v628 = vunpack.c.h.b16 %v617
        %v629 = vunpack.c.l.b16 %v618
        %v630 = vunpack.c.h.b16 %v618
        %v631 = vpack.c.b16 %v623, %v623
        %v632 = vpack.c.b16 %v624, %v624
        %v633 = vpack.c.b16 %v625, %v625
        %v634 = vpack.c.b16 %v626, %v626
        %v635 = vpack.c.b16 %v627, %v627
        %v636 = vpack.c.b16 %v628, %v628
        %v637 = vpack.c.b16 %v629, %v629
        %v638 = vpack.c.b16 %v630, %v630
        %647 = vst [vmem:[%s266] sm:$0xf] %v631
        %648 = vst [vmem:[%s266 + $0x4] sm:$0xf] %v632
        %649 = vst [vmem:[%s266 + $0x8] sm:$0xf] %v633
        %650 = vst [vmem:[%s266 + $0xc] sm:$0xf] %v634
        %651 = vst [vmem:[%s266 + $0x10] sm:$0xf] %v635
        %652 = vst [vmem:[%s266 + $0x14] sm:$0xf] %v636
        %653 = vst [vmem:[%s266 + $0x18] sm:$0xf] %v637
        %654 = vst [vmem:[%s266 + $0x1c] sm:$0xf] %v638
        %s655 = smul.u32 8, %s19
        %p656 = scmp.lt.s32.totalorder %s655, 15
        %s657 = scalar_select %p656, %s655, 15
        %s658 = smul.addr %s657, 4
        %s659 = scalar_lea.vmem %s4, %s658
        %s660 = smul.u32 8, %s19
        %p661 = scmp.lt.s32.totalorder %s660, 15
        %s662 = scalar_select %p661, %s660, 15
        %s663 = smul.addr %s662, 4
        %s664 = scalar_lea.vmem %s5, %s663
        // Predicated region
        $region45: #{_lambda_.5} parent=35 // pred_check
          %p665 = pneg %p126
        $region46: #{_lambda_.5} parent=35 // pred_check_branch
          %667 = sbr.rel (%p665) target = $region48
        $region47: #{_lambda_.5} parent=35 // pred_region
          %s668 = smul.u32 8, %s19
        $region48: #{_lambda_.5} parent=35 // pred_fallthru
          _
        // Predicated region
        $region49: #{_lambda_.5} parent=35 // pred_check
          %p669 = pneg %p152
        $region50: #{_lambda_.5} parent=35 // pred_check_branch
          %671 = sbr.rel (%p669) target = $region52
        $region51: #{_lambda_.5} parent=35 // pred_region
          %s672 = smul.u32 8, %s19
        $region52: #{_lambda_.5} parent=35 // pred_fallthru
          _
      $region36: #{_lambda_.5} parent=5 // pred_fallthru
        _
      %p673 = scmp.le.s32.totalorder 2, %s14
      // Predicated region
      $region53: #{_lambda_.5} parent=5 // pred_check
        %p674 = pneg %p673
      $region54: #{_lambda_.5} parent=5 // pred_check_branch
        %676 = sbr.rel (%p674) target = $region56
      $region55: #{_lambda_.5} parent=5 // pred_region
        %s677 = ssub.s32 %s14, 2
        // Predicated region
        $region57: #{_lambda_.5} parent=55 // pred_check
          %p678 = pneg %p132
        $region58: #{_lambda_.5} parent=55 // pred_check_branch
          %680 = sbr.rel (%p678) target = $region60
        $region59: #{_lambda_.5} parent=55 // pred_region
          %s681 = smul.u32 8, %s20
          %p682 = scmp.lt.s32.totalorder %s681, 15
          %s683 = scalar_select %p682, %s681, 15
          %s684 = smul.addr %s683, 4
          %s685 = scalar_lea.vmem %s4, %s684
        $region60: #{_lambda_.5} parent=55 // pred_fallthru
          _
        // Predicated region
        $region61: #{_lambda_.5} parent=55 // pred_check
          %p686 = pneg %p158
        $region62: #{_lambda_.5} parent=55 // pred_check_branch
          %688 = sbr.rel (%p686) target = $region64
        $region63: #{_lambda_.5} parent=55 // pred_region
          %s689 = smul.u32 8, %s20
          %p690 = scmp.lt.s32.totalorder %s689, 15
          %s691 = scalar_select %p690, %s689, 15
          %s692 = smul.addr %s691, 4
          %s693 = scalar_lea.vmem %s5, %s692
        $region64: #{_lambda_.5} parent=55 // pred_fallthru
          _
      $region56: #{_lambda_.5} parent=5 // pred_fallthru
        _
    $region6: #{_lambda_.5} parent=1 // loop_footer
      %s18 = sadd.s32 1, %s14
    $region7: #{_lambda_.5} parent=1 // loop_footer_branch
      %13 = sbr.rel target = $region3
    $region8: #{_lambda_.5} parent=1 // loop_exit
      _
    %694 = vsyncpa [#allocation3], 1
    %s695 = scalar_lea.sflag [#allocation3], 1
    %696 = vsyncpa %s695, 1
    %697 = vsyncpa [#allocation5], 1

// kernel: _lambda_.8
$region0: #{_lambda_.8}
  #allocation0 [shape = 'u32[]', space=smem, size = 0x4, offset = 0x4, fixed_abs, tag = 'smem constant byte address 0x4 - core index']
  #allocation1 [shape = 'u32[144,128]{1,0:T(1,128)}', space=vmem, size = 0x12000, scoped, tag = 'internal scratch']
  %s0 = inlined_call_operand.vmem [shape: bf16[2,64,128], index: 0, kind: input, shape index: {}]
  %s1 = inlined_call_operand.vmem [shape: bf16[2,64,128], index: 1, kind: input, shape index: {}]
  %s2 = inlined_call_operand.vmem [shape: f32[2,1,128], index: 2, kind: input, shape index: {}]
  %s3 = inlined_call_operand.vmem [shape: bf16[2,64,128], index: 3, kind: output, shape index: {}]
  %s4 = sld [smem:[#allocation0]]
  $region45: #{_lambda_.8} parent=0
    _
  %s6 = ssub.s32 1, %s4
  %s7 = scalar_select 0, %s6, %s4
  loop: start=0, step=1, limit=4
  $region2: #{_lambda_.8} parent=0 // loop_pre_header
    _
  $region3: #{_lambda_.8} parent=0 // loop_header
    %s9 = sphi 0, %s13
    %p10 = scmp.ge.s32.totalorder %s9, 4
    %s19 = sphi 0, %s21
    %s22 = sphi 0, %s19
    %s23 = sphi 0, %s22
    %s39 = sphi 0, %s23
    %s45 = sphi 0, %s47
    %s48 = sphi 0, %s45
    %s49 = sphi 0, %s48
    %s65 = sphi 0, %s49
    %s71 = sphi 0, %s73
    %s74 = sphi 0, %s71
    %s75 = sphi 0, %s74
    %s91 = sphi 0, %s75
    %s97 = sphi 0, %s99
    %s100 = sphi 0, %s97
    %s101 = sphi 0, %s100
    %s117 = sphi 0, %s101
  $region4: #{_lambda_.8} parent=0 // loop_header_branch
    %12 = sbr.rel (%p10) target = $region8
  $region5: #{_lambda_.8} parent=0 // loop_body
    %s14 = ssub.s32 %s9, 1
    %s15 = ssub.s32 %s9, 2
    %s16 = sadd.s32 %s9, 1
    %s17 = ssub.s32 %s9, %s16
    %p18 = scmp.eq.s32.totalorder %s17, 0
    %s20 = sadd.s32 %s19, 1
    %s21 = scalar_select %p18, %s19, %s20
    %p24 = pneg %p18
    %p25 = scmp.eq.s32.totalorder %s9, 1
    %p26 = por %p24, %p25
    %p27 = scmp.ne.s32.totalorder %s19, %s22
    %p28 = scmp.eq.s32.totalorder %s9, 0
    %p29 = por %p27, %p28
    %p30 = scmp.ne.s32.totalorder %s19, %s22
    %p31 = scmp.eq.s32.totalorder %s14, 1
    %p32 = por %p30, %p31
    %p33 = scmp.ne.s32.totalorder %s22, %s23
    %p34 = scmp.eq.s32.totalorder %s14, 0
    %p35 = por %p33, %p34
    %p36 = scmp.ne.s32.totalorder %s22, %s23
    %p37 = scmp.eq.s32.totalorder %s15, 1
    %p38 = por %p36, %p37
    %p40 = scmp.ne.s32.totalorder %s23, %s39
    %p41 = scmp.eq.s32.totalorder %s15, 0
    %p42 = por %p40, %p41
    %s43 = ssub.s32 %s9, %s16
    %p44 = scmp.eq.s32.totalorder %s43, 0
    %s46 = sadd.s32 %s45, 1
    %s47 = scalar_select %p44, %s45, %s46
    %p50 = pneg %p44
    %p51 = scmp.eq.s32.totalorder %s9, 1
    %p52 = por %p50, %p51
    %p53 = scmp.ne.s32.totalorder %s45, %s48
    %p54 = scmp.eq.s32.totalorder %s9, 0
    %p55 = por %p53, %p54
    %p56 = scmp.ne.s32.totalorder %s45, %s48
    %p57 = scmp.eq.s32.totalorder %s14, 1
    %p58 = por %p56, %p57
    %p59 = scmp.ne.s32.totalorder %s48, %s49
    %p60 = scmp.eq.s32.totalorder %s14, 0
    %p61 = por %p59, %p60
    %p62 = scmp.ne.s32.totalorder %s48, %s49
    %p63 = scmp.eq.s32.totalorder %s15, 1
    %p64 = por %p62, %p63
    %p66 = scmp.ne.s32.totalorder %s49, %s65
    %p67 = scmp.eq.s32.totalorder %s15, 0
    %p68 = por %p66, %p67
    %s69 = ssub.s32 %s9, %s16
    %p70 = scmp.eq.s32.totalorder %s69, 0
    %s72 = sadd.s32 %s71, 1
    %s73 = scalar_select %p70, %s71, %s72
    %p76 = pneg %p70
    %p77 = scmp.eq.s32.totalorder %s9, 1
    %p78 = por %p76, %p77
    %p79 = scmp.ne.s32.totalorder %s71, %s74
    %p80 = scmp.eq.s32.totalorder %s9, 0
    %p81 = por %p79, %p80
    %p82 = scmp.ne.s32.totalorder %s71, %s74
    %p83 = scmp.eq.s32.totalorder %s14, 1
    %p84 = por %p82, %p83
    %p85 = scmp.ne.s32.totalorder %s74, %s75
    %p86 = scmp.eq.s32.totalorder %s14, 0
    %p87 = por %p85, %p86
    %p88 = scmp.ne.s32.totalorder %s74, %s75
    %p89 = scmp.eq.s32.totalorder %s15, 1
    %p90 = por %p88, %p89
    %p92 = scmp.ne.s32.totalorder %s75, %s91
    %p93 = scmp.eq.s32.totalorder %s15, 0
    %p94 = por %p92, %p93
    %s95 = ssub.s32 %s9, %s16
    %p96 = scmp.eq.s32.totalorder %s95, 0
    %s98 = sadd.s32 %s97, 1
    %s99 = scalar_select %p96, %s97, %s98
    %p102 = pneg %p96
    %p103 = scmp.eq.s32.totalorder %s9, 1
    %p104 = por %p102, %p103
    %p105 = scmp.ne.s32.totalorder %s97, %s100
    %p106 = scmp.eq.s32.totalorder %s9, 0
    %p107 = por %p105, %p106
    %p108 = scmp.ne.s32.totalorder %s97, %s100
    %p109 = scmp.eq.s32.totalorder %s14, 1
    %p110 = por %p108, %p109
    %p111 = scmp.ne.s32.totalorder %s100, %s101
    %p112 = scmp.eq.s32.totalorder %s14, 0
    %p113 = por %p111, %p112
    %p114 = scmp.ne.s32.totalorder %s100, %s101
    %p115 = scmp.eq.s32.totalorder %s15, 1
    %p116 = por %p114, %p115
    %p118 = scmp.ne.s32.totalorder %s101, %s117
    %p119 = scmp.eq.s32.totalorder %s15, 0
    %p120 = por %p118, %p119
    %p121 = scmp.le.s32.totalorder 1, %s9
    %p122 = scmp.lt.s32.totalorder %s9, 3
    %p123 = pnand %p121, %p122
    %p124 = pneg %p123
    // Predicated region
    $region9: #{_lambda_.8} parent=5 // pred_check
      _
    $region10: #{_lambda_.8} parent=5 // pred_check_branch
      %126 = sbr.rel (%p123) target = $region12
    $region11: #{_lambda_.8} parent=5 // pred_region
      %s127 = ssub.s32 %s9, 1
    $region12: #{_lambda_.8} parent=5 // pred_fallthru
      _
    %p128 = scmp.lt.s32.totalorder %s9, 2
    // Predicated region
    $region13: #{_lambda_.8} parent=5 // pred_check
      %p129 = pneg %p128
    $region14: #{_lambda_.8} parent=5 // pred_check_branch
      %131 = sbr.rel (%p129) target = $region16
    $region15: #{_lambda_.8} parent=5 // pred_region
      // Predicated region
      $region17: #{_lambda_.8} parent=15 // pred_check
        %p132 = pneg %p29
      $region18: #{_lambda_.8} parent=15 // pred_check_branch
        %134 = sbr.rel (%p132) target = $region20
      $region19: #{_lambda_.8} parent=15 // pred_region
        %p135 = scmp.lt.s32.totalorder %s9, 1
        %s136 = scalar_select %p135, %s9, 1
        %s137 = smul.addr %s136, 8
        %s138 = smul.addr %s137, 4
        %s139 = scalar_lea.vmem %s0, %s138
      $region20: #{_lambda_.8} parent=15 // pred_fallthru
        _
      // Predicated region
      $region21: #{_lambda_.8} parent=15 // pred_check
        %p140 = pneg %p55
      $region22: #{_lambda_.8} parent=15 // pred_check_branch
        %142 = sbr.rel (%p140) target = $region24
      $region23: #{_lambda_.8} parent=15 // pred_region
        %p143 = scmp.lt.s32.totalorder %s9, 1
        %s144 = scalar_select %p143, %s9, 1
        %s145 = smul.addr %s144, 8
        %s146 = smul.addr %s145, 4
        %s147 = scalar_lea.vmem %s1, %s146
      $region24: #{_lambda_.8} parent=15 // pred_fallthru
        _
      // Predicated region
      $region25: #{_lambda_.8} parent=15 // pred_check
        %p148 = pneg %p81
      $region26: #{_lambda_.8} parent=15 // pred_check_branch
        %150 = sbr.rel (%p148) target = $region28
      $region27: #{_lambda_.8} parent=15 // pred_region
        %p151 = scmp.lt.s32.totalorder %s9, 1
        %s152 = scalar_select %p151, %s9, 1
        %s153 = scalar_lea.vmem %s2, %s152
      $region28: #{_lambda_.8} parent=15 // pred_fallthru
        _
    $region16: #{_lambda_.8} parent=5 // pred_fallthru
      _
    %p154 = scmp.le.s32.totalorder 1, %s9
    %p155 = scmp.lt.s32.totalorder %s9, 3
    %p156 = pnand %p154, %p155
    %p157 = pneg %p156
    // Predicated region
    $region29: #{_lambda_.8} parent=5 // pred_check
      _
    $region30: #{_lambda_.8} parent=5 // pred_check_branch
      %159 = sbr.rel (%p156) target = $region32
    $region31: #{_lambda_.8} parent=5 // pred_region
      %s160 = ssub.s32 %s9, 1
      %p161 = scmp.lt.s32.totalorder %s14, 1
      %s162 = scalar_select %p161, %s14, 1
      %s163 = smul.addr %s162, 8
      %s164 = smul.addr %s163, 4
      %s165 = scalar_lea.vmem %s0, %s164
      %p166 = pneg %p35
      %p167 = pneg %p32
      %p168 = scmp.lt.s32.totalorder %s14, 1
      %s169 = scalar_select %p168, %s14, 1
      %s170 = smul.addr %s169, 8
      %s171 = smul.addr %s170, 4
      %s172 = scalar_lea.vmem %s1, %s171
      %p173 = pneg %p61
      %p174 = pneg %p58
      %p175 = scmp.lt.s32.totalorder %s14, 1
      %s176 = scalar_select %p175, %s14, 1
      %s177 = scalar_lea.vmem %s2, %s176
      %p178 = pneg %p87
      %p179 = pneg %p84
      %p180 = pneg %p113
      %p181 = pneg %p110
      %p182 = scmp.lt.s32.totalorder %s14, 1
      %s183 = scalar_select %p182, %s14, 1
      %s184 = smul.addr %s183, 8
      %s185 = smul.addr %s184, 4
      %s186 = scalar_lea.vmem %s3, %s185
      %p187 = scmp.lt.s32.totalorder %s14, 1
      %s188 = scalar_select %p187, %s14, 1
      %s189 = smul.addr %s188, 8
      %s190 = smul.addr %s189, 4
      %s191 = scalar_lea.vmem %s0, %s190
      %p192 = scmp.lt.s32.totalorder %s14, 1
      %s193 = scalar_select %p192, %s14, 1
      %s194 = smul.addr %s193, 8
      %s195 = smul.addr %s194, 4
      %s196 = scalar_lea.vmem %s1, %s195
      %p197 = scmp.lt.s32.totalorder %s14, 1
      %s198 = scalar_select %p197, %s14, 1
      %s199 = scalar_lea.vmem %s2, %s198
      %p200 = scmp.lt.s32.totalorder %s14, 1
      %s201 = scalar_select %p200, %s14, 1
      %s202 = smul.addr %s201, 8
      %s203 = smul.addr %s202, 4
      %s204 = scalar_lea.vmem %s3, %s203
      %v205 = vld [vmem:[%s191] sm:$0xf]
      %v206 = vld [vmem:[%s191 + $0x4] sm:$0xf]
      %v207 = vld [vmem:[%s191 + $0x8] sm:$0xf]
      %v208 = vld [vmem:[%s191 + $0xc] sm:$0xf]
      %v209 = vld [vmem:[%s191 + $0x10] sm:$0xf]
      %v210 = vld [vmem:[%s191 + $0x14] sm:$0xf]
      %v211 = vld [vmem:[%s191 + $0x18] sm:$0xf]
      %v212 = vld [vmem:[%s191 + $0x1c] sm:$0xf]
      %v213 = vunpack.c.l.bf16 %v205
      %v214 = vunpack.c.l.bf16 %v206
      %v215 = vunpack.c.l.bf16 %v207
      %v216 = vunpack.c.l.bf16 %v208
      %v217 = vunpack.c.l.bf16 %v209
      %v218 = vunpack.c.l.bf16 %v210
      %v219 = vunpack.c.l.bf16 %v211
      %v220 = vunpack.c.l.bf16 %v212
      %v221 = vld [vmem:[%s199] sm:$0x1]
      %v223 = vlaneseq
      %v224 = vshrl.u32 %v223, 7
      %v225 = vsub.s32 0, %v224
      %v226 = vrot.slane %v221, %v225
      %v228 = vmul.f32 %v213, %v226
      %v229 = vmul.f32 %v214, %v226
      %v230 = vmul.f32 %v215, %v226
      %v231 = vmul.f32 %v216, %v226
      %v232 = vmul.f32 %v217, %v226
      %v233 = vmul.f32 %v218, %v226
      %v234 = vmul.f32 %v219, %v226
      %v235 = vmul.f32 %v220, %v226
      %v236 = vld [vmem:[%s196] sm:$0xf]
      %v237 = vld [vmem:[%s196 + $0x4] sm:$0xf]
      %v238 = vld [vmem:[%s196 + $0x8] sm:$0xf]
      %v239 = vld [vmem:[%s196 + $0xc] sm:$0xf]
      %v240 = vld [vmem:[%s196 + $0x10] sm:$0xf]
      %v241 = vld [vmem:[%s196 + $0x14] sm:$0xf]
      %v242 = vld [vmem:[%s196 + $0x18] sm:$0xf]
      %v243 = vld [vmem:[%s196 + $0x1c] sm:$0xf]
      %v244 = vunpack.c.l.bf16 %v236
      %v245 = vunpack.c.l.bf16 %v237
      %v246 = vunpack.c.l.bf16 %v238
      %v247 = vunpack.c.l.bf16 %v239
      %v248 = vunpack.c.l.bf16 %v240
      %v249 = vunpack.c.l.bf16 %v241
      %v250 = vunpack.c.l.bf16 %v242
      %v251 = vunpack.c.l.bf16 %v243
      %v252 = vadd.f32 %v228, %v244
      %v253 = vadd.f32 %v229, %v245
      %v254 = vadd.f32 %v230, %v246
      %v255 = vadd.f32 %v231, %v247
      %v256 = vadd.f32 %v232, %v248
      %v257 = vadd.f32 %v233, %v249
      %v258 = vadd.f32 %v234, %v250
      %v259 = vadd.f32 %v235, %v251
      %v260 = vpack.c.bf16 %v253, %v252
      %v261 = vpack.c.bf16 %v255, %v254
      %v262 = vpack.c.bf16 %v257, %v256
      %v263 = vpack.c.bf16 %v259, %v258
      %v268 = vunpack.c.l.b16 %v260
      %v269 = vunpack.c.h.b16 %v260
      %v270 = vunpack.c.l.b16 %v261
      %v271 = vunpack.c.h.b16 %v261
      %v272 = vunpack.c.l.b16 %v262
      %v273 = vunpack.c.h.b16 %v262
      %v274 = vunpack.c.l.b16 %v263
      %v275 = vunpack.c.h.b16 %v263
      %v276 = vpack.c.b16 %v268, %v268
      %v277 = vpack.c.b16 %v269, %v269
      %v278 = vpack.c.b16 %v270, %v270
      %v279 = vpack.c.b16 %v271, %v271
      %v280 = vpack.c.b16 %v272, %v272
      %v281 = vpack.c.b16 %v273, %v273
      %v282 = vpack.c.b16 %v274, %v274
      %v283 = vpack.c.b16 %v275, %v275
      %292 = vst [vmem:[%s204] sm:$0xf] %v276
      %293 = vst [vmem:[%s204 + $0x4] sm:$0xf] %v277
      %294 = vst [vmem:[%s204 + $0x8] sm:$0xf] %v278
      %295 = vst [vmem:[%s204 + $0xc] sm:$0xf] %v279
      %296 = vst [vmem:[%s204 + $0x10] sm:$0xf] %v280
      %297 = vst [vmem:[%s204 + $0x14] sm:$0xf] %v281
      %298 = vst [vmem:[%s204 + $0x18] sm:$0xf] %v282
      %299 = vst [vmem:[%s204 + $0x1c] sm:$0xf] %v283
      %p300 = scmp.lt.s32.totalorder %s14, 1
      %s301 = scalar_select %p300, %s14, 1
      %s302 = smul.addr %s301, 8
      %s303 = smul.addr %s302, 4
      %s304 = scalar_lea.vmem %s3, %s303
      // Predicated region
      $region33: #{_lambda_.8} parent=31 // pred_check
        %p305 = pneg %p110
      $region34: #{_lambda_.8} parent=31 // pred_check_branch
        %307 = sbr.rel (%p305) target = $region36
      $region35: #{_lambda_.8} parent=31 // pred_region
        _
      $region36: #{_lambda_.8} parent=31 // pred_fallthru
        _
    $region32: #{_lambda_.8} parent=5 // pred_fallthru
      _
    %p308 = scmp.le.s32.totalorder 2, %s9
    // Predicated region
    $region37: #{_lambda_.8} parent=5 // pred_check
      %p309 = pneg %p308
    $region38: #{_lambda_.8} parent=5 // pred_check_branch
      %311 = sbr.rel (%p309) target = $region40
    $region39: #{_lambda_.8} parent=5 // pred_region
      %s312 = ssub.s32 %s9, 2
      // Predicated region
      $region41: #{_lambda_.8} parent=39 // pred_check
        %p313 = pneg %p116
      $region42: #{_lambda_.8} parent=39 // pred_check_branch
        %315 = sbr.rel (%p313) target = $region44
      $region43: #{_lambda_.8} parent=39 // pred_region
        %p316 = scmp.lt.s32.totalorder %s15, 1
        %s317 = scalar_select %p316, %s15, 1
        %s318 = smul.addr %s317, 8
        %s319 = smul.addr %s318, 4
        %s320 = scalar_lea.vmem %s3, %s319
      $region44: #{_lambda_.8} parent=39 // pred_fallthru
        _
    $region40: #{_lambda_.8} parent=5 // pred_fallthru
      _
  $region6: #{_lambda_.8} parent=0 // loop_footer
    %s13 = sadd.s32 1, %s9
  $region7: #{_lambda_.8} parent=0 // loop_footer_branch
    %8 = sbr.rel target = $region3
  $region8: #{_lambda_.8} parent=0 // loop_exit
    _

// kernel: _lambda_.7
$region0: #{_lambda_.7}
  #allocation0 [shape = 'u32[]', space=smem, size = 0x4, offset = 0x4, fixed_abs, tag = 'smem constant byte address 0x4 - core index']
  #allocation1 [shape = 'u32[144,128]{1,0:T(1,128)}', space=vmem, size = 0x12000, scoped, tag = 'internal scratch']
  %s0 = inlined_call_operand.vmem [shape: bf16[2,10,10,128], index: 0, kind: input, shape index: {}]
  %s1 = inlined_call_operand.vmem [shape: bf16[1152,128], index: 1, kind: input, shape index: {}]
  %s2 = inlined_call_operand.vmem [shape: f32[1,128], index: 2, kind: input, shape index: {}]
  %s3 = inlined_call_operand.vmem [shape: f32[1,128], index: 3, kind: input, shape index: {}]
  %s4 = inlined_call_operand.vmem [shape: bf16[2,64,128], index: 4, kind: output, shape index: {0}]
  %s5 = inlined_call_operand.vmem [shape: f32[2,1,128], index: 5, kind: output, shape index: {1}]
  %6 = xla_tuple %s4, %s5
  %s7 = sld [smem:[#allocation0]]
  $region57: #{_lambda_.7} parent=0
    _
  %s9 = ssub.s32 1, %s7
  %s10 = scalar_select 0, %s9, %s7
  loop: start=0, step=1, limit=4
  $region2: #{_lambda_.7} parent=0 // loop_pre_header
    _
  $region3: #{_lambda_.7} parent=0 // loop_header
    %s12 = sphi 0, %s16
    %p13 = scmp.ge.s32.totalorder %s12, 4
    %s22 = sphi 0, %s24
    %s25 = sphi 0, %s22
    %s26 = sphi 0, %s25
    %s42 = sphi 0, %s26
    %s46 = sphi 0, %s46
    %s48 = sphi 0, %s46
    %s49 = sphi 0, %s48
    %s63 = sphi 0, %s49
    %s67 = sphi 0, %s67
    %s69 = sphi 0, %s67
    %s70 = sphi 0, %s69
    %s84 = sphi 0, %s70
    %s88 = sphi 0, %s88
    %s90 = sphi 0, %s88
    %s91 = sphi 0, %s90
    %s105 = sphi 0, %s91
    %s111 = sphi 0, %s113
    %s114 = sphi 0, %s111
    %s115 = sphi 0, %s114
    %s131 = sphi 0, %s115
    %s137 = sphi 0, %s139
    %s140 = sphi 0, %s137
    %s141 = sphi 0, %s140
    %s157 = sphi 0, %s141
  $region4: #{_lambda_.7} parent=0 // loop_header_branch
    %15 = sbr.rel (%p13) target = $region8
  $region5: #{_lambda_.7} parent=0 // loop_body
    %s17 = ssub.s32 %s12, 1
    %s18 = ssub.s32 %s12, 2
    %s19 = sadd.s32 %s12, 1
    %s20 = ssub.s32 %s12, %s19
    %p21 = scmp.eq.s32.totalorder %s20, 0
    %s23 = sadd.s32 %s22, 1
    %s24 = scalar_select %p21, %s22, %s23
    %p27 = pneg %p21
    %p28 = scmp.eq.s32.totalorder %s12, 1
    %p29 = por %p27, %p28
    %p30 = scmp.ne.s32.totalorder %s22, %s25
    %p31 = scmp.eq.s32.totalorder %s12, 0
    %p32 = por %p30, %p31
    %p33 = scmp.ne.s32.totalorder %s22, %s25
    %p34 = scmp.eq.s32.totalorder %s17, 1
    %p35 = por %p33, %p34
    %p36 = scmp.ne.s32.totalorder %s25, %s26
    %p37 = scmp.eq.s32.totalorder %s17, 0
    %p38 = por %p36, %p37
    %p39 = scmp.ne.s32.totalorder %s25, %s26
    %p40 = scmp.eq.s32.totalorder %s18, 1
    %p41 = por %p39, %p40
    %p43 = scmp.ne.s32.totalorder %s26, %s42
    %p44 = scmp.eq.s32.totalorder %s18, 0
    %p45 = por %p43, %p44
    %s47 = sadd.s32 %s46, 1
    %p50 = scmp.eq.s32.totalorder %s12, 1
    %p51 = scmp.ne.s32.totalorder %s46, %s48
    %p52 = scmp.eq.s32.totalorder %s12, 0
    %p53 = por %p51, %p52
    %p54 = scmp.ne.s32.totalorder %s46, %s48
    %p55 = scmp.eq.s32.totalorder %s17, 1
    %p56 = por %p54, %p55
    %p57 = scmp.ne.s32.totalorder %s48, %s49
    %p58 = scmp.eq.s32.totalorder %s17, 0
    %p59 = por %p57, %p58
    %p60 = scmp.ne.s32.totalorder %s48, %s49
    %p61 = scmp.eq.s32.totalorder %s18, 1
    %p62 = por %p60, %p61
    %p64 = scmp.ne.s32.totalorder %s49, %s63
    %p65 = scmp.eq.s32.totalorder %s18, 0
    %p66 = por %p64, %p65
    %s68 = sadd.s32 %s67, 1
    %p71 = scmp.eq.s32.totalorder %s12, 1
    %p72 = scmp.ne.s32.totalorder %s67, %s69
    %p73 = scmp.eq.s32.totalorder %s12, 0
    %p74 = por %p72, %p73
    %p75 = scmp.ne.s32.totalorder %s67, %s69
    %p76 = scmp.eq.s32.totalorder %s17, 1
    %p77 = por %p75, %p76
    %p78 = scmp.ne.s32.totalorder %s69, %s70
    %p79 = scmp.eq.s32.totalorder %s17, 0
    %p80 = por %p78, %p79
    %p81 = scmp.ne.s32.totalorder %s69, %s70
    %p82 = scmp.eq.s32.totalorder %s18, 1
    %p83 = por %p81, %p82
    %p85 = scmp.ne.s32.totalorder %s70, %s84
    %p86 = scmp.eq.s32.totalorder %s18, 0
    %p87 = por %p85, %p86
    %s89 = sadd.s32 %s88, 1
    %p92 = scmp.eq.s32.totalorder %s12, 1
    %p93 = scmp.ne.s32.totalorder %s88, %s90
    %p94 = scmp.eq.s32.totalorder %s12, 0
    %p95 = por %p93, %p94
    %p96 = scmp.ne.s32.totalorder %s88, %s90
    %p97 = scmp.eq.s32.totalorder %s17, 1
    %p98 = por %p96, %p97
    %p99 = scmp.ne.s32.totalorder %s90, %s91
    %p100 = scmp.eq.s32.totalorder %s17, 0
    %p101 = por %p99, %p100
    %p102 = scmp.ne.s32.totalorder %s90, %s91
    %p103 = scmp.eq.s32.totalorder %s18, 1
    %p104 = por %p102, %p103
    %p106 = scmp.ne.s32.totalorder %s91, %s105
    %p107 = scmp.eq.s32.totalorder %s18, 0
    %p108 = por %p106, %p107
    %s109 = ssub.s32 %s12, %s19
    %p110 = scmp.eq.s32.totalorder %s109, 0
    %s112 = sadd.s32 %s111, 1
    %s113 = scalar_select %p110, %s111, %s112
    %p116 = pneg %p110
    %p117 = scmp.eq.s32.totalorder %s12, 1
    %p118 = por %p116, %p117
    %p119 = scmp.ne.s32.totalorder %s111, %s114
    %p120 = scmp.eq.s32.totalorder %s12, 0
    %p121 = por %p119, %p120
    %p122 = scmp.ne.s32.totalorder %s111, %s114
    %p123 = scmp.eq.s32.totalorder %s17, 1
    %p124 = por %p122, %p123
    %p125 = scmp.ne.s32.totalorder %s114, %s115
    %p126 = scmp.eq.s32.totalorder %s17, 0
    %p127 = por %p125, %p126
    %p128 = scmp.ne.s32.totalorder %s114, %s115
    %p129 = scmp.eq.s32.totalorder %s18, 1
    %p130 = por %p128, %p129
    %p132 = scmp.ne.s32.totalorder %s115, %s131
    %p133 = scmp.eq.s32.totalorder %s18, 0
    %p134 = por %p132, %p133
    %s135 = ssub.s32 %s12, %s19
    %p136 = scmp.eq.s32.totalorder %s135, 0
    %s138 = sadd.s32 %s137, 1
    %s139 = scalar_select %p136, %s137, %s138
    %p142 = pneg %p136
    %p143 = scmp.eq.s32.totalorder %s12, 1
    %p144 = por %p142, %p143
    %p145 = scmp.ne.s32.totalorder %s137, %s140
    %p146 = scmp.eq.s32.totalorder %s12, 0
    %p147 = por %p145, %p146
    %p148 = scmp.ne.s32.totalorder %s137, %s140
    %p149 = scmp.eq.s32.totalorder %s17, 1
    %p150 = por %p148, %p149
    %p151 = scmp.ne.s32.totalorder %s140, %s141
    %p152 = scmp.eq.s32.totalorder %s17, 0
    %p153 = por %p151, %p152
    %p154 = scmp.ne.s32.totalorder %s140, %s141
    %p155 = scmp.eq.s32.totalorder %s18, 1
    %p156 = por %p154, %p155
    %p158 = scmp.ne.s32.totalorder %s141, %s157
    %p159 = scmp.eq.s32.totalorder %s18, 0
    %p160 = por %p158, %p159
    %p161 = scmp.le.s32.totalorder 1, %s12
    %p162 = scmp.lt.s32.totalorder %s12, 3
    %p163 = pnand %p161, %p162
    %p164 = pneg %p163
    // Predicated region
    $region9: #{_lambda_.7} parent=5 // pred_check
      _
    $region10: #{_lambda_.7} parent=5 // pred_check_branch
      %166 = sbr.rel (%p163) target = $region12
    $region11: #{_lambda_.7} parent=5 // pred_region
      %s167 = ssub.s32 %s12, 1
      // Predicated region
      $region13: #{_lambda_.7} parent=11 // pred_check
        %p168 = pneg %p59
      $region14: #{_lambda_.7} parent=11 // pred_check_branch
        %170 = sbr.rel (%p168) target = $region16
      $region15: #{_lambda_.7} parent=11 // pred_region
        _
      $region16: #{_lambda_.7} parent=11 // pred_fallthru
        _
      // Predicated region
      $region17: #{_lambda_.7} parent=11 // pred_check
        %p171 = pneg %p80
      $region18: #{_lambda_.7} parent=11 // pred_check_branch
        %173 = sbr.rel (%p171) target = $region20
      $region19: #{_lambda_.7} parent=11 // pred_region
        _
      $region20: #{_lambda_.7} parent=11 // pred_fallthru
        _
      // Predicated region
      $region21: #{_lambda_.7} parent=11 // pred_check
        %p174 = pneg %p101
      $region22: #{_lambda_.7} parent=11 // pred_check_branch
        %176 = sbr.rel (%p174) target = $region24
      $region23: #{_lambda_.7} parent=11 // pred_region
        _
      $region24: #{_lambda_.7} parent=11 // pred_fallthru
        _
    $region12: #{_lambda_.7} parent=5 // pred_fallthru
      _
    %p177 = scmp.lt.s32.totalorder %s12, 2
    // Predicated region
    $region25: #{_lambda_.7} parent=5 // pred_check
      %p178 = pneg %p177
    $region26: #{_lambda_.7} parent=5 // pred_check_branch
      %180 = sbr.rel (%p178) target = $region28
    $region27: #{_lambda_.7} parent=5 // pred_region
      // Predicated region
      $region29: #{_lambda_.7} parent=27 // pred_check
        %p181 = pneg %p32
      $region30: #{_lambda_.7} parent=27 // pred_check_branch
        %183 = sbr.rel (%p181) target = $region32
      $region31: #{_lambda_.7} parent=27 // pred_region
        %p184 = scmp.lt.s32.totalorder %s12, 1
        %s185 = scalar_select %p184, %s12, 1
        %s186 = smul.addr %s185, 20
        %s187 = smul.addr %s186, 4
        %s188 = scalar_lea.vmem %s0, %s187
      $region32: #{_lambda_.7} parent=27 // pred_fallthru
        _
    $region28: #{_lambda_.7} parent=5 // pred_fallthru
      _
    %p189 = scmp.le.s32.totalorder 1, %s12
    %p190 = scmp.lt.s32.totalorder %s12, 3
    %p191 = pnand %p189, %p190
    %p192 = pneg %p191
    // Predicated region
    $region33: #{_lambda_.7} parent=5 // pred_check
      _
    $region34: #{_lambda_.7} parent=5 // pred_check_branch
      %194 = sbr.rel (%p191) target = $region36
    $region35: #{_lambda_.7} parent=5 // pred_region
      %s195 = ssub.s32 %s12, 1
      %p196 = scmp.lt.s32.totalorder %s17, 1
      %s197 = scalar_select %p196, %s17, 1
      %s198 = smul.addr %s197, 20
      %s199 = smul.addr %s198, 4
      %s200 = scalar_lea.vmem %s0, %s199
      %p201 = pneg %p38
      %p202 = pneg %p35
      %p203 = pneg %p59
      %p204 = pneg %p56
      %p205 = pneg %p80
      %p206 = pneg %p77
      %p207 = pneg %p101
      %p208 = pneg %p98
      %p209 = pneg %p127
      %p210 = pneg %p124
      %p211 = scmp.lt.s32.totalorder %s17, 1
      %s212 = scalar_select %p211, %s17, 1
      %s213 = smul.addr %s212, 8
      %s214 = smul.addr %s213, 4
      %s215 = scalar_lea.vmem %s4, %s214
      %p216 = pneg %p153
      %p217 = pneg %p150
      %p218 = scmp.lt.s32.totalorder %s17, 1
      %s219 = scalar_select %p218, %s17, 1
      %s220 = scalar_lea.vmem %s5, %s219
      %p221 = scmp.lt.s32.totalorder %s17, 1
      %s222 = scalar_select %p221, %s17, 1
      %s223 = smul.addr %s222, 20
      %s224 = smul.addr %s223, 4
      %s225 = scalar_lea.vmem %s0, %s224
      %p226 = scmp.lt.s32.totalorder %s17, 1
      %s227 = scalar_select %p226, %s17, 1
      %s228 = smul.addr %s227, 8
      %s229 = smul.addr %s228, 4
      %s230 = scalar_lea.vmem %s4, %s229
      %p231 = scmp.lt.s32.totalorder %s17, 1
      %s232 = scalar_select %p231, %s17, 1
      %s233 = scalar_lea.vmem %s5, %s232
      %v235 = vld [vmem:[%s225] sm:$0xf]
      %v236 = vld [vmem:[%s225 + $0x8] sm:$0xf]
      %v237 = vld [vmem:[%s225 + $0x10] sm:$0xf]
      %v238 = vld [vmem:[%s225 + $0x18] sm:$0xf]
      %v239 = vld [vmem:[%s225 + $0x20] sm:$0xf]
      %v240 = vld [vmem:[%s225 + $0x28] sm:$0xf]
      %v241 = vld [vmem:[%s225 + $0x30] sm:$0xf]
      %v242 = vld [vmem:[%s225 + $0x38] sm:$0xf]
      %v243 = vld [vmem:[%s225 + $0x4] sm:$0x1]
      %v244 = vld [vmem:[%s225 + $0xc] sm:$0x1]
      %v245 = vld [vmem:[%s225 + $0x14] sm:$0x1]
      %v246 = vld [vmem:[%s225 + $0x1c] sm:$0x1]
      %v247 = vld [vmem:[%s225 + $0x24] sm:$0x1]
      %v248 = vld [vmem:[%s225 + $0x2c] sm:$0x1]
      %v249 = vld [vmem:[%s225 + $0x34] sm:$0x1]
      %v250 = vld [vmem:[%s225 + $0x3c] sm:$0x1]
      %v251 = vld [vmem:[%s225] sm:$0xe]
      %v252 = vld [vmem:[%s225 + $0x8] sm:$0xe]
      %v253 = vld [vmem:[%s225 + $0x10] sm:$0xe]
      %v254 = vld [vmem:[%s225 + $0x18] sm:$0xe]
      %v255 = vld [vmem:[%s225 + $0x20] sm:$0xe]
      %v256 = vld [vmem:[%s225 + $0x28] sm:$0xe]
      %v257 = vld [vmem:[%s225 + $0x30] sm:$0xe]
      %v258 = vld [vmem:[%s225 + $0x38] sm:$0xe]
      %s259 = scalar_lea.vmem %s225, 8
      %v260 = vld [vmem:[%s259] sm:$0xf]
      %v261 = vld [vmem:[%s259 + $0x8] sm:$0xf]
      %v262 = vld [vmem:[%s259 + $0x10] sm:$0xf]
      %v263 = vld [vmem:[%s259 + $0x18] sm:$0xf]
      %v264 = vld [vmem:[%s259 + $0x20] sm:$0xf]
      %v265 = vld [vmem:[%s259 + $0x28] sm:$0xf]
      %v266 = vld [vmem:[%s259 + $0x30] sm:$0xf]
      %v267 = vld [vmem:[%s259 + $0x38] sm:$0xf]
      %v268 = vld [vmem:[%s259 + $0x4] sm:$0x1]
      %v269 = vld [vmem:[%s259 + $0xc] sm:$0x1]
      %v270 = vld [vmem:[%s259 + $0x14] sm:$0x1]
      %v271 = vld [vmem:[%s259 + $0x1c] sm:$0x1]
      %v272 = vld [vmem:[%s259 + $0x24] sm:$0x1]
      %v273 = vld [vmem:[%s259 + $0x2c] sm:$0x1]
      %v274 = vld [vmem:[%s259 + $0x34] sm:$0x1]
      %v275 = vld [vmem:[%s259 + $0x3c] sm:$0x1]
      %v276 = vld [vmem:[%s259] sm:$0xe]
      %v277 = vld [vmem:[%s259 + $0x8] sm:$0xe]
      %v278 = vld [vmem:[%s259 + $0x10] sm:$0xe]
      %v279 = vld [vmem:[%s259 + $0x18] sm:$0xe]
      %v280 = vld [vmem:[%s259 + $0x20] sm:$0xe]
      %v281 = vld [vmem:[%s259 + $0x28] sm:$0xe]
      %v282 = vld [vmem:[%s259 + $0x30] sm:$0xe]
      %v283 = vld [vmem:[%s259 + $0x38] sm:$0xe]
      %s284 = scalar_lea.vmem %s225, 16
      %v285 = vld [vmem:[%s284] sm:$0xf]
      %v286 = vld [vmem:[%s284 + $0x8] sm:$0xf]
      %v287 = vld [vmem:[%s284 + $0x10] sm:$0xf]
      %v288 = vld [vmem:[%s284 + $0x18] sm:$0xf]
      %v289 = vld [vmem:[%s284 + $0x20] sm:$0xf]
      %v290 = vld [vmem:[%s284 + $0x28] sm:$0xf]
      %v291 = vld [vmem:[%s284 + $0x30] sm:$0xf]
      %v292 = vld [vmem:[%s284 + $0x38] sm:$0xf]
      %v293 = vld [vmem:[%s284 + $0x4] sm:$0x1]
      %v294 = vld [vmem:[%s284 + $0xc] sm:$0x1]
      %v295 = vld [vmem:[%s284 + $0x14] sm:$0x1]
      %v296 = vld [vmem:[%s284 + $0x1c] sm:$0x1]
      %v297 = vld [vmem:[%s284 + $0x24] sm:$0x1]
      %v298 = vld [vmem:[%s284 + $0x2c] sm:$0x1]
      %v299 = vld [vmem:[%s284 + $0x34] sm:$0x1]
      %v300 = vld [vmem:[%s284 + $0x3c] sm:$0x1]
      %v301 = vld [vmem:[%s284] sm:$0xe]
      %v302 = vld [vmem:[%s284 + $0x8] sm:$0xe]
      %v303 = vld [vmem:[%s284 + $0x10] sm:$0xe]
      %v304 = vld [vmem:[%s284 + $0x18] sm:$0xe]
      %v305 = vld [vmem:[%s284 + $0x20] sm:$0xe]
      %v306 = vld [vmem:[%s284 + $0x28] sm:$0xe]
      %v307 = vld [vmem:[%s284 + $0x30] sm:$0xe]
      %v308 = vld [vmem:[%s284 + $0x38] sm:$0xe]
      %v325 = vunpack.c.l.b16 %v235
      %v326 = vunpack.c.l.b16 %v243
      %v327 = vunpack.c.l.b16 %v236
      %v328 = vunpack.c.l.b16 %v244
      %v329 = vunpack.c.l.b16 %v237
      %v330 = vunpack.c.l.b16 %v245
      %v331 = vunpack.c.l.b16 %v238
      %v332 = vunpack.c.l.b16 %v246
      %v333 = vunpack.c.l.b16 %v239
      %v334 = vunpack.c.l.b16 %v247
      %v335 = vunpack.c.l.b16 %v240
      %v336 = vunpack.c.l.b16 %v248
      %v337 = vunpack.c.l.b16 %v241
      %v338 = vunpack.c.l.b16 %v249
      %v339 = vunpack.c.l.b16 %v242
      %v340 = vunpack.c.l.b16 %v250
      %v341 = vpack.c.b16 %v326, %v325
      %v342 = vpack.c.b16 %v328, %v327
      %v343 = vpack.c.b16 %v330, %v329
      %v344 = vpack.c.b16 %v332, %v331
      %v345 = vpack.c.b16 %v334, %v333
      %v346 = vpack.c.b16 %v336, %v335
      %v347 = vpack.c.b16 %v338, %v337
      %v348 = vpack.c.b16 %v340, %v339
      %v350 = vshrl.u32 %v341, 16
      %v352 = vshll.u32 %v341, 16
      %v354 = vrot.slane %v352, 1
      %v355 = vor.u32 %v350, %v354
      %v357 = vshrl.u32 %v342, 16
      %v359 = vshll.u32 %v342, 16
      %v361 = vrot.slane %v359, 1
      %v362 = vor.u32 %v357, %v361
      %v364 = vshrl.u32 %v343, 16
      %v366 = vshll.u32 %v343, 16
      %v368 = vrot.slane %v366, 1
      %v369 = vor.u32 %v364, %v368
      %v371 = vshrl.u32 %v344, 16
      %v373 = vshll.u32 %v344, 16
      %v375 = vrot.slane %v373, 1
      %v376 = vor.u32 %v371, %v375
      %v378 = vshrl.u32 %v345, 16
      %v380 = vshll.u32 %v345, 16
      %v382 = vrot.slane %v380, 1
      %v383 = vor.u32 %v378, %v382
      %v385 = vshrl.u32 %v346, 16
      %v387 = vshll.u32 %v346, 16
      %v389 = vrot.slane %v387, 1
      %v390 = vor.u32 %v385, %v389
      %v392 = vshrl.u32 %v347, 16
      %v394 = vshll.u32 %v347, 16
      %v396 = vrot.slane %v394, 1
      %v397 = vor.u32 %v392, %v396
      %v399 = vshrl.u32 %v348, 16
      %v401 = vshll.u32 %v348, 16
      %v403 = vrot.slane %v401, 1
      %v404 = vor.u32 %v399, %v403
      %v413 = vunpack.c.l.b16 %v251
      %v414 = vunpack.c.l.b16 %v252
      %v415 = vunpack.c.l.b16 %v253
      %v416 = vunpack.c.l.b16 %v254
      %v417 = vunpack.c.l.b16 %v255
      %v418 = vunpack.c.l.b16 %v256
      %v419 = vunpack.c.l.b16 %v257
      %v420 = vunpack.c.l.b16 %v258
      %v421 = vpack.c.b16 %v326, %v413
      %v422 = vpack.c.b16 %v328, %v414
      %v423 = vpack.c.b16 %v330, %v415
      %v424 = vpack.c.b16 %v332, %v416
      %v425 = vpack.c.b16 %v334, %v417
      %v426 = vpack.c.b16 %v336, %v418
      %v427 = vpack.c.b16 %v338, %v419
      %v428 = vpack.c.b16 %v340, %v420
      %v429 = vrot.slane %v421, 1
      %v430 = vrot.slane %v422, 1
      %v431 = vrot.slane %v423, 1
      %v432 = vrot.slane %v424, 1
      %v433 = vrot.slane %v425, 1
      %v434 = vrot.slane %v426, 1
      %v435 = vrot.slane %v427, 1
      %v436 = vrot.slane %v428, 1
      %v453 = vunpack.c.l.b16 %v260
      %v454 = vunpack.c.l.b16 %v268
      %v455 = vunpack.c.l.b16 %v261
      %v456 = vunpack.c.l.b16 %v269
      %v457 = vunpack.c.l.b16 %v262
      %v458 = vunpack.c.l.b16 %v270
      %v459 = vunpack.c.l.b16 %v263
      %v460 = vunpack.c.l.b16 %v271
      %v461 = vunpack.c.l.b16 %v264
      %v462 = vunpack.c.l.b16 %v272
      %v463 = vunpack.c.l.b16 %v265
      %v464 = vunpack.c.l.b16 %v273
      %v465 = vunpack.c.l.b16 %v266
      %v466 = vunpack.c.l.b16 %v274
      %v467 = vunpack.c.l.b16 %v267
      %v468 = vunpack.c.l.b16 %v275
      %v469 = vpack.c.b16 %v454, %v453
      %v470 = vpack.c.b16 %v456, %v455
      %v471 = vpack.c.b16 %v458, %v457
      %v472 = vpack.c.b16 %v460, %v459
      %v473 = vpack.c.b16 %v462, %v461
      %v474 = vpack.c.b16 %v464, %v463
      %v475 = vpack.c.b16 %v466, %v465
      %v476 = vpack.c.b16 %v468, %v467
      %v478 = vshrl.u32 %v469, 16
      %v480 = vshll.u32 %v469, 16
      %v482 = vrot.slane %v480, 1
      %v483 = vor.u32 %v478, %v482
      %v485 = vshrl.u32 %v470, 16
      %v487 = vshll.u32 %v470, 16
      %v489 = vrot.slane %v487, 1
      %v490 = vor.u32 %v485, %v489
      %v492 = vshrl.u32 %v471, 16
      %v494 = vshll.u32 %v471, 16
      %v496 = vrot.slane %v494, 1
      %v497 = vor.u32 %v492, %v496
      %v499 = vshrl.u32 %v472, 16
      %v501 = vshll.u32 %v472, 16
      %v503 = vrot.slane %v501, 1
      %v504 = vor.u32 %v499, %v503
      %v506 = vshrl.u32 %v473, 16
      %v508 = vshll.u32 %v473, 16
      %v510 = vrot.slane %v508, 1
      %v511 = vor.u32 %v506, %v510
      %v513 = vshrl.u32 %v474, 16
      %v515 = vshll.u32 %v474, 16
      %v517 = vrot.slane %v515, 1
      %v518 = vor.u32 %v513, %v517
      %v520 = vshrl.u32 %v475, 16
      %v522 = vshll.u32 %v475, 16
      %v524 = vrot.slane %v522, 1
      %v525 = vor.u32 %v520, %v524
      %v527 = vshrl.u32 %v476, 16
      %v529 = vshll.u32 %v476, 16
      %v531 = vrot.slane %v529, 1
      %v532 = vor.u32 %v527, %v531
      %v541 = vunpack.c.l.b16 %v276
      %v542 = vunpack.c.l.b16 %v277
      %v543 = vunpack.c.l.b16 %v278
      %v544 = vunpack.c.l.b16 %v279
      %v545 = vunpack.c.l.b16 %v280
      %v546 = vunpack.c.l.b16 %v281
      %v547 = vunpack.c.l.b16 %v282
      %v548 = vunpack.c.l.b16 %v283
      %v549 = vpack.c.b16 %v454, %v541
      %v550 = vpack.c.b16 %v456, %v542
      %v551 = vpack.c.b16 %v458, %v543
      %v552 = vpack.c.b16 %v460, %v544
      %v553 = vpack.c.b16 %v462, %v545
      %v554 = vpack.c.b16 %v464, %v546
      %v555 = vpack.c.b16 %v466, %v547
      %v556 = vpack.c.b16 %v468, %v548
      %v557 = vrot.slane %v549, 1
      %v558 = vrot.slane %v550, 1
      %v559 = vrot.slane %v551, 1
      %v560 = vrot.slane %v552, 1
      %v561 = vrot.slane %v553, 1
      %v562 = vrot.slane %v554, 1
      %v563 = vrot.slane %v555, 1
      %v564 = vrot.slane %v556, 1
      %v581 = vunpack.c.l.b16 %v285
      %v582 = vunpack.c.l.b16 %v293
      %v583 = vunpack.c.l.b16 %v286
      %v584 = vunpack.c.l.b16 %v294
      %v585 = vunpack.c.l.b16 %v287
      %v586 = vunpack.c.l.b16 %v295
      %v587 = vunpack.c.l.b16 %v288
      %v588 = vunpack.c.l.b16 %v296
      %v589 = vunpack.c.l.b16 %v289
      %v590 = vunpack.c.l.b16 %v297
      %v591 = vunpack.c.l.b16 %v290
      %v592 = vunpack.c.l.b16 %v298
      %v593 = vunpack.c.l.b16 %v291
      %v594 = vunpack.c.l.b16 %v299
      %v595 = vunpack.c.l.b16 %v292
      %v596 = vunpack.c.l.b16 %v300
      %v597 = vpack.c.b16 %v582, %v581
      %v598 = vpack.c.b16 %v584, %v583
      %v599 = vpack.c.b16 %v586, %v585
      %v600 = vpack.c.b16 %v588, %v587
      %v601 = vpack.c.b16 %v590, %v589
      %v602 = vpack.c.b16 %v592, %v591
      %v603 = vpack.c.b16 %v594, %v593
      %v604 = vpack.c.b16 %v596, %v595
      %v606 = vshrl.u32 %v597, 16
      %v608 = vshll.u32 %v597, 16
      %v610 = vrot.slane %v608, 1
      %v611 = vor.u32 %v606, %v610
      %v613 = vshrl.u32 %v598, 16
      %v615 = vshll.u32 %v598, 16
      %v617 = vrot.slane %v615, 1
      %v618 = vor.u32 %v613, %v617
      %v620 = vshrl.u32 %v599, 16
      %v622 = vshll.u32 %v599, 16
      %v624 = vrot.slane %v622, 1
      %v625 = vor.u32 %v620, %v624
      %v627 = vshrl.u32 %v600, 16
      %v629 = vshll.u32 %v600, 16
      %v631 = vrot.slane %v629, 1
      %v632 = vor.u32 %v627, %v631
      %v634 = vshrl.u32 %v601, 16
      %v636 = vshll.u32 %v601, 16
      %v638 = vrot.slane %v636, 1
      %v639 = vor.u32 %v634, %v638
      %v641 = vshrl.u32 %v602, 16
      %v643 = vshll.u32 %v602, 16
      %v645 = vrot.slane %v643, 1
      %v646 = vor.u32 %v641, %v645
      %v648 = vshrl.u32 %v603, 16
      %v650 = vshll.u32 %v603, 16
      %v652 = vrot.slane %v650, 1
      %v653 = vor.u32 %v648, %v652
      %v655 = vshrl.u32 %v604, 16
      %v657 = vshll.u32 %v604, 16
      %v659 = vrot.slane %v657, 1
      %v660 = vor.u32 %v655, %v659
      %v669 = vunpack.c.l.b16 %v301
      %v670 = vunpack.c.l.b16 %v302
      %v671 = vunpack.c.l.b16 %v303
      %v672 = vunpack.c.l.b16 %v304
      %v673 = vunpack.c.l.b16 %v305
      %v674 = vunpack.c.l.b16 %v306
      %v675 = vunpack.c.l.b16 %v307
      %v676 = vunpack.c.l.b16 %v308
      %v677 = vpack.c.b16 %v582, %v669
      %v678 = vpack.c.b16 %v584, %v670
      %v679 = vpack.c.b16 %v586, %v671
      %v680 = vpack.c.b16 %v588, %v672
      %v681 = vpack.c.b16 %v590, %v673
      %v682 = vpack.c.b16 %v592, %v674
      %v683 = vpack.c.b16 %v594, %v675
      %v684 = vpack.c.b16 %v596, %v676
      %v685 = vrot.slane %v677, 1
      %v686 = vrot.slane %v678, 1
      %v687 = vrot.slane %v679, 1
      %v688 = vrot.slane %v680, 1
      %v689 = vrot.slane %v681, 1
      %v690 = vrot.slane %v682, 1
      %v691 = vrot.slane %v683, 1
      %v692 = vrot.slane %v684, 1
      %v693 = vunpack.c.l.b16 %v355
      %v694 = vunpack.c.l.b16 %v429
      %v695 = vunpack.c.l.b16 %v483
      %v696 = vunpack.c.l.b16 %v557
      %v697 = vunpack.c.l.b16 %v611
      %v698 = vunpack.c.l.b16 %v685
      %v699 = vunpack.c.l.b16 %v362
      %v700 = vunpack.c.l.b16 %v430
      %v701 = vunpack.c.l.b16 %v490
      %v702 = vunpack.c.l.b16 %v558
      %v703 = vunpack.c.l.b16 %v618
      %v704 = vunpack.c.l.b16 %v686
      %v705 = vunpack.c.l.b16 %v369
      %v706 = vunpack.c.l.b16 %v431
      %v707 = vunpack.c.l.b16 %v497
      %v708 = vunpack.c.l.b16 %v559
      %v709 = vunpack.c.l.b16 %v625
      %v710 = vunpack.c.l.b16 %v687
      %v711 = vunpack.c.l.b16 %v376
      %v712 = vunpack.c.l.b16 %v432
      %v713 = vunpack.c.l.b16 %v504
      %v714 = vunpack.c.l.b16 %v560
      %v715 = vunpack.c.l.b16 %v632
      %v716 = vunpack.c.l.b16 %v688
      %v717 = vunpack.c.l.b16 %v383
      %v718 = vunpack.c.l.b16 %v433
      %v719 = vunpack.c.l.b16 %v511
      %v720 = vunpack.c.l.b16 %v561
      %v721 = vunpack.c.l.b16 %v639
      %v722 = vunpack.c.l.b16 %v689
      %v723 = vunpack.c.l.b16 %v390
      %v724 = vunpack.c.l.b16 %v434
      %v725 = vunpack.c.l.b16 %v518
      %v726 = vunpack.c.l.b16 %v562
      %v727 = vunpack.c.l.b16 %v646
      %v728 = vunpack.c.l.b16 %v690
      %v729 = vunpack.c.l.b16 %v397
      %v730 = vunpack.c.l.b16 %v435
      %v731 = vunpack.c.l.b16 %v525
      %v732 = vunpack.c.l.b16 %v563
      %v733 = vunpack.c.l.b16 %v653
      %v734 = vunpack.c.l.b16 %v691
      %v735 = vunpack.c.l.b16 %v404
      %v736 = vunpack.c.l.b16 %v436
      %v737 = vunpack.c.l.b16 %v532
      %v738 = vunpack.c.l.b16 %v564
      %v739 = vunpack.c.l.b16 %v660
      %v740 = vunpack.c.l.b16 %v692
      %v741 = vld [vmem:[%s1] sm:$0xf]
      %v742 = vld [vmem:[%s1 + $0x4] sm:$0xf]
      %v743 = vld [vmem:[%s1 + $0x8] sm:$0xf]
      %v744 = vld [vmem:[%s1 + $0xc] sm:$0xf]
      %v745 = vld [vmem:[%s1 + $0x10] sm:$0xf]
      %v746 = vld [vmem:[%s1 + $0x14] sm:$0xf]
      %v747 = vld [vmem:[%s1 + $0x18] sm:$0xf]
      %v748 = vld [vmem:[%s1 + $0x1c] sm:$0xf]
      %v749 = vld [vmem:[%s1 + $0x20] sm:$0xf]
      %v750 = vld [vmem:[%s1 + $0x24] sm:$0xf]
      %v751 = vld [vmem:[%s1 + $0x28] sm:$0xf]
      %v752 = vld [vmem:[%s1 + $0x2c] sm:$0xf]
      %v753 = vld [vmem:[%s1 + $0x30] sm:$0xf]
      %v754 = vld [vmem:[%s1 + $0x34] sm:$0xf]
      %v755 = vld [vmem:[%s1 + $0x38] sm:$0xf]
      %v756 = vld [vmem:[%s1 + $0x3c] sm:$0xf]
      %v757 = vld [vmem:[%s1 + $0x40] sm:$0xf]
      %v758 = vld [vmem:[%s1 + $0x44] sm:$0xf]
      %v759 = vld [vmem:[%s1 + $0x48] sm:$0xf]
      %v760 = vld [vmem:[%s1 + $0x4c] sm:$0xf]
      %v761 = vld [vmem:[%s1 + $0x50] sm:$0xf]
      %v762 = vld [vmem:[%s1 + $0x54] sm:$0xf]
      %v763 = vld [vmem:[%s1 + $0x58] sm:$0xf]
      %v764 = vld [vmem:[%s1 + $0x5c] sm:$0xf]
      %v765 = vld [vmem:[%s1 + $0x60] sm:$0xf]
      %v766 = vld [vmem:[%s1 + $0x64] sm:$0xf]
      %v767 = vld [vmem:[%s1 + $0x68] sm:$0xf]
      %v768 = vld [vmem:[%s1 + $0x6c] sm:$0xf]
      %v769 = vld [vmem:[%s1 + $0x70] sm:$0xf]
      %v770 = vld [vmem:[%s1 + $0x74] sm:$0xf]
      %v771 = vld [vmem:[%s1 + $0x78] sm:$0xf]
      %v772 = vld [vmem:[%s1 + $0x7c] sm:$0xf]
      %v773 = vld [vmem:[%s1 + $0x80] sm:$0xf]
      %v774 = vld [vmem:[%s1 + $0x84] sm:$0xf]
      %v775 = vld [vmem:[%s1 + $0x88] sm:$0xf]
      %v776 = vld [vmem:[%s1 + $0x8c] sm:$0xf]
      %v777 = vld [vmem:[%s1 + $0x90] sm:$0xf]
      %v778 = vld [vmem:[%s1 + $0x94] sm:$0xf]
      %v779 = vld [vmem:[%s1 + $0x98] sm:$0xf]
      %v780 = vld [vmem:[%s1 + $0x9c] sm:$0xf]
      %v781 = vld [vmem:[%s1 + $0xa0] sm:$0xf]
      %v782 = vld [vmem:[%s1 + $0xa4] sm:$0xf]
      %v783 = vld [vmem:[%s1 + $0xa8] sm:$0xf]
      %v784 = vld [vmem:[%s1 + $0xac] sm:$0xf]
      %v785 = vld [vmem:[%s1 + $0xb0] sm:$0xf]
      %v786 = vld [vmem:[%s1 + $0xb4] sm:$0xf]
      %v787 = vld [vmem:[%s1 + $0xb8] sm:$0xf]
      %v788 = vld [vmem:[%s1 + $0xbc] sm:$0xf]
      %v789 = vld [vmem:[%s1 + $0xc0] sm:$0xf]
      %v790 = vld [vmem:[%s1 + $0xc4] sm:$0xf]
      %v791 = vld [vmem:[%s1 + $0xc8] sm:$0xf]
      %v792 = vld [vmem:[%s1 + $0xcc] sm:$0xf]
      %v793 = vld [vmem:[%s1 + $0xd0] sm:$0xf]
      %v794 = vld [vmem:[%s1 + $0xd4] sm:$0xf]
      %v795 = vld [vmem:[%s1 + $0xd8] sm:$0xf]
      %v796 = vld [vmem:[%s1 + $0xdc] sm:$0xf]
      %v797 = vld [vmem:[%s1 + $0xe0] sm:$0xf]
      %v798 = vld [vmem:[%s1 + $0xe4] sm:$0xf]
      %v799 = vld [vmem:[%s1 + $0xe8] sm:$0xf]
      %v800 = vld [vmem:[%s1 + $0xec] sm:$0xf]
      %v801 = vld [vmem:[%s1 + $0xf0] sm:$0xf]
      %v802 = vld [vmem:[%s1 + $0xf4] sm:$0xf]
      %v803 = vld [vmem:[%s1 + $0xf8] sm:$0xf]
      %v804 = vld [vmem:[%s1 + $0xfc] sm:$0xf]
      %v805 = vld [vmem:[%s1 + $0x100] sm:$0xf]
      %v806 = vld [vmem:[%s1 + $0x104] sm:$0xf]
      %v807 = vld [vmem:[%s1 + $0x108] sm:$0xf]
      %v808 = vld [vmem:[%s1 + $0x10c] sm:$0xf]
      %v809 = vld [vmem:[%s1 + $0x110] sm:$0xf]
      %v810 = vld [vmem:[%s1 + $0x114] sm:$0xf]
      %v811 = vld [vmem:[%s1 + $0x118] sm:$0xf]
      %v812 = vld [vmem:[%s1 + $0x11c] sm:$0xf]
      %v813 = vld [vmem:[%s1 + $0x120] sm:$0xf]
      %v814 = vld [vmem:[%s1 + $0x124] sm:$0xf]
      %v815 = vld [vmem:[%s1 + $0x128] sm:$0xf]
      %v816 = vld [vmem:[%s1 + $0x12c] sm:$0xf]
      %v817 = vld [vmem:[%s1 + $0x130] sm:$0xf]
      %v818 = vld [vmem:[%s1 + $0x134] sm:$0xf]
      %v819 = vld [vmem:[%s1 + $0x138] sm:$0xf]
      %v820 = vld [vmem:[%s1 + $0x13c] sm:$0xf]
      %v821 = vld [vmem:[%s1 + $0x140] sm:$0xf]
      %v822 = vld [vmem:[%s1 + $0x144] sm:$0xf]
      %v823 = vld [vmem:[%s1 + $0x148] sm:$0xf]
      %v824 = vld [vmem:[%s1 + $0x14c] sm:$0xf]
      %v825 = vld [vmem:[%s1 + $0x150] sm:$0xf]
      %v826 = vld [vmem:[%s1 + $0x154] sm:$0xf]
      %v827 = vld [vmem:[%s1 + $0x158] sm:$0xf]
      %v828 = vld [vmem:[%s1 + $0x15c] sm:$0xf]
      %v829 = vld [vmem:[%s1 + $0x160] sm:$0xf]
      %v830 = vld [vmem:[%s1 + $0x164] sm:$0xf]
      %v831 = vld [vmem:[%s1 + $0x168] sm:$0xf]
      %v832 = vld [vmem:[%s1 + $0x16c] sm:$0xf]
      %v833 = vld [vmem:[%s1 + $0x170] sm:$0xf]
      %v834 = vld [vmem:[%s1 + $0x174] sm:$0xf]
      %v835 = vld [vmem:[%s1 + $0x178] sm:$0xf]
      %v836 = vld [vmem:[%s1 + $0x17c] sm:$0xf]
      %v837 = vld [vmem:[%s1 + $0x180] sm:$0xf]
      %v838 = vld [vmem:[%s1 + $0x184] sm:$0xf]
      %v839 = vld [vmem:[%s1 + $0x188] sm:$0xf]
      %v840 = vld [vmem:[%s1 + $0x18c] sm:$0xf]
      %v841 = vld [vmem:[%s1 + $0x190] sm:$0xf]
      %v842 = vld [vmem:[%s1 + $0x194] sm:$0xf]
      %v843 = vld [vmem:[%s1 + $0x198] sm:$0xf]
      %v844 = vld [vmem:[%s1 + $0x19c] sm:$0xf]
      %v845 = vld [vmem:[%s1 + $0x1a0] sm:$0xf]
      %v846 = vld [vmem:[%s1 + $0x1a4] sm:$0xf]
      %v847 = vld [vmem:[%s1 + $0x1a8] sm:$0xf]
      %v848 = vld [vmem:[%s1 + $0x1ac] sm:$0xf]
      %v849 = vld [vmem:[%s1 + $0x1b0] sm:$0xf]
      %v850 = vld [vmem:[%s1 + $0x1b4] sm:$0xf]
      %v851 = vld [vmem:[%s1 + $0x1b8] sm:$0xf]
      %v852 = vld [vmem:[%s1 + $0x1bc] sm:$0xf]
      %v853 = vld [vmem:[%s1 + $0x1c0] sm:$0xf]
      %v854 = vld [vmem:[%s1 + $0x1c4] sm:$0xf]
      %v855 = vld [vmem:[%s1 + $0x1c8] sm:$0xf]
      %v856 = vld [vmem:[%s1 + $0x1cc] sm:$0xf]
      %v857 = vld [vmem:[%s1 + $0x1d0] sm:$0xf]
      %v858 = vld [vmem:[%s1 + $0x1d4] sm:$0xf]
      %v859 = vld [vmem:[%s1 + $0x1d8] sm:$0xf]
      %v860 = vld [vmem:[%s1 + $0x1dc] sm:$0xf]
      %v861 = vld [vmem:[%s1 + $0x1e0] sm:$0xf]
      %v862 = vld [vmem:[%s1 + $0x1e4] sm:$0xf]
      %v863 = vld [vmem:[%s1 + $0x1e8] sm:$0xf]
      %v864 = vld [vmem:[%s1 + $0x1ec] sm:$0xf]
      %v865 = vld [vmem:[%s1 + $0x1f0] sm:$0xf]
      %v866 = vld [vmem:[%s1 + $0x1f4] sm:$0xf]
      %v867 = vld [vmem:[%s1 + $0x1f8] sm:$0xf]
      %v868 = vld [vmem:[%s1 + $0x1fc] sm:$0xf]
      %v869 = vld [vmem:[%s1 + $0x200] sm:$0xf]
      %v870 = vld [vmem:[%s1 + $0x204] sm:$0xf]
      %v871 = vld [vmem:[%s1 + $0x208] sm:$0xf]
      %v872 = vld [vmem:[%s1 + $0x20c] sm:$0xf]
      %v873 = vld [vmem:[%s1 + $0x210] sm:$0xf]
      %v874 = vld [vmem:[%s1 + $0x214] sm:$0xf]
      %v875 = vld [vmem:[%s1 + $0x218] sm:$0xf]
      %v876 = vld [vmem:[%s1 + $0x21c] sm:$0xf]
      %v877 = vld [vmem:[%s1 + $0x220] sm:$0xf]
      %v878 = vld [vmem:[%s1 + $0x224] sm:$0xf]
      %v879 = vld [vmem:[%s1 + $0x228] sm:$0xf]
      %v880 = vld [vmem:[%s1 + $0x22c] sm:$0xf]
      %v881 = vld [vmem:[%s1 + $0x230] sm:$0xf]
      %v882 = vld [vmem:[%s1 + $0x234] sm:$0xf]
      %v883 = vld [vmem:[%s1 + $0x238] sm:$0xf]
      %v884 = vld [vmem:[%s1 + $0x23c] sm:$0xf]
      %v885 = vpack.c.b16 %v327, %v325
      %v886 = vpack.c.b16 %v699, %v693
      %v887 = vpack.c.b16 %v700, %v694
      %v888 = vpack.c.b16 %v455, %v453
      %v889 = vpack.c.b16 %v701, %v695
      %v890 = vpack.c.b16 %v702, %v696
      %v891 = vpack.c.b16 %v583, %v581
      %v892 = vpack.c.b16 %v703, %v697
      %v893 = vpack.c.b16 %v704, %v698
      %v894 = vpack.c.b16 %v331, %v329
      %v895 = vpack.c.b16 %v711, %v705
      %v896 = vpack.c.b16 %v712, %v706
      %v897 = vpack.c.b16 %v459, %v457
      %v898 = vpack.c.b16 %v713, %v707
      %v899 = vpack.c.b16 %v714, %v708
      %v900 = vpack.c.b16 %v587, %v585
      %v901 = vpack.c.b16 %v715, %v709
      %v902 = vpack.c.b16 %v716, %v710
      %v903 = vpack.c.b16 %v335, %v333
      %v904 = vpack.c.b16 %v723, %v717
      %v905 = vpack.c.b16 %v724, %v718
      %v906 = vpack.c.b16 %v463, %v461
      %v907 = vpack.c.b16 %v725, %v719
      %v908 = vpack.c.b16 %v726, %v720
      %v909 = vpack.c.b16 %v591, %v589
      %v910 = vpack.c.b16 %v727, %v721
      %v911 = vpack.c.b16 %v728, %v722
      %v912 = vpack.c.b16 %v339, %v337
      %v913 = vpack.c.b16 %v735, %v729
      %v914 = vpack.c.b16 %v736, %v730
      %v915 = vpack.c.b16 %v467, %v465
      %v916 = vpack.c.b16 %v737, %v731
      %v917 = vpack.c.b16 %v738, %v732
      %v918 = vpack.c.b16 %v595, %v593
      %v919 = vpack.c.b16 %v739, %v733
      %v920 = vpack.c.b16 %v740, %v734
      %v1101 = vunpack.c.l.b16 %v741
      %v1102 = vunpack.c.l.b16 %v742
      %v1103 = vunpack.c.l.b16 %v743
      %v1104 = vunpack.c.l.b16 %v744
      %v1105 = vunpack.c.l.b16 %v745
      %v1106 = vunpack.c.l.b16 %v746
      %v1107 = vunpack.c.l.b16 %v747
      %v1108 = vunpack.c.l.b16 %v748
      %v1109 = vunpack.c.l.b16 %v749
      %v1110 = vunpack.c.l.b16 %v750
      %v1111 = vunpack.c.l.b16 %v751
      %v1112 = vunpack.c.l.b16 %v752
      %v1113 = vunpack.c.l.b16 %v753
      %v1114 = vunpack.c.l.b16 %v754
      %v1115 = vunpack.c.l.b16 %v755
      %v1116 = vunpack.c.l.b16 %v756
      %v1117 = vunpack.c.l.b16 %v757
      %v1118 = vunpack.c.l.b16 %v758
      %v1119 = vunpack.c.l.b16 %v759
      %v1120 = vunpack.c.l.b16 %v760
      %v1121 = vunpack.c.l.b16 %v761
      %v1122 = vunpack.c.l.b16 %v762
      %v1123 = vunpack.c.l.b16 %v763
      %v1124 = vunpack.c.l.b16 %v764
      %v1125 = vunpack.c.l.b16 %v765
      %v1126 = vunpack.c.l.b16 %v766
      %v1127 = vunpack.c.l.b16 %v767
      %v1128 = vunpack.c.l.b16 %v768
      %v1129 = vunpack.c.l.b16 %v769
      %v1130 = vunpack.c.l.b16 %v770
      %v1131 = vunpack.c.l.b16 %v771
      %v1132 = vunpack.c.l.b16 %v772
      %v1133 = vunpack.c.l.b16 %v773
      %v1134 = vunpack.c.l.b16 %v774
      %v1135 = vunpack.c.l.b16 %v775
      %v1136 = vunpack.c.l.b16 %v776
      %v1137 = vunpack.c.l.b16 %v777
      %v1138 = vunpack.c.l.b16 %v778
      %v1139 = vunpack.c.l.b16 %v779
      %v1140 = vunpack.c.l.b16 %v780
      %v1141 = vunpack.c.l.b16 %v781
      %v1142 = vunpack.c.l.b16 %v782
      %v1143 = vunpack.c.l.b16 %v783
      %v1144 = vunpack.c.l.b16 %v784
      %v1145 = vunpack.c.l.b16 %v785
      %v1146 = vunpack.c.l.b16 %v786
      %v1147 = vunpack.c.l.b16 %v787
      %v1148 = vunpack.c.l.b16 %v788
      %v1149 = vunpack.c.l.b16 %v789
      %v1150 = vunpack.c.l.b16 %v790
      %v1151 = vunpack.c.l.b16 %v791
      %v1152 = vunpack.c.l.b16 %v792
      %v1153 = vunpack.c.l.b16 %v793
      %v1154 = vunpack.c.l.b16 %v794
      %v1155 = vunpack.c.l.b16 %v795
      %v1156 = vunpack.c.l.b16 %v796
      %v1157 = vunpack.c.l.b16 %v797
      %v1158 = vunpack.c.l.b16 %v798
      %v1159 = vunpack.c.l.b16 %v799
      %v1160 = vunpack.c.l.b16 %v800
      %v1161 = vunpack.c.l.b16 %v801
      %v1162 = vunpack.c.l.b16 %v802
      %v1163 = vunpack.c.l.b16 %v803
      %v1164 = vunpack.c.l.b16 %v804
      %v1165 = vunpack.c.l.b16 %v805
      %v1166 = vunpack.c.l.b16 %v806
      %v1167 = vunpack.c.l.b16 %v807
      %v1168 = vunpack.c.l.b16 %v808
      %v1169 = vunpack.c.l.b16 %v809
      %v1170 = vunpack.c.l.b16 %v810
      %v1171 = vunpack.c.l.b16 %v811
      %v1172 = vunpack.c.l.b16 %v812
      %v1173 = vunpack.c.l.b16 %v813
      %v1174 = vunpack.c.l.b16 %v814
      %v1175 = vunpack.c.l.b16 %v815
      %v1176 = vunpack.c.l.b16 %v816
      %v1177 = vunpack.c.l.b16 %v817
      %v1178 = vunpack.c.l.b16 %v818
      %v1179 = vunpack.c.l.b16 %v819
      %v1180 = vunpack.c.l.b16 %v820
      %v1181 = vunpack.c.l.b16 %v821
      %v1182 = vunpack.c.l.b16 %v822
      %v1183 = vunpack.c.l.b16 %v823
      %v1184 = vunpack.c.l.b16 %v824
      %v1185 = vunpack.c.l.b16 %v825
      %v1186 = vunpack.c.l.b16 %v826
      %v1187 = vunpack.c.l.b16 %v827
      %v1188 = vunpack.c.l.b16 %v828
      %v1189 = vunpack.c.l.b16 %v829
      %v1190 = vunpack.c.l.b16 %v830
      %v1191 = vunpack.c.l.b16 %v831
      %v1192 = vunpack.c.l.b16 %v832
      %v1193 = vunpack.c.l.b16 %v833
      %v1194 = vunpack.c.l.b16 %v834
      %v1195 = vunpack.c.l.b16 %v835
      %v1196 = vunpack.c.l.b16 %v836
      %v1197 = vunpack.c.l.b16 %v837
      %v1198 = vunpack.c.l.b16 %v838
      %v1199 = vunpack.c.l.b16 %v839
      %v1200 = vunpack.c.l.b16 %v840
      %v1201 = vunpack.c.l.b16 %v841
      %v1202 = vunpack.c.l.b16 %v842
      %v1203 = vunpack.c.l.b16 %v843
      %v1204 = vunpack.c.l.b16 %v844
      %v1205 = vunpack.c.l.b16 %v845
      %v1206 = vunpack.c.l.b16 %v846
      %v1207 = vunpack.c.l.b16 %v847
      %v1208 = vunpack.c.l.b16 %v848
      %v1209 = vunpack.c.l.b16 %v849
      %v1210 = vunpack.c.l.b16 %v850
      %v1211 = vunpack.c.l.b16 %v851
      %v1212 = vunpack.c.l.b16 %v852
      %v1213 = vunpack.c.l.b16 %v853
      %v1214 = vunpack.c.l.b16 %v854
      %v1215 = vunpack.c.l.b16 %v855
      %v1216 = vunpack.c.l.b16 %v856
      %v1217 = vunpack.c.l.b16 %v857
      %v1218 = vunpack.c.l.b16 %v858
      %v1219 = vunpack.c.l.b16 %v859
      %v1220 = vunpack.c.l.b16 %v860
      %v1221 = vunpack.c.l.b16 %v861
      %v1222 = vunpack.c.l.b16 %v862
      %v1223 = vunpack.c.l.b16 %v863
      %v1224 = vunpack.c.l.b16 %v864
      %v1225 = vunpack.c.l.b16 %v865
      %v1226 = vunpack.c.l.b16 %v866
      %v1227 = vunpack.c.l.b16 %v867
      %v1228 = vunpack.c.l.b16 %v868
      %v1229 = vunpack.c.l.b16 %v869
      %v1230 = vunpack.c.l.b16 %v870
      %v1231 = vunpack.c.l.b16 %v871
      %v1232 = vunpack.c.l.b16 %v872
      %v1233 = vunpack.c.l.b16 %v873
      %v1234 = vunpack.c.l.b16 %v874
      %v1235 = vunpack.c.l.b16 %v875
      %v1236 = vunpack.c.l.b16 %v876
      %v1237 = vunpack.c.l.b16 %v877
      %v1238 = vunpack.c.l.b16 %v878
      %v1239 = vunpack.c.l.b16 %v879
      %v1240 = vunpack.c.l.b16 %v880
      %v1241 = vunpack.c.l.b16 %v881
      %v1242 = vunpack.c.l.b16 %v882
      %v1243 = vunpack.c.l.b16 %v883
      %v1244 = vunpack.c.l.b16 %v884
      %v1245 = vpack.c.b16 %v1102, %v1101
      %v1246 = vpack.c.b16 %v1104, %v1103
      %v1247 = vpack.c.b16 %v1106, %v1105
      %v1248 = vpack.c.b16 %v1108, %v1107
      %v1249 = vpack.c.b16 %v1110, %v1109
      %v1250 = vpack.c.b16 %v1112, %v1111
      %v1251 = vpack.c.b16 %v1114, %v1113
      %v1252 = vpack.c.b16 %v1116, %v1115
      %v1253 = vpack.c.b16 %v1118, %v1117
      %v1254 = vpack.c.b16 %v1120, %v1119
      %v1255 = vpack.c.b16 %v1122, %v1121
      %v1256 = vpack.c.b16 %v1124, %v1123
      %v1257 = vpack.c.b16 %v1126, %v1125
      %v1258 = vpack.c.b16 %v1128, %v1127
      %v1259 = vpack.c.b16 %v1130, %v1129
      %v1260 = vpack.c.b16 %v1132, %v1131
      %v1261 = vpack.c.b16 %v1134, %v1133
      %v1262 = vpack.c.b16 %v1136, %v1135
      %v1263 = vpack.c.b16 %v1138, %v1137
      %v1264 = vpack.c.b16 %v1140, %v1139
      %v1265 = vpack.c.b16 %v1142, %v1141
      %v1266 = vpack.c.b16 %v1144, %v1143
      %v1267 = vpack.c.b16 %v1146, %v1145
      %v1268 = vpack.c.b16 %v1148, %v1147
      %v1269 = vpack.c.b16 %v1150, %v1149
      %v1270 = vpack.c.b16 %v1152, %v1151
      %v1271 = vpack.c.b16 %v1154, %v1153
      %v1272 = vpack.c.b16 %v1156, %v1155
      %v1273 = vpack.c.b16 %v1158, %v1157
      %v1274 = vpack.c.b16 %v1160, %v1159
      %v1275 = vpack.c.b16 %v1162, %v1161
      %v1276 = vpack.c.b16 %v1164, %v1163
      %v1277 = vpack.c.b16 %v1166, %v1165
      %v1278 = vpack.c.b16 %v1168, %v1167
      %v1279 = vpack.c.b16 %v1170, %v1169
      %v1280 = vpack.c.b16 %v1172, %v1171
      %v1281 = vpack.c.b16 %v1174, %v1173
      %v1282 = vpack.c.b16 %v1176, %v1175
      %v1283 = vpack.c.b16 %v1178, %v1177
      %v1284 = vpack.c.b16 %v1180, %v1179
      %v1285 = vpack.c.b16 %v1182, %v1181
      %v1286 = vpack.c.b16 %v1184, %v1183
      %v1287 = vpack.c.b16 %v1186, %v1185
      %v1288 = vpack.c.b16 %v1188, %v1187
      %v1289 = vpack.c.b16 %v1190, %v1189
      %v1290 = vpack.c.b16 %v1192, %v1191
      %v1291 = vpack.c.b16 %v1194, %v1193
      %v1292 = vpack.c.b16 %v1196, %v1195
      %v1293 = vpack.c.b16 %v1198, %v1197
      %v1294 = vpack.c.b16 %v1200, %v1199
      %v1295 = vpack.c.b16 %v1202, %v1201
      %v1296 = vpack.c.b16 %v1204, %v1203
      %v1297 = vpack.c.b16 %v1206, %v1205
      %v1298 = vpack.c.b16 %v1208, %v1207
      %v1299 = vpack.c.b16 %v1210, %v1209
      %v1300 = vpack.c.b16 %v1212, %v1211
      %v1301 = vpack.c.b16 %v1214, %v1213
      %v1302 = vpack.c.b16 %v1216, %v1215
      %v1303 = vpack.c.b16 %v1218, %v1217
      %v1304 = vpack.c.b16 %v1220, %v1219
      %v1305 = vpack.c.b16 %v1222, %v1221
      %v1306 = vpack.c.b16 %v1224, %v1223
      %v1307 = vpack.c.b16 %v1226, %v1225
      %v1308 = vpack.c.b16 %v1228, %v1227
      %v1309 = vpack.c.b16 %v1230, %v1229
      %v1310 = vpack.c.b16 %v1232, %v1231
      %v1311 = vpack.c.b16 %v1234, %v1233
      %v1312 = vpack.c.b16 %v1236, %v1235
      %v1313 = vpack.c.b16 %v1238, %v1237
      %v1314 = vpack.c.b16 %v1240, %v1239
      %v1315 = vpack.c.b16 %v1242, %v1241
      %v1316 = vpack.c.b16 %v1244, %v1243
      %1389 = vmatprep.subr.bf16.mxu0 0
      %1390 = vmatpush1.bf16.msra.mxu0 %v1245
      %1391 = vmatprep.subr.bf16.mxu0 0
      %1392 = vmatpush1.bf16.msra.mxu0 %v1246
      %1393 = vmatprep.subr.bf16.mxu0 0
      %1394 = vmatpush1.bf16.msra.mxu0 %v1247
      %1395 = vmatprep.subr.bf16.mxu0 0
      %1396 = vmatpush1.bf16.msra.mxu0 %v1248
      %1397 = vmatprep.subr.bf16.mxu0 0
      %1398 = vmatpush1.bf16.msra.mxu0 %v1249
      %1399 = vmatprep.subr.bf16.mxu0 0
      %1400 = vmatpush1.bf16.msra.mxu0 %v1250
      %1401 = vmatprep.subr.bf16.mxu0 0
      %1402 = vmatpush1.bf16.msra.mxu0 %v1251
      %1403 = vmatprep.subr.bf16.mxu0 0
      %1404 = vmatpush1.bf16.msra.mxu0 %v1252
      %1405 = vmatprep.subr.bf16.mxu0 0
      %1406 = vmatpush1.bf16.msra.mxu0 %v1253
      %1407 = vmatprep.subr.bf16.mxu0 0
      %1408 = vmatpush1.bf16.msra.mxu0 %v1254
      %1409 = vmatprep.subr.bf16.mxu0 0
      %1410 = vmatpush1.bf16.msra.mxu0 %v1255
      %1411 = vmatprep.subr.bf16.mxu0 0
      %1412 = vmatpush1.bf16.msra.mxu0 %v1256
      %1413 = vmatprep.subr.bf16.mxu0 0
      %1414 = vmatpush1.bf16.msra.mxu0 %v1257
      %1415 = vmatprep.subr.bf16.mxu0 0
      %1416 = vmatpush1.bf16.msra.mxu0 %v1258
      %1417 = vmatprep.subr.bf16.mxu0 0
      %1418 = vmatpush1.bf16.msra.mxu0 %v1259
      %1419 = vmatprep.subr.bf16.mxu0 0
      %1420 = vmatpush1.bf16.msra.mxu0 %v1260
      %1421 = vmatprep.mubr.bf16.mxu0 %v886
      %1422 = vmatmul.mubr.bf16.gmra.mrb[0].mxu0 %v885
      %v1423 = vpop.f32.mrb[0].mxu0
      %v1424 = vadd.f32 0.0, %v1423
      %v1425 = vpop.f32.mrb[0].mxu0
      %v1426 = vpop.f32.mrb[0].mxu0
      %v1427 = vadd.f32 0.0, %v1426
      %v1428 = vpop.f32.mrb[0].mxu0
      %1429 = vmatprep.mubr.bf16.mxu0 %v895
      %1430 = vmatmul.mubr.bf16.gmra.mrb[0].mxu0 %v894
      %v1431 = vpop.f32.mrb[0].mxu0
      %v1432 = vadd.f32 0.0, %v1431
      %v1433 = vpop.f32.mrb[0].mxu0
      %v1434 = vpop.f32.mrb[0].mxu0
      %v1435 = vadd.f32 0.0, %v1434
      %v1436 = vpop.f32.mrb[0].mxu0
      %1437 = vmatprep.mubr.bf16.mxu0 %v904
      %1438 = vmatmul.mubr.bf16.gmra.mrb[0].mxu0 %v903
      %v1439 = vpop.f32.mrb[0].mxu0
      %v1440 = vadd.f32 0.0, %v1439
      %v1441 = vpop.f32.mrb[0].mxu0
      %v1442 = vpop.f32.mrb[0].mxu0
      %v1443 = vadd.f32 0.0, %v1442
      %v1444 = vpop.f32.mrb[0].mxu0
      %1445 = vmatprep.mubr.bf16.mxu0 %v913
      %1446 = vmatmul.mubr.bf16.gmra.mrb[0].mxu0 %v912
      %v1447 = vpop.f32.mrb[0].mxu0
      %v1448 = vadd.f32 0.0, %v1447
      %v1449 = vpop.f32.mrb[0].mxu0
      %v1450 = vpop.f32.mrb[0].mxu0
      %v1451 = vadd.f32 0.0, %v1450
      %v1452 = vpop.f32.mrb[0].mxu0
      %1453 = vdwg.mxu0
      %1454 = vmatprep.subr.bf16.mxu0 0
      %1455 = vmatpush1.bf16.msra.mxu0 %v1261
      %1456 = vmatprep.subr.bf16.mxu0 0
      %1457 = vmatpush1.bf16.msra.mxu0 %v1262
      %1458 = vmatprep.subr.bf16.mxu0 0
      %1459 = vmatpush1.bf16.msra.mxu0 %v1263
      %1460 = vmatprep.subr.bf16.mxu0 0
      %1461 = vmatpush1.bf16.msra.mxu0 %v1264
      %1462 = vmatprep.subr.bf16.mxu0 0
      %1463 = vmatpush1.bf16.msra.mxu0 %v1265
      %1464 = vmatprep.subr.bf16.mxu0 0
      %1465 = vmatpush1.bf16.msra.mxu0 %v1266
      %1466 = vmatprep.subr.bf16.mxu0 0
      %1467 = vmatpush1.bf16.msra.mxu0 %v1267
      %1468 = vmatprep.subr.bf16.mxu0 0
      %1469 = vmatpush1.bf16.msra.mxu0 %v1268
      %1470 = vmatprep.subr.bf16.mxu0 0
      %1471 = vmatpush1.bf16.msra.mxu0 %v1269
      %1472 = vmatprep.subr.bf16.mxu0 0
      %1473 = vmatpush1.bf16.msra.mxu0 %v1270
      %1474 = vmatprep.subr.bf16.mxu0 0
      %1475 = vmatpush1.bf16.msra.mxu0 %v1271
      %1476 = vmatprep.subr.bf16.mxu0 0
      %1477 = vmatpush1.bf16.msra.mxu0 %v1272
      %1478 = vmatprep.subr.bf16.mxu0 0
      %1479 = vmatpush1.bf16.msra.mxu0 %v1273
      %1480 = vmatprep.subr.bf16.mxu0 0
      %1481 = vmatpush1.bf16.msra.mxu0 %v1274
      %1482 = vmatprep.subr.bf16.mxu0 0
      %1483 = vmatpush1.bf16.msra.mxu0 %v1275
      %1484 = vmatprep.subr.bf16.mxu0 0
      %1485 = vmatpush1.bf16.msra.mxu0 %v1276
      %1486 = vmatprep.mubr.bf16.mxu0 %v888
      %1487 = vmatmul.mubr.bf16.gmra.mrb[0].mxu0 %v887
      %v1488 = vpop.f32.mrb[0].mxu0
      %v1489 = vadd.f32 %v1424, %v1488
      %v1490 = vpop.f32.mrb[0].mxu0
      %v1491 = vpop.f32.mrb[0].mxu0
      %v1492 = vadd.f32 %v1427, %v1491
      %v1493 = vpop.f32.mrb[0].mxu0
      %1494 = vmatprep.mubr.bf16.mxu0 %v897
      %1495 = vmatmul.mubr.bf16.gmra.mrb[0].mxu0 %v896
      %v1496 = vpop.f32.mrb[0].mxu0
      %v1497 = vadd.f32 %v1432, %v1496
      %v1498 = vpop.f32.mrb[0].mxu0
      %v1499 = vpop.f32.mrb[0].mxu0
      %v1500 = vadd.f32 %v1435, %v1499
      %v1501 = vpop.f32.mrb[0].mxu0
      %1502 = vmatprep.mubr.bf16.mxu0 %v906
      %1503 = vmatmul.mubr.bf16.gmra.mrb[0].mxu0 %v905
      %v1504 = vpop.f32.mrb[0].mxu0
      %v1505 = vadd.f32 %v1440, %v1504
      %v1506 = vpop.f32.mrb[0].mxu0
      %v1507 = vpop.f32.mrb[0].mxu0
      %v1508 = vadd.f32 %v1443, %v1507
      %v1509 = vpop.f32.mrb[0].mxu0
      %1510 = vmatprep.mubr.bf16.mxu0 %v915
      %1511 = vmatmul.mubr.bf16.gmra.mrb[0].mxu0 %v914
      %v1512 = vpop.f32.mrb[0].mxu0
      %v1513 = vadd.f32 %v1448, %v1512
      %v1514 = vpop.f32.mrb[0].mxu0
      %v1515 = vpop.f32.mrb[0].mxu0
      %v1516 = vadd.f32 %v1451, %v1515
      %v1517 = vpop.f32.mrb[0].mxu0
      %1518 = vdwg.mxu0
      %1519 = vmatprep.subr.bf16.mxu0 0
      %1520 = vmatpush1.bf16.msra.mxu0 %v1277
      %1521 = vmatprep.subr.bf16.mxu0 0
      %1522 = vmatpush1.bf16.msra.mxu0 %v1278
      %1523 = vmatprep.subr.bf16.mxu0 0
      %1524 = vmatpush1.bf16.msra.mxu0 %v1279
      %1525 = vmatprep.subr.bf16.mxu0 0
      %1526 = vmatpush1.bf16.msra.mxu0 %v1280
      %1527 = vmatprep.subr.bf16.mxu0 0
      %1528 = vmatpush1.bf16.msra.mxu0 %v1281
      %1529 = vmatprep.subr.bf16.mxu0 0
      %1530 = vmatpush1.bf16.msra.mxu0 %v1282
      %1531 = vmatprep.subr.bf16.mxu0 0
      %1532 = vmatpush1.bf16.msra.mxu0 %v1283
      %1533 = vmatprep.subr.bf16.mxu0 0
      %1534 = vmatpush1.bf16.msra.mxu0 %v1284
      %1535 = vmatprep.subr.bf16.mxu0 0
      %1536 = vmatpush1.bf16.msra.mxu0 %v1285
      %1537 = vmatprep.subr.bf16.mxu0 0
      %1538 = vmatpush1.bf16.msra.mxu0 %v1286
      %1539 = vmatprep.subr.bf16.mxu0 0
      %1540 = vmatpush1.bf16.msra.mxu0 %v1287
      %1541 = vmatprep.subr.bf16.mxu0 0
      %1542 = vmatpush1.bf16.msra.mxu0 %v1288
      %1543 = vmatprep.subr.bf16.mxu0 0
      %1544 = vmatpush1.bf16.msra.mxu0 %v1289
      %1545 = vmatprep.subr.bf16.mxu0 0
      %1546 = vmatpush1.bf16.msra.mxu0 %v1290
      %1547 = vmatprep.subr.bf16.mxu0 0
      %1548 = vmatpush1.bf16.msra.mxu0 %v1291
      %1549 = vmatprep.subr.bf16.mxu0 0
      %1550 = vmatpush1.bf16.msra.mxu0 %v1292
      %1551 = vmatprep.mubr.bf16.mxu0 %v890
      %1552 = vmatmul.mubr.bf16.gmra.mrb[0].mxu0 %v889
      %v1553 = vpop.f32.mrb[0].mxu0
      %v1554 = vadd.f32 %v1489, %v1553
      %v1555 = vpop.f32.mrb[0].mxu0
      %v1556 = vpop.f32.mrb[0].mxu0
      %v1557 = vadd.f32 %v1492, %v1556
      %v1558 = vpop.f32.mrb[0].mxu0
      %1559 = vmatprep.mubr.bf16.mxu0 %v899
      %1560 = vmatmul.mubr.bf16.gmra.mrb[0].mxu0 %v898
      %v1561 = vpop.f32.mrb[0].mxu0
      %v1562 = vadd.f32 %v1497, %v1561
      %v1563 = vpop.f32.mrb[0].mxu0
      %v1564 = vpop.f32.mrb[0].mxu0
      %v1565 = vadd.f32 %v1500, %v1564
      %v1566 = vpop.f32.mrb[0].mxu0
      %1567 = vmatprep.mubr.bf16.mxu0 %v908
      %1568 = vmatmul.mubr.bf16.gmra.mrb[0].mxu0 %v907
      %v1569 = vpop.f32.mrb[0].mxu0
      %v1570 = vadd.f32 %v1505, %v1569
      %v1571 = vpop.f32.mrb[0].mxu0
      %v1572 = vpop.f32.mrb[0].mxu0
      %v1573 = vadd.f32 %v1508, %v1572
      %v1574 = vpop.f32.mrb[0].mxu0
      %1575 = vmatprep.mubr.bf16.mxu0 %v917
      %1576 = vmatmul.mubr.bf16.gmra.mrb[0].mxu0 %v916
      %v1577 = vpop.f32.mrb[0].mxu0
      %v1578 = vadd.f32 %v1513, %v1577
      %v1579 = vpop.f32.mrb[0].mxu0
      %v1580 = vpop.f32.mrb[0].mxu0
      %v1581 = vadd.f32 %v1516, %v1580
      %v1582 = vpop.f32.mrb[0].mxu0
      %1583 = vdwg.mxu0
      %1584 = vmatprep.subr.bf16.mxu0 0
      %1585 = vmatpush1.bf16.msra.mxu0 %v1293
      %1586 = vmatprep.subr.bf16.mxu0 0
      %1587 = vmatpush1.bf16.msra.mxu0 %v1294
      %1588 = vmatprep.subr.bf16.mxu0 0
      %1589 = vmatpush1.bf16.msra.mxu0 %v1295
      %1590 = vmatprep.subr.bf16.mxu0 0
      %1591 = vmatpush1.bf16.msra.mxu0 %v1296
      %1592 = vmatprep.subr.bf16.mxu0 0
      %1593 = vmatpush1.bf16.msra.mxu0 %v1297
      %1594 = vmatprep.subr.bf16.mxu0 0
      %1595 = vmatpush1.bf16.msra.mxu0 %v1298
      %1596 = vmatprep.subr.bf16.mxu0 0
      %1597 = vmatpush1.bf16.msra.mxu0 %v1299
      %1598 = vmatprep.subr.bf16.mxu0 0
      %1599 = vmatpush1.bf16.msra.mxu0 %v1300
      %1600 = vmatprep.subr.bf16.mxu0 0
      %1601 = vmatpush1.bf16.msra.mxu0 %v1301
      %1602 = vmatprep.subr.bf16.mxu0 0
      %1603 = vmatpush1.bf16.msra.mxu0 %v1302
      %1604 = vmatprep.subr.bf16.mxu0 0
      %1605 = vmatpush1.bf16.msra.mxu0 %v1303
      %1606 = vmatprep.subr.bf16.mxu0 0
      %1607 = vmatpush1.bf16.msra.mxu0 %v1304
      %1608 = vmatprep.subr.bf16.mxu0 0
      %1609 = vmatpush1.bf16.msra.mxu0 %v1305
      %1610 = vmatprep.subr.bf16.mxu0 0
      %1611 = vmatpush1.bf16.msra.mxu0 %v1306
      %1612 = vmatprep.subr.bf16.mxu0 0
      %1613 = vmatpush1.bf16.msra.mxu0 %v1307
      %1614 = vmatprep.subr.bf16.mxu0 0
      %1615 = vmatpush1.bf16.msra.mxu0 %v1308
      %1616 = vmatprep.mubr.bf16.mxu0 %v892
      %1617 = vmatmul.mubr.bf16.gmra.mrb[0].mxu0 %v891
      %v1618 = vpop.f32.mrb[0].mxu0
      %v1619 = vadd.f32 %v1554, %v1618
      %v1620 = vpop.f32.mrb[0].mxu0
      %v1621 = vpop.f32.mrb[0].mxu0
      %v1622 = vadd.f32 %v1557, %v1621
      %v1623 = vpop.f32.mrb[0].mxu0
      %1624 = vmatprep.mubr.bf16.mxu0 %v901
      %1625 = vmatmul.mubr.bf16.gmra.mrb[0].mxu0 %v900
      %v1626 = vpop.f32.mrb[0].mxu0
      %v1627 = vadd.f32 %v1562, %v1626
      %v1628 = vpop.f32.mrb[0].mxu0
      %v1629 = vpop.f32.mrb[0].mxu0
      %v1630 = vadd.f32 %v1565, %v1629
      %v1631 = vpop.f32.mrb[0].mxu0
      %1632 = vmatprep.mubr.bf16.mxu0 %v910
      %1633 = vmatmul.mubr.bf16.gmra.mrb[0].mxu0 %v909
      %v1634 = vpop.f32.mrb[0].mxu0
      %v1635 = vadd.f32 %v1570, %v1634
      %v1636 = vpop.f32.mrb[0].mxu0
      %v1637 = vpop.f32.mrb[0].mxu0
      %v1638 = vadd.f32 %v1573, %v1637
      %v1639 = vpop.f32.mrb[0].mxu0
      %1640 = vmatprep.mubr.bf16.mxu0 %v919
      %1641 = vmatmul.mubr.bf16.gmra.mrb[0].mxu0 %v918
      %v1642 = vpop.f32.mrb[0].mxu0
      %v1643 = vadd.f32 %v1578, %v1642
      %v1644 = vpop.f32.mrb[0].mxu0
      %v1645 = vpop.f32.mrb[0].mxu0
      %v1646 = vadd.f32 %v1581, %v1645
      %v1647 = vpop.f32.mrb[0].mxu0
      %1648 = vdwg.mxu0
      %1649 = vmatprep.subr.bf16.mxu0 0
      %1650 = vmatpush1.bf16.msra.mxu0 %v1309
      %1651 = vmatprep.subr.bf16.mxu0 0
      %1652 = vmatpush1.bf16.msra.mxu0 %v1310
      %1653 = vmatprep.subr.bf16.mxu0 0
      %1654 = vmatpush1.bf16.msra.mxu0 %v1311
      %1655 = vmatprep.subr.bf16.mxu0 0
      %1656 = vmatpush1.bf16.msra.mxu0 %v1312
      %1657 = vmatprep.subr.bf16.mxu0 0
      %1658 = vmatpush1.bf16.msra.mxu0 %v1313
      %1659 = vmatprep.subr.bf16.mxu0 0
      %1660 = vmatpush1.bf16.msra.mxu0 %v1314
      %1661 = vmatprep.subr.bf16.mxu0 0
      %1662 = vmatpush1.bf16.msra.mxu0 %v1315
      %1663 = vmatprep.subr.bf16.mxu0 0
      %1664 = vmatpush1.bf16.msra.mxu0 %v1316
      %1665 = vmatprep.subr.bf16.mxu0 0
      %1666 = vmatpush1.bf16.msra.mxu0 0
      %1667 = vmatprep.subr.bf16.mxu0 0
      %1668 = vmatpush1.bf16.msra.mxu0 0
      %1669 = vmatprep.subr.bf16.mxu0 0
      %1670 = vmatpush1.bf16.msra.mxu0 0
      %1671 = vmatprep.subr.bf16.mxu0 0
      %1672 = vmatpush1.bf16.msra.mxu0 0
      %1673 = vmatprep.subr.bf16.mxu0 0
      %1674 = vmatpush1.bf16.msra.mxu0 0
      %1675 = vmatprep.subr.bf16.mxu0 0
      %1676 = vmatpush1.bf16.msra.mxu0 0
      %1677 = vmatprep.subr.bf16.mxu0 0
      %1678 = vmatpush1.bf16.msra.mxu0 0
      %1679 = vmatprep.subr.bf16.mxu0 0
      %1680 = vmatpush1.bf16.msra.mxu0 0
      %1681 = vmatprep.mubr.bf16.mxu0 0
      %1682 = vmatmul.mubr.bf16.gmra.mrb[0].mxu0 %v893
      %v1683 = vpop.f32.mrb[0].mxu0
      %v1684 = vadd.f32 %v1619, %v1683
      %v1685 = vpop.f32.mrb[0].mxu0
      %v1686 = vpop.f32.mrb[0].mxu0
      %v1687 = vadd.f32 %v1622, %v1686
      %v1688 = vpop.f32.mrb[0].mxu0
      %1689 = vmatprep.mubr.bf16.mxu0 0
      %1690 = vmatmul.mubr.bf16.gmra.mrb[0].mxu0 %v902
      %v1691 = vpop.f32.mrb[0].mxu0
      %v1692 = vadd.f32 %v1627, %v1691
      %v1693 = vpop.f32.mrb[0].mxu0
      %v1694 = vpop.f32.mrb[0].mxu0
      %v1695 = vadd.f32 %v1630, %v1694
      %v1696 = vpop.f32.mrb[0].mxu0
      %1697 = vmatprep.mubr.bf16.mxu0 0
      %1698 = vmatmul.mubr.bf16.gmra.mrb[0].mxu0 %v911
      %v1699 = vpop.f32.mrb[0].mxu0
      %v1700 = vadd.f32 %v1635, %v1699
      %v1701 = vpop.f32.mrb[0].mxu0
      %v1702 = vpop.f32.mrb[0].mxu0
      %v1703 = vadd.f32 %v1638, %v1702
      %v1704 = vpop.f32.mrb[0].mxu0
      %1705 = vmatprep.mubr.bf16.mxu0 0
      %1706 = vmatmul.mubr.bf16.gmra.mrb[0].mxu0 %v920
      %v1707 = vpop.f32.mrb[0].mxu0
      %v1708 = vadd.f32 %v1643, %v1707
      %v1709 = vpop.f32.mrb[0].mxu0
      %v1710 = vpop.f32.mrb[0].mxu0
      %v1711 = vadd.f32 %v1646, %v1710
      %v1712 = vpop.f32.mrb[0].mxu0
      %1713 = vdwg.mxu0
      %v1714 = vld [vmem:[%s2] sm:$0x1]
      %v1716 = vlaneseq
      %v1717 = vshrl.u32 %v1716, 7
      %v1718 = vsub.s32 0, %v1717
      %v1719 = vrot.slane %v1714, %v1718
      %v1721 = vmul.f32 %v1684, %v1719
      %v1722 = vmul.f32 %v1687, %v1719
      %v1723 = vmul.f32 %v1692, %v1719
      %v1724 = vmul.f32 %v1695, %v1719
      %v1725 = vmul.f32 %v1700, %v1719
      %v1726 = vmul.f32 %v1703, %v1719
      %v1727 = vmul.f32 %v1708, %v1719
      %v1728 = vmul.f32 %v1711, %v1719
      %v1729 = vld [vmem:[%s3] sm:$0x1]
      %v1731 = vlaneseq
      %v1732 = vshrl.u32 %v1731, 7
      %v1733 = vsub.s32 0, %v1732
      %v1734 = vrot.slane %v1729, %v1733
      %v1736 = vadd.f32 %v1721, %v1734
      %v1737 = vadd.f32 %v1722, %v1734
      %v1738 = vadd.f32 %v1723, %v1734
      %v1739 = vadd.f32 %v1724, %v1734
      %v1740 = vadd.f32 %v1725, %v1734
      %v1741 = vadd.f32 %v1726, %v1734
      %v1742 = vadd.f32 %v1727, %v1734
      %v1743 = vadd.f32 %v1728, %v1734
      %v1744 = vxor.u32 %v1736, 2147483648
      %v1745 = vxor.u32 %v1737, 2147483648
      %v1746 = vxor.u32 %v1738, 2147483648
      %v1747 = vxor.u32 %v1739, 2147483648
      %v1748 = vxor.u32 %v1740, 2147483648
      %v1749 = vxor.u32 %v1741, 2147483648
      %v1750 = vxor.u32 %v1742, 2147483648
      %v1751 = vxor.u32 %v1743, 2147483648
      %v1752 = vmul.f32 %v1744, 1.442695
      %v1753 = vpow.pop %v1752
      %v1754 = vmul.f32 %v1745, 1.442695
      %v1755 = vpow.pop %v1754
      %v1756 = vmul.f32 %v1746, 1.442695
      %v1757 = vpow.pop %v1756
      %v1758 = vmul.f32 %v1747, 1.442695
      %v1759 = vpow.pop %v1758
      %v1760 = vmul.f32 %v1748, 1.442695
      %v1761 = vpow.pop %v1760
      %v1762 = vmul.f32 %v1749, 1.442695
      %v1763 = vpow.pop %v1762
      %v1764 = vmul.f32 %v1750, 1.442695
      %v1765 = vpow.pop %v1764
      %v1766 = vmul.f32 %v1751, 1.442695
      %v1767 = vpow.pop %v1766
      %v1768 = vadd.f32 %v1753, 1.0
      %v1769 = vadd.f32 %v1755, 1.0
      %v1770 = vadd.f32 %v1757, 1.0
      %v1771 = vadd.f32 %v1759, 1.0
      %v1772 = vadd.f32 %v1761, 1.0
      %v1773 = vadd.f32 %v1763, 1.0
      %v1774 = vadd.f32 %v1765, 1.0
      %v1775 = vadd.f32 %v1767, 1.0
      %v1776 = vrcp.pop %v1768
      %v1777 = vmul.f32 1.0, %v1776
      %v1778 = vrcp.pop %v1769
      %v1779 = vmul.f32 1.0, %v1778
      %v1780 = vrcp.pop %v1770
      %v1781 = vmul.f32 1.0, %v1780
      %v1782 = vrcp.pop %v1771
      %v1783 = vmul.f32 1.0, %v1782
      %v1784 = vrcp.pop %v1772
      %v1785 = vmul.f32 1.0, %v1784
      %v1786 = vrcp.pop %v1773
      %v1787 = vmul.f32 1.0, %v1786
      %v1788 = vrcp.pop %v1774
      %v1789 = vmul.f32 1.0, %v1788
      %v1790 = vrcp.pop %v1775
      %v1791 = vmul.f32 1.0, %v1790
      %v1792 = vmul.f32 %v1736, %v1777
      %v1793 = vmul.f32 %v1737, %v1779
      %v1794 = vmul.f32 %v1738, %v1781
      %v1795 = vmul.f32 %v1739, %v1783
      %v1796 = vmul.f32 %v1740, %v1785
      %v1797 = vmul.f32 %v1741, %v1787
      %v1798 = vmul.f32 %v1742, %v1789
      %v1799 = vmul.f32 %v1743, %v1791
      %v1800 = vadd.f32 %v1792, %v1793
      %v1801 = vadd.f32 %v1800, %v1794
      %v1802 = vadd.f32 %v1801, %v1795
      %v1803 = vadd.f32 %v1802, %v1796
      %v1804 = vadd.f32 %v1803, %v1797
      %v1805 = vadd.f32 %v1804, %v1798
      %v1806 = vadd.f32 %v1805, %v1799
      %v1807 = vrot.slane %v1806, 4
      %v1808 = vadd.f32 %v1806, %v1807
      %v1809 = vrot.slane %v1808, 2
      %v1810 = vadd.f32 %v1808, %v1809
      %v1811 = vrot.slane %v1810, 1
      %v1812 = vadd.f32 %v1810, %v1811
      %v1813 = vadd.f32 %v1812, 0.0
      %v1814 = vpack.c.bf16 %v1793, %v1792
      %v1815 = vpack.c.bf16 %v1795, %v1794
      %v1816 = vpack.c.bf16 %v1797, %v1796
      %v1817 = vpack.c.bf16 %v1799, %v1798
      %v1822 = vunpack.c.l.b16 %v1814
      %v1823 = vunpack.c.h.b16 %v1814
      %v1824 = vunpack.c.l.b16 %v1815
      %v1825 = vunpack.c.h.b16 %v1815
      %v1826 = vunpack.c.l.b16 %v1816
      %v1827 = vunpack.c.h.b16 %v1816
      %v1828 = vunpack.c.l.b16 %v1817
      %v1829 = vunpack.c.h.b16 %v1817
      %v1830 = vpack.c.b16 %v1822, %v1822
      %v1831 = vpack.c.b16 %v1823, %v1823
      %v1832 = vpack.c.b16 %v1824, %v1824
      %v1833 = vpack.c.b16 %v1825, %v1825
      %v1834 = vpack.c.b16 %v1826, %v1826
      %v1835 = vpack.c.b16 %v1827, %v1827
      %v1836 = vpack.c.b16 %v1828, %v1828
      %v1837 = vpack.c.b16 %v1829, %v1829
      %1846 = vst [vmem:[%s230] sm:$0xf] %v1830
      %1847 = vst [vmem:[%s230 + $0x4] sm:$0xf] %v1831
      %1848 = vst [vmem:[%s230 + $0x8] sm:$0xf] %v1832
      %1849 = vst [vmem:[%s230 + $0xc] sm:$0xf] %v1833
      %1850 = vst [vmem:[%s230 + $0x10] sm:$0xf] %v1834
      %1851 = vst [vmem:[%s230 + $0x14] sm:$0xf] %v1835
      %1852 = vst [vmem:[%s230 + $0x18] sm:$0xf] %v1836
      %1853 = vst [vmem:[%s230 + $0x1c] sm:$0xf] %v1837
      %1854 = vst [vmem:[%s233] sm:$0x1] %v1813
      %p1855 = scmp.lt.s32.totalorder %s17, 1
      %s1856 = scalar_select %p1855, %s17, 1
      %s1857 = smul.addr %s1856, 8
      %s1858 = smul.addr %s1857, 4
      %s1859 = scalar_lea.vmem %s4, %s1858
      %p1860 = scmp.lt.s32.totalorder %s17, 1
      %s1861 = scalar_select %p1860, %s17, 1
      %s1862 = scalar_lea.vmem %s5, %s1861
      // Predicated region
      $region37: #{_lambda_.7} parent=35 // pred_check
        %p1863 = pneg %p124
      $region38: #{_lambda_.7} parent=35 // pred_check_branch
        %1865 = sbr.rel (%p1863) target = $region40
      $region39: #{_lambda_.7} parent=35 // pred_region
        _
      $region40: #{_lambda_.7} parent=35 // pred_fallthru
        _
      // Predicated region
      $region41: #{_lambda_.7} parent=35 // pred_check
        %p1866 = pneg %p150
      $region42: #{_lambda_.7} parent=35 // pred_check_branch
        %1868 = sbr.rel (%p1866) target = $region44
      $region43: #{_lambda_.7} parent=35 // pred_region
        _
      $region44: #{_lambda_.7} parent=35 // pred_fallthru
        _
    $region36: #{_lambda_.7} parent=5 // pred_fallthru
      _
    %p1869 = scmp.le.s32.totalorder 2, %s12
    // Predicated region
    $region45: #{_lambda_.7} parent=5 // pred_check
      %p1870 = pneg %p1869
    $region46: #{_lambda_.7} parent=5 // pred_check_branch
      %1872 = sbr.rel (%p1870) target = $region48
    $region47: #{_lambda_.7} parent=5 // pred_region
      %s1873 = ssub.s32 %s12, 2
      // Predicated region
      $region49: #{_lambda_.7} parent=47 // pred_check
        %p1874 = pneg %p130
      $region50: #{_lambda_.7} parent=47 // pred_check_branch
        %1876 = sbr.rel (%p1874) target = $region52
      $region51: #{_lambda_.7} parent=47 // pred_region
        %p1877 = scmp.lt.s32.totalorder %s18, 1
        %s1878 = scalar_select %p1877, %s18, 1
        %s1879 = smul.addr %s1878, 8
        %s1880 = smul.addr %s1879, 4
        %s1881 = scalar_lea.vmem %s4, %s1880
      $region52: #{_lambda_.7} parent=47 // pred_fallthru
        _
      // Predicated region
      $region53: #{_lambda_.7} parent=47 // pred_check
        %p1882 = pneg %p156
      $region54: #{_lambda_.7} parent=47 // pred_check_branch
        %1884 = sbr.rel (%p1882) target = $region56
      $region55: #{_lambda_.7} parent=47 // pred_region
        %p1885 = scmp.lt.s32.totalorder %s18, 1
        %s1886 = scalar_select %p1885, %s18, 1
        %s1887 = scalar_lea.vmem %s5, %s1886
      $region56: #{_lambda_.7} parent=47 // pred_fallthru
        _
    $region48: #{_lambda_.7} parent=5 // pred_fallthru
      _
  $region6: #{_lambda_.7} parent=0 // loop_footer
    %s16 = sadd.s32 1, %s12
  $region7: #{_lambda_.7} parent=0 // loop_footer_branch
    %11 = sbr.rel target = $region3
  $region8: #{_lambda_.7} parent=0 // loop_exit
    _

// kernel: _lambda_.6
$region0: #{_lambda_.6}
  #allocation0 [shape = 'u32[]', space=smem, size = 0x4, offset = 0x4, fixed_abs, tag = 'smem constant byte address 0x4 - core index']
  #allocation1 [shape = 'u32[144,128]{1,0:T(1,128)}', space=vmem, size = 0x12000, scoped, tag = 'internal scratch']
  %s0 = inlined_call_operand.vmem [shape: bf16[2,10,10,128], index: 0, kind: input, shape index: {}]
  %s1 = inlined_call_operand.vmem [shape: bf16[1152,128], index: 1, kind: input, shape index: {}]
  %s2 = inlined_call_operand.vmem [shape: f32[1,128], index: 2, kind: input, shape index: {}]
  %s3 = inlined_call_operand.vmem [shape: f32[1,128], index: 3, kind: input, shape index: {}]
  %s4 = inlined_call_operand.vmem [shape: bf16[2,64,128], index: 4, kind: output, shape index: {0}]
  %s5 = inlined_call_operand.hbm [shape: f32[2,1,128], index: 5, kind: output, shape index: {1}]
  %6 = xla_tuple %s4, %s5
  %s7 = sld [smem:[#allocation0]]
  $region57: #{_lambda_.6} parent=0
    _
  %s9 = ssub.s32 1, %s7
  %s10 = scalar_select 0, %s9, %s7
  $region1: #{_lambda_.6} parent=0
    #allocation2 [shape = 'u8[1024]{0}', space=vmem, size = 0x400, scoped, tag = 'output window, operand 1']
    #allocation3 [shape = 's32[2]{0}', space=sflag, size = 0x8, scoped, tag = 'scoped memory for _lambda_.6']
    %11 = vsyncpa [#allocation3], 0
    %s12 = scalar_lea.sflag [#allocation3], 1
    %13 = vsyncpa %s12, 0
    loop: start=0, step=1, limit=4
    $region2: #{_lambda_.6} parent=1 // loop_pre_header
      _
    $region3: #{_lambda_.6} parent=1 // loop_header
      %s15 = sphi 0, %s19
      %p16 = scmp.ge.s32.totalorder %s15, 4
      %s25 = sphi 0, %s27
      %s28 = sphi 0, %s25
      %s29 = sphi 0, %s28
      %s45 = sphi 0, %s29
      %s49 = sphi 0, %s49
      %s51 = sphi 0, %s49
      %s52 = sphi 0, %s51
      %s66 = sphi 0, %s52
      %s70 = sphi 0, %s70
      %s72 = sphi 0, %s70
      %s73 = sphi 0, %s72
      %s87 = sphi 0, %s73
      %s91 = sphi 0, %s91
      %s93 = sphi 0, %s91
      %s94 = sphi 0, %s93
      %s108 = sphi 0, %s94
      %s114 = sphi 0, %s116
      %s117 = sphi 0, %s114
      %s118 = sphi 0, %s117
      %s134 = sphi 0, %s118
      %s140 = sphi 0, %s142
      %s143 = sphi 0, %s140
      %s144 = sphi 0, %s143
      %s160 = sphi 0, %s144
    $region4: #{_lambda_.6} parent=1 // loop_header_branch
      %18 = sbr.rel (%p16) target = $region8
    $region5: #{_lambda_.6} parent=1 // loop_body
      %s20 = ssub.s32 %s15, 1
      %s21 = ssub.s32 %s15, 2
      %s22 = sadd.s32 %s15, 1
      %s23 = ssub.s32 %s15, %s22
      %p24 = scmp.eq.s32.totalorder %s23, 0
      %s26 = sadd.s32 %s25, 1
      %s27 = scalar_select %p24, %s25, %s26
      %p30 = pneg %p24
      %p31 = scmp.eq.s32.totalorder %s15, 1
      %p32 = por %p30, %p31
      %p33 = scmp.ne.s32.totalorder %s25, %s28
      %p34 = scmp.eq.s32.totalorder %s15, 0
      %p35 = por %p33, %p34
      %p36 = scmp.ne.s32.totalorder %s25, %s28
      %p37 = scmp.eq.s32.totalorder %s20, 1
      %p38 = por %p36, %p37
      %p39 = scmp.ne.s32.totalorder %s28, %s29
      %p40 = scmp.eq.s32.totalorder %s20, 0
      %p41 = por %p39, %p40
      %p42 = scmp.ne.s32.totalorder %s28, %s29
      %p43 = scmp.eq.s32.totalorder %s21, 1
      %p44 = por %p42, %p43
      %p46 = scmp.ne.s32.totalorder %s29, %s45
      %p47 = scmp.eq.s32.totalorder %s21, 0
      %p48 = por %p46, %p47
      %s50 = sadd.s32 %s49, 1
      %p53 = scmp.eq.s32.totalorder %s15, 1
      %p54 = scmp.ne.s32.totalorder %s49, %s51
      %p55 = scmp.eq.s32.totalorder %s15, 0
      %p56 = por %p54, %p55
      %p57 = scmp.ne.s32.totalorder %s49, %s51
      %p58 = scmp.eq.s32.totalorder %s20, 1
      %p59 = por %p57, %p58
      %p60 = scmp.ne.s32.totalorder %s51, %s52
      %p61 = scmp.eq.s32.totalorder %s20, 0
      %p62 = por %p60, %p61
      %p63 = scmp.ne.s32.totalorder %s51, %s52
      %p64 = scmp.eq.s32.totalorder %s21, 1
      %p65 = por %p63, %p64
      %p67 = scmp.ne.s32.totalorder %s52, %s66
      %p68 = scmp.eq.s32.totalorder %s21, 0
      %p69 = por %p67, %p68
      %s71 = sadd.s32 %s70, 1
      %p74 = scmp.eq.s32.totalorder %s15, 1
      %p75 = scmp.ne.s32.totalorder %s70, %s72
      %p76 = scmp.eq.s32.totalorder %s15, 0
      %p77 = por %p75, %p76
      %p78 = scmp.ne.s32.totalorder %s70, %s72
      %p79 = scmp.eq.s32.totalorder %s20, 1
      %p80 = por %p78, %p79
      %p81 = scmp.ne.s32.totalorder %s72, %s73
      %p82 = scmp.eq.s32.totalorder %s20, 0
      %p83 = por %p81, %p82
      %p84 = scmp.ne.s32.totalorder %s72, %s73
      %p85 = scmp.eq.s32.totalorder %s21, 1
      %p86 = por %p84, %p85
      %p88 = scmp.ne.s32.totalorder %s73, %s87
      %p89 = scmp.eq.s32.totalorder %s21, 0
      %p90 = por %p88, %p89
      %s92 = sadd.s32 %s91, 1
      %p95 = scmp.eq.s32.totalorder %s15, 1
      %p96 = scmp.ne.s32.totalorder %s91, %s93
      %p97 = scmp.eq.s32.totalorder %s15, 0
      %p98 = por %p96, %p97
      %p99 = scmp.ne.s32.totalorder %s91, %s93
      %p100 = scmp.eq.s32.totalorder %s20, 1
      %p101 = por %p99, %p100
      %p102 = scmp.ne.s32.totalorder %s93, %s94
      %p103 = scmp.eq.s32.totalorder %s20, 0
      %p104 = por %p102, %p103
      %p105 = scmp.ne.s32.totalorder %s93, %s94
      %p106 = scmp.eq.s32.totalorder %s21, 1
      %p107 = por %p105, %p106
      %p109 = scmp.ne.s32.totalorder %s94, %s108
      %p110 = scmp.eq.s32.totalorder %s21, 0
      %p111 = por %p109, %p110
      %s112 = ssub.s32 %s15, %s22
      %p113 = scmp.eq.s32.totalorder %s112, 0
      %s115 = sadd.s32 %s114, 1
      %s116 = scalar_select %p113, %s114, %s115
      %p119 = pneg %p113
      %p120 = scmp.eq.s32.totalorder %s15, 1
      %p121 = por %p119, %p120
      %p122 = scmp.ne.s32.totalorder %s114, %s117
      %p123 = scmp.eq.s32.totalorder %s15, 0
      %p124 = por %p122, %p123
      %p125 = scmp.ne.s32.totalorder %s114, %s117
      %p126 = scmp.eq.s32.totalorder %s20, 1
      %p127 = por %p125, %p126
      %p128 = scmp.ne.s32.totalorder %s117, %s118
      %p129 = scmp.eq.s32.totalorder %s20, 0
      %p130 = por %p128, %p129
      %p131 = scmp.ne.s32.totalorder %s117, %s118
      %p132 = scmp.eq.s32.totalorder %s21, 1
      %p133 = por %p131, %p132
      %p135 = scmp.ne.s32.totalorder %s118, %s134
      %p136 = scmp.eq.s32.totalorder %s21, 0
      %p137 = por %p135, %p136
      %s138 = ssub.s32 %s15, %s22
      %p139 = scmp.eq.s32.totalorder %s138, 0
      %s141 = sadd.s32 %s140, 1
      %s142 = scalar_select %p139, %s140, %s141
      %p145 = pneg %p139
      %p146 = scmp.eq.s32.totalorder %s15, 1
      %p147 = por %p145, %p146
      %p148 = scmp.ne.s32.totalorder %s140, %s143
      %p149 = scmp.eq.s32.totalorder %s15, 0
      %p150 = por %p148, %p149
      %p151 = scmp.ne.s32.totalorder %s140, %s143
      %p152 = scmp.eq.s32.totalorder %s20, 1
      %p153 = por %p151, %p152
      %p154 = scmp.ne.s32.totalorder %s143, %s144
      %p155 = scmp.eq.s32.totalorder %s20, 0
      %p156 = por %p154, %p155
      %p157 = scmp.ne.s32.totalorder %s143, %s144
      %p158 = scmp.eq.s32.totalorder %s21, 1
      %p159 = por %p157, %p158
      %p161 = scmp.ne.s32.totalorder %s144, %s160
      %p162 = scmp.eq.s32.totalorder %s21, 0
      %p163 = por %p161, %p162
      %p164 = scmp.le.s32.totalorder 1, %s15
      %p165 = scmp.lt.s32.totalorder %s15, 3
      %p166 = pnand %p164, %p165
      %p167 = pneg %p166
      // Predicated region
      $region9: #{_lambda_.6} parent=5 // pred_check
        _
      $region10: #{_lambda_.6} parent=5 // pred_check_branch
        %169 = sbr.rel (%p166) target = $region12
      $region11: #{_lambda_.6} parent=5 // pred_region
        %s170 = ssub.s32 %s15, 1
        // Predicated region
        $region13: #{_lambda_.6} parent=11 // pred_check
          %p171 = pneg %p62
        $region14: #{_lambda_.6} parent=11 // pred_check_branch
          %173 = sbr.rel (%p171) target = $region16
        $region15: #{_lambda_.6} parent=11 // pred_region
          _
        $region16: #{_lambda_.6} parent=11 // pred_fallthru
          _
        // Predicated region
        $region17: #{_lambda_.6} parent=11 // pred_check
          %p174 = pneg %p83
        $region18: #{_lambda_.6} parent=11 // pred_check_branch
          %176 = sbr.rel (%p174) target = $region20
        $region19: #{_lambda_.6} parent=11 // pred_region
          _
        $region20: #{_lambda_.6} parent=11 // pred_fallthru
          _
        // Predicated region
        $region21: #{_lambda_.6} parent=11 // pred_check
          %p177 = pneg %p104
        $region22: #{_lambda_.6} parent=11 // pred_check_branch
          %179 = sbr.rel (%p177) target = $region24
        $region23: #{_lambda_.6} parent=11 // pred_region
          _
        $region24: #{_lambda_.6} parent=11 // pred_fallthru
          _
      $region12: #{_lambda_.6} parent=5 // pred_fallthru
        _
      %p180 = scmp.lt.s32.totalorder %s15, 2
      // Predicated region
      $region25: #{_lambda_.6} parent=5 // pred_check
        %p181 = pneg %p180
      $region26: #{_lambda_.6} parent=5 // pred_check_branch
        %183 = sbr.rel (%p181) target = $region28
      $region27: #{_lambda_.6} parent=5 // pred_region
        // Predicated region
        $region29: #{_lambda_.6} parent=27 // pred_check
          %p184 = pneg %p35
        $region30: #{_lambda_.6} parent=27 // pred_check_branch
          %186 = sbr.rel (%p184) target = $region32
        $region31: #{_lambda_.6} parent=27 // pred_region
          %p187 = scmp.lt.s32.totalorder %s15, 1
          %s188 = scalar_select %p187, %s15, 1
          %s189 = smul.addr %s188, 20
          %s190 = smul.addr %s189, 4
          %s191 = scalar_lea.vmem %s0, %s190
        $region32: #{_lambda_.6} parent=27 // pred_fallthru
          _
      $region28: #{_lambda_.6} parent=5 // pred_fallthru
        _
      %p192 = scmp.le.s32.totalorder 1, %s15
      %p193 = scmp.lt.s32.totalorder %s15, 3
      %p194 = pnand %p192, %p193
      %p195 = pneg %p194
      // Predicated region
      $region33: #{_lambda_.6} parent=5 // pred_check
        _
      $region34: #{_lambda_.6} parent=5 // pred_check_branch
        %197 = sbr.rel (%p194) target = $region36
      $region35: #{_lambda_.6} parent=5 // pred_region
        %s198 = ssub.s32 %s15, 1
        %p199 = scmp.lt.s32.totalorder %s20, 1
        %s200 = scalar_select %p199, %s20, 1
        %s201 = smul.addr %s200, 20
        %s202 = smul.addr %s201, 4
        %s203 = scalar_lea.vmem %s0, %s202
        %p204 = pneg %p41
        %p205 = pneg %p38
        %p206 = pneg %p62
        %p207 = pneg %p59
        %p208 = pneg %p83
        %p209 = pneg %p80
        %p210 = pneg %p104
        %p211 = pneg %p101
        %p212 = pneg %p130
        %p213 = pneg %p127
        %p214 = scmp.lt.s32.totalorder %s20, 1
        %s215 = scalar_select %p214, %s20, 1
        %s216 = smul.addr %s215, 8
        %s217 = smul.addr %s216, 4
        %s218 = scalar_lea.vmem %s4, %s217
        %p219 = pneg %p156
        %p220 = pneg %p153
        %s221 = sand.u32 %s143, 1
        %s222 = scalar_lea.sflag [#allocation3], %s221
        %s223 = sand.u32 %s143, 1
        %s224 = scalar_lea.vmem [#allocation2], %s223
        %p225 = scmp.lt.s32.totalorder %s20, 1
        %s226 = scalar_select %p225, %s20, 1
        %s227 = smul.addr %s226, 20
        %s228 = smul.addr %s227, 4
        %s229 = scalar_lea.vmem %s0, %s228
        %p230 = scmp.lt.s32.totalorder %s20, 1
        %s231 = scalar_select %p230, %s20, 1
        %s232 = smul.addr %s231, 8
        %s233 = smul.addr %s232, 4
        %s234 = scalar_lea.vmem %s4, %s233
        %v236 = vld [vmem:[%s229] sm:$0xf]
        %v237 = vld [vmem:[%s229 + $0x8] sm:$0xf]
        %v238 = vld [vmem:[%s229 + $0x10] sm:$0xf]
        %v239 = vld [vmem:[%s229 + $0x18] sm:$0xf]
        %v240 = vld [vmem:[%s229 + $0x20] sm:$0xf]
        %v241 = vld [vmem:[%s229 + $0x28] sm:$0xf]
        %v242 = vld [vmem:[%s229 + $0x30] sm:$0xf]
        %v243 = vld [vmem:[%s229 + $0x38] sm:$0xf]
        %v244 = vld [vmem:[%s229 + $0x4] sm:$0x1]
        %v245 = vld [vmem:[%s229 + $0xc] sm:$0x1]
        %v246 = vld [vmem:[%s229 + $0x14] sm:$0x1]
        %v247 = vld [vmem:[%s229 + $0x1c] sm:$0x1]
        %v248 = vld [vmem:[%s229 + $0x24] sm:$0x1]
        %v249 = vld [vmem:[%s229 + $0x2c] sm:$0x1]
        %v250 = vld [vmem:[%s229 + $0x34] sm:$0x1]
        %v251 = vld [vmem:[%s229 + $0x3c] sm:$0x1]
        %v252 = vld [vmem:[%s229] sm:$0xe]
        %v253 = vld [vmem:[%s229 + $0x8] sm:$0xe]
        %v254 = vld [vmem:[%s229 + $0x10] sm:$0xe]
        %v255 = vld [vmem:[%s229 + $0x18] sm:$0xe]
        %v256 = vld [vmem:[%s229 + $0x20] sm:$0xe]
        %v257 = vld [vmem:[%s229 + $0x28] sm:$0xe]
        %v258 = vld [vmem:[%s229 + $0x30] sm:$0xe]
        %v259 = vld [vmem:[%s229 + $0x38] sm:$0xe]
        %s260 = scalar_lea.vmem %s229, 8
        %v261 = vld [vmem:[%s260] sm:$0xf]
        %v262 = vld [vmem:[%s260 + $0x8] sm:$0xf]
        %v263 = vld [vmem:[%s260 + $0x10] sm:$0xf]
        %v264 = vld [vmem:[%s260 + $0x18] sm:$0xf]
        %v265 = vld [vmem:[%s260 + $0x20] sm:$0xf]
        %v266 = vld [vmem:[%s260 + $0x28] sm:$0xf]
        %v267 = vld [vmem:[%s260 + $0x30] sm:$0xf]
        %v268 = vld [vmem:[%s260 + $0x38] sm:$0xf]
        %v269 = vld [vmem:[%s260 + $0x4] sm:$0x1]
        %v270 = vld [vmem:[%s260 + $0xc] sm:$0x1]
        %v271 = vld [vmem:[%s260 + $0x14] sm:$0x1]
        %v272 = vld [vmem:[%s260 + $0x1c] sm:$0x1]
        %v273 = vld [vmem:[%s260 + $0x24] sm:$0x1]
        %v274 = vld [vmem:[%s260 + $0x2c] sm:$0x1]
        %v275 = vld [vmem:[%s260 + $0x34] sm:$0x1]
        %v276 = vld [vmem:[%s260 + $0x3c] sm:$0x1]
        %v277 = vld [vmem:[%s260] sm:$0xe]
        %v278 = vld [vmem:[%s260 + $0x8] sm:$0xe]
        %v279 = vld [vmem:[%s260 + $0x10] sm:$0xe]
        %v280 = vld [vmem:[%s260 + $0x18] sm:$0xe]
        %v281 = vld [vmem:[%s260 + $0x20] sm:$0xe]
        %v282 = vld [vmem:[%s260 + $0x28] sm:$0xe]
        %v283 = vld [vmem:[%s260 + $0x30] sm:$0xe]
        %v284 = vld [vmem:[%s260 + $0x38] sm:$0xe]
        %s285 = scalar_lea.vmem %s229, 16
        %v286 = vld [vmem:[%s285] sm:$0xf]
        %v287 = vld [vmem:[%s285 + $0x8] sm:$0xf]
        %v288 = vld [vmem:[%s285 + $0x10] sm:$0xf]
        %v289 = vld [vmem:[%s285 + $0x18] sm:$0xf]
        %v290 = vld [vmem:[%s285 + $0x20] sm:$0xf]
        %v291 = vld [vmem:[%s285 + $0x28] sm:$0xf]
        %v292 = vld [vmem:[%s285 + $0x30] sm:$0xf]
        %v293 = vld [vmem:[%s285 + $0x38] sm:$0xf]
        %v294 = vld [vmem:[%s285 + $0x4] sm:$0x1]
        %v295 = vld [vmem:[%s285 + $0xc] sm:$0x1]
        %v296 = vld [vmem:[%s285 + $0x14] sm:$0x1]
        %v297 = vld [vmem:[%s285 + $0x1c] sm:$0x1]
        %v298 = vld [vmem:[%s285 + $0x24] sm:$0x1]
        %v299 = vld [vmem:[%s285 + $0x2c] sm:$0x1]
        %v300 = vld [vmem:[%s285 + $0x34] sm:$0x1]
        %v301 = vld [vmem:[%s285 + $0x3c] sm:$0x1]
        %v302 = vld [vmem:[%s285] sm:$0xe]
        %v303 = vld [vmem:[%s285 + $0x8] sm:$0xe]
        %v304 = vld [vmem:[%s285 + $0x10] sm:$0xe]
        %v305 = vld [vmem:[%s285 + $0x18] sm:$0xe]
        %v306 = vld [vmem:[%s285 + $0x20] sm:$0xe]
        %v307 = vld [vmem:[%s285 + $0x28] sm:$0xe]
        %v308 = vld [vmem:[%s285 + $0x30] sm:$0xe]
        %v309 = vld [vmem:[%s285 + $0x38] sm:$0xe]
        %v326 = vunpack.c.l.b16 %v236
        %v327 = vunpack.c.l.b16 %v244
        %v328 = vunpack.c.l.b16 %v237
        %v329 = vunpack.c.l.b16 %v245
        %v330 = vunpack.c.l.b16 %v238
        %v331 = vunpack.c.l.b16 %v246
        %v332 = vunpack.c.l.b16 %v239
        %v333 = vunpack.c.l.b16 %v247
        %v334 = vunpack.c.l.b16 %v240
        %v335 = vunpack.c.l.b16 %v248
        %v336 = vunpack.c.l.b16 %v241
        %v337 = vunpack.c.l.b16 %v249
        %v338 = vunpack.c.l.b16 %v242
        %v339 = vunpack.c.l.b16 %v250
        %v340 = vunpack.c.l.b16 %v243
        %v341 = vunpack.c.l.b16 %v251
        %v342 = vpack.c.b16 %v327, %v326
        %v343 = vpack.c.b16 %v329, %v328
        %v344 = vpack.c.b16 %v331, %v330
        %v345 = vpack.c.b16 %v333, %v332
        %v346 = vpack.c.b16 %v335, %v334
        %v347 = vpack.c.b16 %v337, %v336
        %v348 = vpack.c.b16 %v339, %v338
        %v349 = vpack.c.b16 %v341, %v340
        %v351 = vshrl.u32 %v342, 16
        %v353 = vshll.u32 %v342, 16
        %v355 = vrot.slane %v353, 1
        %v356 = vor.u32 %v351, %v355
        %v358 = vshrl.u32 %v343, 16
        %v360 = vshll.u32 %v343, 16
        %v362 = vrot.slane %v360, 1
        %v363 = vor.u32 %v358, %v362
        %v365 = vshrl.u32 %v344, 16
        %v367 = vshll.u32 %v344, 16
        %v369 = vrot.slane %v367, 1
        %v370 = vor.u32 %v365, %v369
        %v372 = vshrl.u32 %v345, 16
        %v374 = vshll.u32 %v345, 16
        %v376 = vrot.slane %v374, 1
        %v377 = vor.u32 %v372, %v376
        %v379 = vshrl.u32 %v346, 16
        %v381 = vshll.u32 %v346, 16
        %v383 = vrot.slane %v381, 1
        %v384 = vor.u32 %v379, %v383
        %v386 = vshrl.u32 %v347, 16
        %v388 = vshll.u32 %v347, 16
        %v390 = vrot.slane %v388, 1
        %v391 = vor.u32 %v386, %v390
        %v393 = vshrl.u32 %v348, 16
        %v395 = vshll.u32 %v348, 16
        %v397 = vrot.slane %v395, 1
        %v398 = vor.u32 %v393, %v397
        %v400 = vshrl.u32 %v349, 16
        %v402 = vshll.u32 %v349, 16
        %v404 = vrot.slane %v402, 1
        %v405 = vor.u32 %v400, %v404
        %v414 = vunpack.c.l.b16 %v252
        %v415 = vunpack.c.l.b16 %v253
        %v416 = vunpack.c.l.b16 %v254
        %v417 = vunpack.c.l.b16 %v255
        %v418 = vunpack.c.l.b16 %v256
        %v419 = vunpack.c.l.b16 %v257
        %v420 = vunpack.c.l.b16 %v258
        %v421 = vunpack.c.l.b16 %v259
        %v422 = vpack.c.b16 %v327, %v414
        %v423 = vpack.c.b16 %v329, %v415
        %v424 = vpack.c.b16 %v331, %v416
        %v425 = vpack.c.b16 %v333, %v417
        %v426 = vpack.c.b16 %v335, %v418
        %v427 = vpack.c.b16 %v337, %v419
        %v428 = vpack.c.b16 %v339, %v420
        %v429 = vpack.c.b16 %v341, %v421
        %v430 = vrot.slane %v422, 1
        %v431 = vrot.slane %v423, 1
        %v432 = vrot.slane %v424, 1
        %v433 = vrot.slane %v425, 1
        %v434 = vrot.slane %v426, 1
        %v435 = vrot.slane %v427, 1
        %v436 = vrot.slane %v428, 1
        %v437 = vrot.slane %v429, 1
        %v454 = vunpack.c.l.b16 %v261
        %v455 = vunpack.c.l.b16 %v269
        %v456 = vunpack.c.l.b16 %v262
        %v457 = vunpack.c.l.b16 %v270
        %v458 = vunpack.c.l.b16 %v263
        %v459 = vunpack.c.l.b16 %v271
        %v460 = vunpack.c.l.b16 %v264
        %v461 = vunpack.c.l.b16 %v272
        %v462 = vunpack.c.l.b16 %v265
        %v463 = vunpack.c.l.b16 %v273
        %v464 = vunpack.c.l.b16 %v266
        %v465 = vunpack.c.l.b16 %v274
        %v466 = vunpack.c.l.b16 %v267
        %v467 = vunpack.c.l.b16 %v275
        %v468 = vunpack.c.l.b16 %v268
        %v469 = vunpack.c.l.b16 %v276
        %v470 = vpack.c.b16 %v455, %v454
        %v471 = vpack.c.b16 %v457, %v456
        %v472 = vpack.c.b16 %v459, %v458
        %v473 = vpack.c.b16 %v461, %v460
        %v474 = vpack.c.b16 %v463, %v462
        %v475 = vpack.c.b16 %v465, %v464
        %v476 = vpack.c.b16 %v467, %v466
        %v477 = vpack.c.b16 %v469, %v468
        %v479 = vshrl.u32 %v470, 16
        %v481 = vshll.u32 %v470, 16
        %v483 = vrot.slane %v481, 1
        %v484 = vor.u32 %v479, %v483
        %v486 = vshrl.u32 %v471, 16
        %v488 = vshll.u32 %v471, 16
        %v490 = vrot.slane %v488, 1
        %v491 = vor.u32 %v486, %v490
        %v493 = vshrl.u32 %v472, 16
        %v495 = vshll.u32 %v472, 16
        %v497 = vrot.slane %v495, 1
        %v498 = vor.u32 %v493, %v497
        %v500 = vshrl.u32 %v473, 16
        %v502 = vshll.u32 %v473, 16
        %v504 = vrot.slane %v502, 1
        %v505 = vor.u32 %v500, %v504
        %v507 = vshrl.u32 %v474, 16
        %v509 = vshll.u32 %v474, 16
        %v511 = vrot.slane %v509, 1
        %v512 = vor.u32 %v507, %v511
        %v514 = vshrl.u32 %v475, 16
        %v516 = vshll.u32 %v475, 16
        %v518 = vrot.slane %v516, 1
        %v519 = vor.u32 %v514, %v518
        %v521 = vshrl.u32 %v476, 16
        %v523 = vshll.u32 %v476, 16
        %v525 = vrot.slane %v523, 1
        %v526 = vor.u32 %v521, %v525
        %v528 = vshrl.u32 %v477, 16
        %v530 = vshll.u32 %v477, 16
        %v532 = vrot.slane %v530, 1
        %v533 = vor.u32 %v528, %v532
        %v542 = vunpack.c.l.b16 %v277
        %v543 = vunpack.c.l.b16 %v278
        %v544 = vunpack.c.l.b16 %v279
        %v545 = vunpack.c.l.b16 %v280
        %v546 = vunpack.c.l.b16 %v281
        %v547 = vunpack.c.l.b16 %v282
        %v548 = vunpack.c.l.b16 %v283
        %v549 = vunpack.c.l.b16 %v284
        %v550 = vpack.c.b16 %v455, %v542
        %v551 = vpack.c.b16 %v457, %v543
        %v552 = vpack.c.b16 %v459, %v544
        %v553 = vpack.c.b16 %v461, %v545
        %v554 = vpack.c.b16 %v463, %v546
        %v555 = vpack.c.b16 %v465, %v547
        %v556 = vpack.c.b16 %v467, %v548
        %v557 = vpack.c.b16 %v469, %v549
        %v558 = vrot.slane %v550, 1
        %v559 = vrot.slane %v551, 1
        %v560 = vrot.slane %v552, 1
        %v561 = vrot.slane %v553, 1
        %v562 = vrot.slane %v554, 1
        %v563 = vrot.slane %v555, 1
        %v564 = vrot.slane %v556, 1
        %v565 = vrot.slane %v557, 1
        %v582 = vunpack.c.l.b16 %v286
        %v583 = vunpack.c.l.b16 %v294
        %v584 = vunpack.c.l.b16 %v287
        %v585 = vunpack.c.l.b16 %v295
        %v586 = vunpack.c.l.b16 %v288
        %v587 = vunpack.c.l.b16 %v296
        %v588 = vunpack.c.l.b16 %v289
        %v589 = vunpack.c.l.b16 %v297
        %v590 = vunpack.c.l.b16 %v290
        %v591 = vunpack.c.l.b16 %v298
        %v592 = vunpack.c.l.b16 %v291
        %v593 = vunpack.c.l.b16 %v299
        %v594 = vunpack.c.l.b16 %v292
        %v595 = vunpack.c.l.b16 %v300
        %v596 = vunpack.c.l.b16 %v293
        %v597 = vunpack.c.l.b16 %v301
        %v598 = vpack.c.b16 %v583, %v582
        %v599 = vpack.c.b16 %v585, %v584
        %v600 = vpack.c.b16 %v587, %v586
        %v601 = vpack.c.b16 %v589, %v588
        %v602 = vpack.c.b16 %v591, %v590
        %v603 = vpack.c.b16 %v593, %v592
        %v604 = vpack.c.b16 %v595, %v594
        %v605 = vpack.c.b16 %v597, %v596
        %v607 = vshrl.u32 %v598, 16
        %v609 = vshll.u32 %v598, 16
        %v611 = vrot.slane %v609, 1
        %v612 = vor.u32 %v607, %v611
        %v614 = vshrl.u32 %v599, 16
        %v616 = vshll.u32 %v599, 16
        %v618 = vrot.slane %v616, 1
        %v619 = vor.u32 %v614, %v618
        %v621 = vshrl.u32 %v600, 16
        %v623 = vshll.u32 %v600, 16
        %v625 = vrot.slane %v623, 1
        %v626 = vor.u32 %v621, %v625
        %v628 = vshrl.u32 %v601, 16
        %v630 = vshll.u32 %v601, 16
        %v632 = vrot.slane %v630, 1
        %v633 = vor.u32 %v628, %v632
        %v635 = vshrl.u32 %v602, 16
        %v637 = vshll.u32 %v602, 16
        %v639 = vrot.slane %v637, 1
        %v640 = vor.u32 %v635, %v639
        %v642 = vshrl.u32 %v603, 16
        %v644 = vshll.u32 %v603, 16
        %v646 = vrot.slane %v644, 1
        %v647 = vor.u32 %v642, %v646
        %v649 = vshrl.u32 %v604, 16
        %v651 = vshll.u32 %v604, 16
        %v653 = vrot.slane %v651, 1
        %v654 = vor.u32 %v649, %v653
        %v656 = vshrl.u32 %v605, 16
        %v658 = vshll.u32 %v605, 16
        %v660 = vrot.slane %v658, 1
        %v661 = vor.u32 %v656, %v660
        %v670 = vunpack.c.l.b16 %v302
        %v671 = vunpack.c.l.b16 %v303
        %v672 = vunpack.c.l.b16 %v304
        %v673 = vunpack.c.l.b16 %v305
        %v674 = vunpack.c.l.b16 %v306
        %v675 = vunpack.c.l.b16 %v307
        %v676 = vunpack.c.l.b16 %v308
        %v677 = vunpack.c.l.b16 %v309
        %v678 = vpack.c.b16 %v583, %v670
        %v679 = vpack.c.b16 %v585, %v671
        %v680 = vpack.c.b16 %v587, %v672
        %v681 = vpack.c.b16 %v589, %v673
        %v682 = vpack.c.b16 %v591, %v674
        %v683 = vpack.c.b16 %v593, %v675
        %v684 = vpack.c.b16 %v595, %v676
        %v685 = vpack.c.b16 %v597, %v677
        %v686 = vrot.slane %v678, 1
        %v687 = vrot.slane %v679, 1
        %v688 = vrot.slane %v680, 1
        %v689 = vrot.slane %v681, 1
        %v690 = vrot.slane %v682, 1
        %v691 = vrot.slane %v683, 1
        %v692 = vrot.slane %v684, 1
        %v693 = vrot.slane %v685, 1
        %v694 = vunpack.c.l.b16 %v356
        %v695 = vunpack.c.l.b16 %v430
        %v696 = vunpack.c.l.b16 %v484
        %v697 = vunpack.c.l.b16 %v558
        %v698 = vunpack.c.l.b16 %v612
        %v699 = vunpack.c.l.b16 %v686
        %v700 = vunpack.c.l.b16 %v363
        %v701 = vunpack.c.l.b16 %v431
        %v702 = vunpack.c.l.b16 %v491
        %v703 = vunpack.c.l.b16 %v559
        %v704 = vunpack.c.l.b16 %v619
        %v705 = vunpack.c.l.b16 %v687
        %v706 = vunpack.c.l.b16 %v370
        %v707 = vunpack.c.l.b16 %v432
        %v708 = vunpack.c.l.b16 %v498
        %v709 = vunpack.c.l.b16 %v560
        %v710 = vunpack.c.l.b16 %v626
        %v711 = vunpack.c.l.b16 %v688
        %v712 = vunpack.c.l.b16 %v377
        %v713 = vunpack.c.l.b16 %v433
        %v714 = vunpack.c.l.b16 %v505
        %v715 = vunpack.c.l.b16 %v561
        %v716 = vunpack.c.l.b16 %v633
        %v717 = vunpack.c.l.b16 %v689
        %v718 = vunpack.c.l.b16 %v384
        %v719 = vunpack.c.l.b16 %v434
        %v720 = vunpack.c.l.b16 %v512
        %v721 = vunpack.c.l.b16 %v562
        %v722 = vunpack.c.l.b16 %v640
        %v723 = vunpack.c.l.b16 %v690
        %v724 = vunpack.c.l.b16 %v391
        %v725 = vunpack.c.l.b16 %v435
        %v726 = vunpack.c.l.b16 %v519
        %v727 = vunpack.c.l.b16 %v563
        %v728 = vunpack.c.l.b16 %v647
        %v729 = vunpack.c.l.b16 %v691
        %v730 = vunpack.c.l.b16 %v398
        %v731 = vunpack.c.l.b16 %v436
        %v732 = vunpack.c.l.b16 %v526
        %v733 = vunpack.c.l.b16 %v564
        %v734 = vunpack.c.l.b16 %v654
        %v735 = vunpack.c.l.b16 %v692
        %v736 = vunpack.c.l.b16 %v405
        %v737 = vunpack.c.l.b16 %v437
        %v738 = vunpack.c.l.b16 %v533
        %v739 = vunpack.c.l.b16 %v565
        %v740 = vunpack.c.l.b16 %v661
        %v741 = vunpack.c.l.b16 %v693
        %v742 = vld [vmem:[%s1] sm:$0xf]
        %v743 = vld [vmem:[%s1 + $0x4] sm:$0xf]
        %v744 = vld [vmem:[%s1 + $0x8] sm:$0xf]
        %v745 = vld [vmem:[%s1 + $0xc] sm:$0xf]
        %v746 = vld [vmem:[%s1 + $0x10] sm:$0xf]
        %v747 = vld [vmem:[%s1 + $0x14] sm:$0xf]
        %v748 = vld [vmem:[%s1 + $0x18] sm:$0xf]
        %v749 = vld [vmem:[%s1 + $0x1c] sm:$0xf]
        %v750 = vld [vmem:[%s1 + $0x20] sm:$0xf]
        %v751 = vld [vmem:[%s1 + $0x24] sm:$0xf]
        %v752 = vld [vmem:[%s1 + $0x28] sm:$0xf]
        %v753 = vld [vmem:[%s1 + $0x2c] sm:$0xf]
        %v754 = vld [vmem:[%s1 + $0x30] sm:$0xf]
        %v755 = vld [vmem:[%s1 + $0x34] sm:$0xf]
        %v756 = vld [vmem:[%s1 + $0x38] sm:$0xf]
        %v757 = vld [vmem:[%s1 + $0x3c] sm:$0xf]
        %v758 = vld [vmem:[%s1 + $0x40] sm:$0xf]
        %v759 = vld [vmem:[%s1 + $0x44] sm:$0xf]
        %v760 = vld [vmem:[%s1 + $0x48] sm:$0xf]
        %v761 = vld [vmem:[%s1 + $0x4c] sm:$0xf]
        %v762 = vld [vmem:[%s1 + $0x50] sm:$0xf]
        %v763 = vld [vmem:[%s1 + $0x54] sm:$0xf]
        %v764 = vld [vmem:[%s1 + $0x58] sm:$0xf]
        %v765 = vld [vmem:[%s1 + $0x5c] sm:$0xf]
        %v766 = vld [vmem:[%s1 + $0x60] sm:$0xf]
        %v767 = vld [vmem:[%s1 + $0x64] sm:$0xf]
        %v768 = vld [vmem:[%s1 + $0x68] sm:$0xf]
        %v769 = vld [vmem:[%s1 + $0x6c] sm:$0xf]
        %v770 = vld [vmem:[%s1 + $0x70] sm:$0xf]
        %v771 = vld [vmem:[%s1 + $0x74] sm:$0xf]
        %v772 = vld [vmem:[%s1 + $0x78] sm:$0xf]
        %v773 = vld [vmem:[%s1 + $0x7c] sm:$0xf]
        %v774 = vld [vmem:[%s1 + $0x80] sm:$0xf]
        %v775 = vld [vmem:[%s1 + $0x84] sm:$0xf]
        %v776 = vld [vmem:[%s1 + $0x88] sm:$0xf]
        %v777 = vld [vmem:[%s1 + $0x8c] sm:$0xf]
        %v778 = vld [vmem:[%s1 + $0x90] sm:$0xf]
        %v779 = vld [vmem:[%s1 + $0x94] sm:$0xf]
        %v780 = vld [vmem:[%s1 + $0x98] sm:$0xf]
        %v781 = vld [vmem:[%s1 + $0x9c] sm:$0xf]
        %v782 = vld [vmem:[%s1 + $0xa0] sm:$0xf]
        %v783 = vld [vmem:[%s1 + $0xa4] sm:$0xf]
        %v784 = vld [vmem:[%s1 + $0xa8] sm:$0xf]
        %v785 = vld [vmem:[%s1 + $0xac] sm:$0xf]
        %v786 = vld [vmem:[%s1 + $0xb0] sm:$0xf]
        %v787 = vld [vmem:[%s1 + $0xb4] sm:$0xf]
        %v788 = vld [vmem:[%s1 + $0xb8] sm:$0xf]
        %v789 = vld [vmem:[%s1 + $0xbc] sm:$0xf]
        %v790 = vld [vmem:[%s1 + $0xc0] sm:$0xf]
        %v791 = vld [vmem:[%s1 + $0xc4] sm:$0xf]
        %v792 = vld [vmem:[%s1 + $0xc8] sm:$0xf]
        %v793 = vld [vmem:[%s1 + $0xcc] sm:$0xf]
        %v794 = vld [vmem:[%s1 + $0xd0] sm:$0xf]
        %v795 = vld [vmem:[%s1 + $0xd4] sm:$0xf]
        %v796 = vld [vmem:[%s1 + $0xd8] sm:$0xf]
        %v797 = vld [vmem:[%s1 + $0xdc] sm:$0xf]
        %v798 = vld [vmem:[%s1 + $0xe0] sm:$0xf]
        %v799 = vld [vmem:[%s1 + $0xe4] sm:$0xf]
        %v800 = vld [vmem:[%s1 + $0xe8] sm:$0xf]
        %v801 = vld [vmem:[%s1 + $0xec] sm:$0xf]
        %v802 = vld [vmem:[%s1 + $0xf0] sm:$0xf]
        %v803 = vld [vmem:[%s1 + $0xf4] sm:$0xf]
        %v804 = vld [vmem:[%s1 + $0xf8] sm:$0xf]
        %v805 = vld [vmem:[%s1 + $0xfc] sm:$0xf]
        %v806 = vld [vmem:[%s1 + $0x100] sm:$0xf]
        %v807 = vld [vmem:[%s1 + $0x104] sm:$0xf]
        %v808 = vld [vmem:[%s1 + $0x108] sm:$0xf]
        %v809 = vld [vmem:[%s1 + $0x10c] sm:$0xf]
        %v810 = vld [vmem:[%s1 + $0x110] sm:$0xf]
        %v811 = vld [vmem:[%s1 + $0x114] sm:$0xf]
        %v812 = vld [vmem:[%s1 + $0x118] sm:$0xf]
        %v813 = vld [vmem:[%s1 + $0x11c] sm:$0xf]
        %v814 = vld [vmem:[%s1 + $0x120] sm:$0xf]
        %v815 = vld [vmem:[%s1 + $0x124] sm:$0xf]
        %v816 = vld [vmem:[%s1 + $0x128] sm:$0xf]
        %v817 = vld [vmem:[%s1 + $0x12c] sm:$0xf]
        %v818 = vld [vmem:[%s1 + $0x130] sm:$0xf]
        %v819 = vld [vmem:[%s1 + $0x134] sm:$0xf]
        %v820 = vld [vmem:[%s1 + $0x138] sm:$0xf]
        %v821 = vld [vmem:[%s1 + $0x13c] sm:$0xf]
        %v822 = vld [vmem:[%s1 + $0x140] sm:$0xf]
        %v823 = vld [vmem:[%s1 + $0x144] sm:$0xf]
        %v824 = vld [vmem:[%s1 + $0x148] sm:$0xf]
        %v825 = vld [vmem:[%s1 + $0x14c] sm:$0xf]
        %v826 = vld [vmem:[%s1 + $0x150] sm:$0xf]
        %v827 = vld [vmem:[%s1 + $0x154] sm:$0xf]
        %v828 = vld [vmem:[%s1 + $0x158] sm:$0xf]
        %v829 = vld [vmem:[%s1 + $0x15c] sm:$0xf]
        %v830 = vld [vmem:[%s1 + $0x160] sm:$0xf]
        %v831 = vld [vmem:[%s1 + $0x164] sm:$0xf]
        %v832 = vld [vmem:[%s1 + $0x168] sm:$0xf]
        %v833 = vld [vmem:[%s1 + $0x16c] sm:$0xf]
        %v834 = vld [vmem:[%s1 + $0x170] sm:$0xf]
        %v835 = vld [vmem:[%s1 + $0x174] sm:$0xf]
        %v836 = vld [vmem:[%s1 + $0x178] sm:$0xf]
        %v837 = vld [vmem:[%s1 + $0x17c] sm:$0xf]
        %v838 = vld [vmem:[%s1 + $0x180] sm:$0xf]
        %v839 = vld [vmem:[%s1 + $0x184] sm:$0xf]
        %v840 = vld [vmem:[%s1 + $0x188] sm:$0xf]
        %v841 = vld [vmem:[%s1 + $0x18c] sm:$0xf]
        %v842 = vld [vmem:[%s1 + $0x190] sm:$0xf]
        %v843 = vld [vmem:[%s1 + $0x194] sm:$0xf]
        %v844 = vld [vmem:[%s1 + $0x198] sm:$0xf]
        %v845 = vld [vmem:[%s1 + $0x19c] sm:$0xf]
        %v846 = vld [vmem:[%s1 + $0x1a0] sm:$0xf]
        %v847 = vld [vmem:[%s1 + $0x1a4] sm:$0xf]
        %v848 = vld [vmem:[%s1 + $0x1a8] sm:$0xf]
        %v849 = vld [vmem:[%s1 + $0x1ac] sm:$0xf]
        %v850 = vld [vmem:[%s1 + $0x1b0] sm:$0xf]
        %v851 = vld [vmem:[%s1 + $0x1b4] sm:$0xf]
        %v852 = vld [vmem:[%s1 + $0x1b8] sm:$0xf]
        %v853 = vld [vmem:[%s1 + $0x1bc] sm:$0xf]
        %v854 = vld [vmem:[%s1 + $0x1c0] sm:$0xf]
        %v855 = vld [vmem:[%s1 + $0x1c4] sm:$0xf]
        %v856 = vld [vmem:[%s1 + $0x1c8] sm:$0xf]
        %v857 = vld [vmem:[%s1 + $0x1cc] sm:$0xf]
        %v858 = vld [vmem:[%s1 + $0x1d0] sm:$0xf]
        %v859 = vld [vmem:[%s1 + $0x1d4] sm:$0xf]
        %v860 = vld [vmem:[%s1 + $0x1d8] sm:$0xf]
        %v861 = vld [vmem:[%s1 + $0x1dc] sm:$0xf]
        %v862 = vld [vmem:[%s1 + $0x1e0] sm:$0xf]
        %v863 = vld [vmem:[%s1 + $0x1e4] sm:$0xf]
        %v864 = vld [vmem:[%s1 + $0x1e8] sm:$0xf]
        %v865 = vld [vmem:[%s1 + $0x1ec] sm:$0xf]
        %v866 = vld [vmem:[%s1 + $0x1f0] sm:$0xf]
        %v867 = vld [vmem:[%s1 + $0x1f4] sm:$0xf]
        %v868 = vld [vmem:[%s1 + $0x1f8] sm:$0xf]
        %v869 = vld [vmem:[%s1 + $0x1fc] sm:$0xf]
        %v870 = vld [vmem:[%s1 + $0x200] sm:$0xf]
        %v871 = vld [vmem:[%s1 + $0x204] sm:$0xf]
        %v872 = vld [vmem:[%s1 + $0x208] sm:$0xf]
        %v873 = vld [vmem:[%s1 + $0x20c] sm:$0xf]
        %v874 = vld [vmem:[%s1 + $0x210] sm:$0xf]
        %v875 = vld [vmem:[%s1 + $0x214] sm:$0xf]
        %v876 = vld [vmem:[%s1 + $0x218] sm:$0xf]
        %v877 = vld [vmem:[%s1 + $0x21c] sm:$0xf]
        %v878 = vld [vmem:[%s1 + $0x220] sm:$0xf]
        %v879 = vld [vmem:[%s1 + $0x224] sm:$0xf]
        %v880 = vld [vmem:[%s1 + $0x228] sm:$0xf]
        %v881 = vld [vmem:[%s1 + $0x22c] sm:$0xf]
        %v882 = vld [vmem:[%s1 + $0x230] sm:$0xf]
        %v883 = vld [vmem:[%s1 + $0x234] sm:$0xf]
        %v884 = vld [vmem:[%s1 + $0x238] sm:$0xf]
        %v885 = vld [vmem:[%s1 + $0x23c] sm:$0xf]
        %v886 = vpack.c.b16 %v328, %v326
        %v887 = vpack.c.b16 %v700, %v694
        %v888 = vpack.c.b16 %v701, %v695
        %v889 = vpack.c.b16 %v456, %v454
        %v890 = vpack.c.b16 %v702, %v696
        %v891 = vpack.c.b16 %v703, %v697
        %v892 = vpack.c.b16 %v584, %v582
        %v893 = vpack.c.b16 %v704, %v698
        %v894 = vpack.c.b16 %v705, %v699
        %v895 = vpack.c.b16 %v332, %v330
        %v896 = vpack.c.b16 %v712, %v706
        %v897 = vpack.c.b16 %v713, %v707
        %v898 = vpack.c.b16 %v460, %v458
        %v899 = vpack.c.b16 %v714, %v708
        %v900 = vpack.c.b16 %v715, %v709
        %v901 = vpack.c.b16 %v588, %v586
        %v902 = vpack.c.b16 %v716, %v710
        %v903 = vpack.c.b16 %v717, %v711
        %v904 = vpack.c.b16 %v336, %v334
        %v905 = vpack.c.b16 %v724, %v718
        %v906 = vpack.c.b16 %v725, %v719
        %v907 = vpack.c.b16 %v464, %v462
        %v908 = vpack.c.b16 %v726, %v720
        %v909 = vpack.c.b16 %v727, %v721
        %v910 = vpack.c.b16 %v592, %v590
        %v911 = vpack.c.b16 %v728, %v722
        %v912 = vpack.c.b16 %v729, %v723
        %v913 = vpack.c.b16 %v340, %v338
        %v914 = vpack.c.b16 %v736, %v730
        %v915 = vpack.c.b16 %v737, %v731
        %v916 = vpack.c.b16 %v468, %v466
        %v917 = vpack.c.b16 %v738, %v732
        %v918 = vpack.c.b16 %v739, %v733
        %v919 = vpack.c.b16 %v596, %v594
        %v920 = vpack.c.b16 %v740, %v734
        %v921 = vpack.c.b16 %v741, %v735
        %v1102 = vunpack.c.l.b16 %v742
        %v1103 = vunpack.c.l.b16 %v743
        %v1104 = vunpack.c.l.b16 %v744
        %v1105 = vunpack.c.l.b16 %v745
        %v1106 = vunpack.c.l.b16 %v746
        %v1107 = vunpack.c.l.b16 %v747
        %v1108 = vunpack.c.l.b16 %v748
        %v1109 = vunpack.c.l.b16 %v749
        %v1110 = vunpack.c.l.b16 %v750
        %v1111 = vunpack.c.l.b16 %v751
        %v1112 = vunpack.c.l.b16 %v752
        %v1113 = vunpack.c.l.b16 %v753
        %v1114 = vunpack.c.l.b16 %v754
        %v1115 = vunpack.c.l.b16 %v755
        %v1116 = vunpack.c.l.b16 %v756
        %v1117 = vunpack.c.l.b16 %v757
        %v1118 = vunpack.c.l.b16 %v758
        %v1119 = vunpack.c.l.b16 %v759
        %v1120 = vunpack.c.l.b16 %v760
        %v1121 = vunpack.c.l.b16 %v761
        %v1122 = vunpack.c.l.b16 %v762
        %v1123 = vunpack.c.l.b16 %v763
        %v1124 = vunpack.c.l.b16 %v764
        %v1125 = vunpack.c.l.b16 %v765
        %v1126 = vunpack.c.l.b16 %v766
        %v1127 = vunpack.c.l.b16 %v767
        %v1128 = vunpack.c.l.b16 %v768
        %v1129 = vunpack.c.l.b16 %v769
        %v1130 = vunpack.c.l.b16 %v770
        %v1131 = vunpack.c.l.b16 %v771
        %v1132 = vunpack.c.l.b16 %v772
        %v1133 = vunpack.c.l.b16 %v773
        %v1134 = vunpack.c.l.b16 %v774
        %v1135 = vunpack.c.l.b16 %v775
        %v1136 = vunpack.c.l.b16 %v776
        %v1137 = vunpack.c.l.b16 %v777
        %v1138 = vunpack.c.l.b16 %v778
        %v1139 = vunpack.c.l.b16 %v779
        %v1140 = vunpack.c.l.b16 %v780
        %v1141 = vunpack.c.l.b16 %v781
        %v1142 = vunpack.c.l.b16 %v782
        %v1143 = vunpack.c.l.b16 %v783
        %v1144 = vunpack.c.l.b16 %v784
        %v1145 = vunpack.c.l.b16 %v785
        %v1146 = vunpack.c.l.b16 %v786
        %v1147 = vunpack.c.l.b16 %v787
        %v1148 = vunpack.c.l.b16 %v788
        %v1149 = vunpack.c.l.b16 %v789
        %v1150 = vunpack.c.l.b16 %v790
        %v1151 = vunpack.c.l.b16 %v791
        %v1152 = vunpack.c.l.b16 %v792
        %v1153 = vunpack.c.l.b16 %v793
        %v1154 = vunpack.c.l.b16 %v794
        %v1155 = vunpack.c.l.b16 %v795
        %v1156 = vunpack.c.l.b16 %v796
        %v1157 = vunpack.c.l.b16 %v797
        %v1158 = vunpack.c.l.b16 %v798
        %v1159 = vunpack.c.l.b16 %v799
        %v1160 = vunpack.c.l.b16 %v800
        %v1161 = vunpack.c.l.b16 %v801
        %v1162 = vunpack.c.l.b16 %v802
        %v1163 = vunpack.c.l.b16 %v803
        %v1164 = vunpack.c.l.b16 %v804
        %v1165 = vunpack.c.l.b16 %v805
        %v1166 = vunpack.c.l.b16 %v806
        %v1167 = vunpack.c.l.b16 %v807
        %v1168 = vunpack.c.l.b16 %v808
        %v1169 = vunpack.c.l.b16 %v809
        %v1170 = vunpack.c.l.b16 %v810
        %v1171 = vunpack.c.l.b16 %v811
        %v1172 = vunpack.c.l.b16 %v812
        %v1173 = vunpack.c.l.b16 %v813
        %v1174 = vunpack.c.l.b16 %v814
        %v1175 = vunpack.c.l.b16 %v815
        %v1176 = vunpack.c.l.b16 %v816
        %v1177 = vunpack.c.l.b16 %v817
        %v1178 = vunpack.c.l.b16 %v818
        %v1179 = vunpack.c.l.b16 %v819
        %v1180 = vunpack.c.l.b16 %v820
        %v1181 = vunpack.c.l.b16 %v821
        %v1182 = vunpack.c.l.b16 %v822
        %v1183 = vunpack.c.l.b16 %v823
        %v1184 = vunpack.c.l.b16 %v824
        %v1185 = vunpack.c.l.b16 %v825
        %v1186 = vunpack.c.l.b16 %v826
        %v1187 = vunpack.c.l.b16 %v827
        %v1188 = vunpack.c.l.b16 %v828
        %v1189 = vunpack.c.l.b16 %v829
        %v1190 = vunpack.c.l.b16 %v830
        %v1191 = vunpack.c.l.b16 %v831
        %v1192 = vunpack.c.l.b16 %v832
        %v1193 = vunpack.c.l.b16 %v833
        %v1194 = vunpack.c.l.b16 %v834
        %v1195 = vunpack.c.l.b16 %v835
        %v1196 = vunpack.c.l.b16 %v836
        %v1197 = vunpack.c.l.b16 %v837
        %v1198 = vunpack.c.l.b16 %v838
        %v1199 = vunpack.c.l.b16 %v839
        %v1200 = vunpack.c.l.b16 %v840
        %v1201 = vunpack.c.l.b16 %v841
        %v1202 = vunpack.c.l.b16 %v842
        %v1203 = vunpack.c.l.b16 %v843
        %v1204 = vunpack.c.l.b16 %v844
        %v1205 = vunpack.c.l.b16 %v845
        %v1206 = vunpack.c.l.b16 %v846
        %v1207 = vunpack.c.l.b16 %v847
        %v1208 = vunpack.c.l.b16 %v848
        %v1209 = vunpack.c.l.b16 %v849
        %v1210 = vunpack.c.l.b16 %v850
        %v1211 = vunpack.c.l.b16 %v851
        %v1212 = vunpack.c.l.b16 %v852
        %v1213 = vunpack.c.l.b16 %v853
        %v1214 = vunpack.c.l.b16 %v854
        %v1215 = vunpack.c.l.b16 %v855
        %v1216 = vunpack.c.l.b16 %v856
        %v1217 = vunpack.c.l.b16 %v857
        %v1218 = vunpack.c.l.b16 %v858
        %v1219 = vunpack.c.l.b16 %v859
        %v1220 = vunpack.c.l.b16 %v860
        %v1221 = vunpack.c.l.b16 %v861
        %v1222 = vunpack.c.l.b16 %v862
        %v1223 = vunpack.c.l.b16 %v863
        %v1224 = vunpack.c.l.b16 %v864
        %v1225 = vunpack.c.l.b16 %v865
        %v1226 = vunpack.c.l.b16 %v866
        %v1227 = vunpack.c.l.b16 %v867
        %v1228 = vunpack.c.l.b16 %v868
        %v1229 = vunpack.c.l.b16 %v869
        %v1230 = vunpack.c.l.b16 %v870
        %v1231 = vunpack.c.l.b16 %v871
        %v1232 = vunpack.c.l.b16 %v872
        %v1233 = vunpack.c.l.b16 %v873
        %v1234 = vunpack.c.l.b16 %v874
        %v1235 = vunpack.c.l.b16 %v875
        %v1236 = vunpack.c.l.b16 %v876
        %v1237 = vunpack.c.l.b16 %v877
        %v1238 = vunpack.c.l.b16 %v878
        %v1239 = vunpack.c.l.b16 %v879
        %v1240 = vunpack.c.l.b16 %v880
        %v1241 = vunpack.c.l.b16 %v881
        %v1242 = vunpack.c.l.b16 %v882
        %v1243 = vunpack.c.l.b16 %v883
        %v1244 = vunpack.c.l.b16 %v884
        %v1245 = vunpack.c.l.b16 %v885
        %v1246 = vpack.c.b16 %v1103, %v1102
        %v1247 = vpack.c.b16 %v1105, %v1104
        %v1248 = vpack.c.b16 %v1107, %v1106
        %v1249 = vpack.c.b16 %v1109, %v1108
        %v1250 = vpack.c.b16 %v1111, %v1110
        %v1251 = vpack.c.b16 %v1113, %v1112
        %v1252 = vpack.c.b16 %v1115, %v1114
        %v1253 = vpack.c.b16 %v1117, %v1116
        %v1254 = vpack.c.b16 %v1119, %v1118
        %v1255 = vpack.c.b16 %v1121, %v1120
        %v1256 = vpack.c.b16 %v1123, %v1122
        %v1257 = vpack.c.b16 %v1125, %v1124
        %v1258 = vpack.c.b16 %v1127, %v1126
        %v1259 = vpack.c.b16 %v1129, %v1128
        %v1260 = vpack.c.b16 %v1131, %v1130
        %v1261 = vpack.c.b16 %v1133, %v1132
        %v1262 = vpack.c.b16 %v1135, %v1134
        %v1263 = vpack.c.b16 %v1137, %v1136
        %v1264 = vpack.c.b16 %v1139, %v1138
        %v1265 = vpack.c.b16 %v1141, %v1140
        %v1266 = vpack.c.b16 %v1143, %v1142
        %v1267 = vpack.c.b16 %v1145, %v1144
        %v1268 = vpack.c.b16 %v1147, %v1146
        %v1269 = vpack.c.b16 %v1149, %v1148
        %v1270 = vpack.c.b16 %v1151, %v1150
        %v1271 = vpack.c.b16 %v1153, %v1152
        %v1272 = vpack.c.b16 %v1155, %v1154
        %v1273 = vpack.c.b16 %v1157, %v1156
        %v1274 = vpack.c.b16 %v1159, %v1158
        %v1275 = vpack.c.b16 %v1161, %v1160
        %v1276 = vpack.c.b16 %v1163, %v1162
        %v1277 = vpack.c.b16 %v1165, %v1164
        %v1278 = vpack.c.b16 %v1167, %v1166
        %v1279 = vpack.c.b16 %v1169, %v1168
        %v1280 = vpack.c.b16 %v1171, %v1170
        %v1281 = vpack.c.b16 %v1173, %v1172
        %v1282 = vpack.c.b16 %v1175, %v1174
        %v1283 = vpack.c.b16 %v1177, %v1176
        %v1284 = vpack.c.b16 %v1179, %v1178
        %v1285 = vpack.c.b16 %v1181, %v1180
        %v1286 = vpack.c.b16 %v1183, %v1182
        %v1287 = vpack.c.b16 %v1185, %v1184
        %v1288 = vpack.c.b16 %v1187, %v1186
        %v1289 = vpack.c.b16 %v1189, %v1188
        %v1290 = vpack.c.b16 %v1191, %v1190
        %v1291 = vpack.c.b16 %v1193, %v1192
        %v1292 = vpack.c.b16 %v1195, %v1194
        %v1293 = vpack.c.b16 %v1197, %v1196
        %v1294 = vpack.c.b16 %v1199, %v1198
        %v1295 = vpack.c.b16 %v1201, %v1200
        %v1296 = vpack.c.b16 %v1203, %v1202
        %v1297 = vpack.c.b16 %v1205, %v1204
        %v1298 = vpack.c.b16 %v1207, %v1206
        %v1299 = vpack.c.b16 %v1209, %v1208
        %v1300 = vpack.c.b16 %v1211, %v1210
        %v1301 = vpack.c.b16 %v1213, %v1212
        %v1302 = vpack.c.b16 %v1215, %v1214
        %v1303 = vpack.c.b16 %v1217, %v1216
        %v1304 = vpack.c.b16 %v1219, %v1218
        %v1305 = vpack.c.b16 %v1221, %v1220
        %v1306 = vpack.c.b16 %v1223, %v1222
        %v1307 = vpack.c.b16 %v1225, %v1224
        %v1308 = vpack.c.b16 %v1227, %v1226
        %v1309 = vpack.c.b16 %v1229, %v1228
        %v1310 = vpack.c.b16 %v1231, %v1230
        %v1311 = vpack.c.b16 %v1233, %v1232
        %v1312 = vpack.c.b16 %v1235, %v1234
        %v1313 = vpack.c.b16 %v1237, %v1236
        %v1314 = vpack.c.b16 %v1239, %v1238
        %v1315 = vpack.c.b16 %v1241, %v1240
        %v1316 = vpack.c.b16 %v1243, %v1242
        %v1317 = vpack.c.b16 %v1245, %v1244
        %1390 = vmatprep.subr.bf16.mxu0 0
        %1391 = vmatpush1.bf16.msra.mxu0 %v1246
        %1392 = vmatprep.subr.bf16.mxu0 0
        %1393 = vmatpush1.bf16.msra.mxu0 %v1247
        %1394 = vmatprep.subr.bf16.mxu0 0
        %1395 = vmatpush1.bf16.msra.mxu0 %v1248
        %1396 = vmatprep.subr.bf16.mxu0 0
        %1397 = vmatpush1.bf16.msra.mxu0 %v1249
        %1398 = vmatprep.subr.bf16.mxu0 0
        %1399 = vmatpush1.bf16.msra.mxu0 %v1250
        %1400 = vmatprep.subr.bf16.mxu0 0
        %1401 = vmatpush1.bf16.msra.mxu0 %v1251
        %1402 = vmatprep.subr.bf16.mxu0 0
        %1403 = vmatpush1.bf16.msra.mxu0 %v1252
        %1404 = vmatprep.subr.bf16.mxu0 0
        %1405 = vmatpush1.bf16.msra.mxu0 %v1253
        %1406 = vmatprep.subr.bf16.mxu0 0
        %1407 = vmatpush1.bf16.msra.mxu0 %v1254
        %1408 = vmatprep.subr.bf16.mxu0 0
        %1409 = vmatpush1.bf16.msra.mxu0 %v1255
        %1410 = vmatprep.subr.bf16.mxu0 0
        %1411 = vmatpush1.bf16.msra.mxu0 %v1256
        %1412 = vmatprep.subr.bf16.mxu0 0
        %1413 = vmatpush1.bf16.msra.mxu0 %v1257
        %1414 = vmatprep.subr.bf16.mxu0 0
        %1415 = vmatpush1.bf16.msra.mxu0 %v1258
        %1416 = vmatprep.subr.bf16.mxu0 0
        %1417 = vmatpush1.bf16.msra.mxu0 %v1259
        %1418 = vmatprep.subr.bf16.mxu0 0
        %1419 = vmatpush1.bf16.msra.mxu0 %v1260
        %1420 = vmatprep.subr.bf16.mxu0 0
        %1421 = vmatpush1.bf16.msra.mxu0 %v1261
        %1422 = vmatprep.mubr.bf16.mxu0 %v887
        %1423 = vmatmul.mubr.bf16.gmra.mrb[0].mxu0 %v886
        %v1424 = vpop.f32.mrb[0].mxu0
        %v1425 = vadd.f32 0.0, %v1424
        %v1426 = vpop.f32.mrb[0].mxu0
        %v1427 = vpop.f32.mrb[0].mxu0
        %v1428 = vadd.f32 0.0, %v1427
        %v1429 = vpop.f32.mrb[0].mxu0
        %1430 = vmatprep.mubr.bf16.mxu0 %v896
        %1431 = vmatmul.mubr.bf16.gmra.mrb[0].mxu0 %v895
        %v1432 = vpop.f32.mrb[0].mxu0
        %v1433 = vadd.f32 0.0, %v1432
        %v1434 = vpop.f32.mrb[0].mxu0
        %v1435 = vpop.f32.mrb[0].mxu0
        %v1436 = vadd.f32 0.0, %v1435
        %v1437 = vpop.f32.mrb[0].mxu0
        %1438 = vmatprep.mubr.bf16.mxu0 %v905
        %1439 = vmatmul.mubr.bf16.gmra.mrb[0].mxu0 %v904
        %v1440 = vpop.f32.mrb[0].mxu0
        %v1441 = vadd.f32 0.0, %v1440
        %v1442 = vpop.f32.mrb[0].mxu0
        %v1443 = vpop.f32.mrb[0].mxu0
        %v1444 = vadd.f32 0.0, %v1443
        %v1445 = vpop.f32.mrb[0].mxu0
        %1446 = vmatprep.mubr.bf16.mxu0 %v914
        %1447 = vmatmul.mubr.bf16.gmra.mrb[0].mxu0 %v913
        %v1448 = vpop.f32.mrb[0].mxu0
        %v1449 = vadd.f32 0.0, %v1448
        %v1450 = vpop.f32.mrb[0].mxu0
        %v1451 = vpop.f32.mrb[0].mxu0
        %v1452 = vadd.f32 0.0, %v1451
        %v1453 = vpop.f32.mrb[0].mxu0
        %1454 = vdwg.mxu0
        %1455 = vmatprep.subr.bf16.mxu0 0
        %1456 = vmatpush1.bf16.msra.mxu0 %v1262
        %1457 = vmatprep.subr.bf16.mxu0 0
        %1458 = vmatpush1.bf16.msra.mxu0 %v1263
        %1459 = vmatprep.subr.bf16.mxu0 0
        %1460 = vmatpush1.bf16.msra.mxu0 %v1264
        %1461 = vmatprep.subr.bf16.mxu0 0
        %1462 = vmatpush1.bf16.msra.mxu0 %v1265
        %1463 = vmatprep.subr.bf16.mxu0 0
        %1464 = vmatpush1.bf16.msra.mxu0 %v1266
        %1465 = vmatprep.subr.bf16.mxu0 0
        %1466 = vmatpush1.bf16.msra.mxu0 %v1267
        %1467 = vmatprep.subr.bf16.mxu0 0
        %1468 = vmatpush1.bf16.msra.mxu0 %v1268
        %1469 = vmatprep.subr.bf16.mxu0 0
        %1470 = vmatpush1.bf16.msra.mxu0 %v1269
        %1471 = vmatprep.subr.bf16.mxu0 0
        %1472 = vmatpush1.bf16.msra.mxu0 %v1270
        %1473 = vmatprep.subr.bf16.mxu0 0
        %1474 = vmatpush1.bf16.msra.mxu0 %v1271
        %1475 = vmatprep.subr.bf16.mxu0 0
        %1476 = vmatpush1.bf16.msra.mxu0 %v1272
        %1477 = vmatprep.subr.bf16.mxu0 0
        %1478 = vmatpush1.bf16.msra.mxu0 %v1273
        %1479 = vmatprep.subr.bf16.mxu0 0
        %1480 = vmatpush1.bf16.msra.mxu0 %v1274
        %1481 = vmatprep.subr.bf16.mxu0 0
        %1482 = vmatpush1.bf16.msra.mxu0 %v1275
        %1483 = vmatprep.subr.bf16.mxu0 0
        %1484 = vmatpush1.bf16.msra.mxu0 %v1276
        %1485 = vmatprep.subr.bf16.mxu0 0
        %1486 = vmatpush1.bf16.msra.mxu0 %v1277
        %1487 = vmatprep.mubr.bf16.mxu0 %v889
        %1488 = vmatmul.mubr.bf16.gmra.mrb[0].mxu0 %v888
        %v1489 = vpop.f32.mrb[0].mxu0
        %v1490 = vadd.f32 %v1425, %v1489
        %v1491 = vpop.f32.mrb[0].mxu0
        %v1492 = vpop.f32.mrb[0].mxu0
        %v1493 = vadd.f32 %v1428, %v1492
        %v1494 = vpop.f32.mrb[0].mxu0
        %1495 = vmatprep.mubr.bf16.mxu0 %v898
        %1496 = vmatmul.mubr.bf16.gmra.mrb[0].mxu0 %v897
        %v1497 = vpop.f32.mrb[0].mxu0
        %v1498 = vadd.f32 %v1433, %v1497
        %v1499 = vpop.f32.mrb[0].mxu0
        %v1500 = vpop.f32.mrb[0].mxu0
        %v1501 = vadd.f32 %v1436, %v1500
        %v1502 = vpop.f32.mrb[0].mxu0
        %1503 = vmatprep.mubr.bf16.mxu0 %v907
        %1504 = vmatmul.mubr.bf16.gmra.mrb[0].mxu0 %v906
        %v1505 = vpop.f32.mrb[0].mxu0
        %v1506 = vadd.f32 %v1441, %v1505
        %v1507 = vpop.f32.mrb[0].mxu0
        %v1508 = vpop.f32.mrb[0].mxu0
        %v1509 = vadd.f32 %v1444, %v1508
        %v1510 = vpop.f32.mrb[0].mxu0
        %1511 = vmatprep.mubr.bf16.mxu0 %v916
        %1512 = vmatmul.mubr.bf16.gmra.mrb[0].mxu0 %v915
        %v1513 = vpop.f32.mrb[0].mxu0
        %v1514 = vadd.f32 %v1449, %v1513
        %v1515 = vpop.f32.mrb[0].mxu0
        %v1516 = vpop.f32.mrb[0].mxu0
        %v1517 = vadd.f32 %v1452, %v1516
        %v1518 = vpop.f32.mrb[0].mxu0
        %1519 = vdwg.mxu0
        %1520 = vmatprep.subr.bf16.mxu0 0
        %1521 = vmatpush1.bf16.msra.mxu0 %v1278
        %1522 = vmatprep.subr.bf16.mxu0 0
        %1523 = vmatpush1.bf16.msra.mxu0 %v1279
        %1524 = vmatprep.subr.bf16.mxu0 0
        %1525 = vmatpush1.bf16.msra.mxu0 %v1280
        %1526 = vmatprep.subr.bf16.mxu0 0
        %1527 = vmatpush1.bf16.msra.mxu0 %v1281
        %1528 = vmatprep.subr.bf16.mxu0 0
        %1529 = vmatpush1.bf16.msra.mxu0 %v1282
        %1530 = vmatprep.subr.bf16.mxu0 0
        %1531 = vmatpush1.bf16.msra.mxu0 %v1283
        %1532 = vmatprep.subr.bf16.mxu0 0
        %1533 = vmatpush1.bf16.msra.mxu0 %v1284
        %1534 = vmatprep.subr.bf16.mxu0 0
        %1535 = vmatpush1.bf16.msra.mxu0 %v1285
        %1536 = vmatprep.subr.bf16.mxu0 0
        %1537 = vmatpush1.bf16.msra.mxu0 %v1286
        %1538 = vmatprep.subr.bf16.mxu0 0
        %1539 = vmatpush1.bf16.msra.mxu0 %v1287
        %1540 = vmatprep.subr.bf16.mxu0 0
        %1541 = vmatpush1.bf16.msra.mxu0 %v1288
        %1542 = vmatprep.subr.bf16.mxu0 0
        %1543 = vmatpush1.bf16.msra.mxu0 %v1289
        %1544 = vmatprep.subr.bf16.mxu0 0
        %1545 = vmatpush1.bf16.msra.mxu0 %v1290
        %1546 = vmatprep.subr.bf16.mxu0 0
        %1547 = vmatpush1.bf16.msra.mxu0 %v1291
        %1548 = vmatprep.subr.bf16.mxu0 0
        %1549 = vmatpush1.bf16.msra.mxu0 %v1292
        %1550 = vmatprep.subr.bf16.mxu0 0
        %1551 = vmatpush1.bf16.msra.mxu0 %v1293
        %1552 = vmatprep.mubr.bf16.mxu0 %v891
        %1553 = vmatmul.mubr.bf16.gmra.mrb[0].mxu0 %v890
        %v1554 = vpop.f32.mrb[0].mxu0
        %v1555 = vadd.f32 %v1490, %v1554
        %v1556 = vpop.f32.mrb[0].mxu0
        %v1557 = vpop.f32.mrb[0].mxu0
        %v1558 = vadd.f32 %v1493, %v1557
        %v1559 = vpop.f32.mrb[0].mxu0
        %1560 = vmatprep.mubr.bf16.mxu0 %v900
        %1561 = vmatmul.mubr.bf16.gmra.mrb[0].mxu0 %v899
        %v1562 = vpop.f32.mrb[0].mxu0
        %v1563 = vadd.f32 %v1498, %v1562
        %v1564 = vpop.f32.mrb[0].mxu0
        %v1565 = vpop.f32.mrb[0].mxu0
        %v1566 = vadd.f32 %v1501, %v1565
        %v1567 = vpop.f32.mrb[0].mxu0
        %1568 = vmatprep.mubr.bf16.mxu0 %v909
        %1569 = vmatmul.mubr.bf16.gmra.mrb[0].mxu0 %v908
        %v1570 = vpop.f32.mrb[0].mxu0
        %v1571 = vadd.f32 %v1506, %v1570
        %v1572 = vpop.f32.mrb[0].mxu0
        %v1573 = vpop.f32.mrb[0].mxu0
        %v1574 = vadd.f32 %v1509, %v1573
        %v1575 = vpop.f32.mrb[0].mxu0
        %1576 = vmatprep.mubr.bf16.mxu0 %v918
        %1577 = vmatmul.mubr.bf16.gmra.mrb[0].mxu0 %v917
        %v1578 = vpop.f32.mrb[0].mxu0
        %v1579 = vadd.f32 %v1514, %v1578
        %v1580 = vpop.f32.mrb[0].mxu0
        %v1581 = vpop.f32.mrb[0].mxu0
        %v1582 = vadd.f32 %v1517, %v1581
        %v1583 = vpop.f32.mrb[0].mxu0
        %1584 = vdwg.mxu0
        %1585 = vmatprep.subr.bf16.mxu0 0
        %1586 = vmatpush1.bf16.msra.mxu0 %v1294
        %1587 = vmatprep.subr.bf16.mxu0 0
        %1588 = vmatpush1.bf16.msra.mxu0 %v1295
        %1589 = vmatprep.subr.bf16.mxu0 0
        %1590 = vmatpush1.bf16.msra.mxu0 %v1296
        %1591 = vmatprep.subr.bf16.mxu0 0
        %1592 = vmatpush1.bf16.msra.mxu0 %v1297
        %1593 = vmatprep.subr.bf16.mxu0 0
        %1594 = vmatpush1.bf16.msra.mxu0 %v1298
        %1595 = vmatprep.subr.bf16.mxu0 0
        %1596 = vmatpush1.bf16.msra.mxu0 %v1299
        %1597 = vmatprep.subr.bf16.mxu0 0
        %1598 = vmatpush1.bf16.msra.mxu0 %v1300
        %1599 = vmatprep.subr.bf16.mxu0 0
        %1600 = vmatpush1.bf16.msra.mxu0 %v1301
        %1601 = vmatprep.subr.bf16.mxu0 0
        %1602 = vmatpush1.bf16.msra.mxu0 %v1302
        %1603 = vmatprep.subr.bf16.mxu0 0
        %1604 = vmatpush1.bf16.msra.mxu0 %v1303
        %1605 = vmatprep.subr.bf16.mxu0 0
        %1606 = vmatpush1.bf16.msra.mxu0 %v1304
        %1607 = vmatprep.subr.bf16.mxu0 0
        %1608 = vmatpush1.bf16.msra.mxu0 %v1305
        %1609 = vmatprep.subr.bf16.mxu0 0
        %1610 = vmatpush1.bf16.msra.mxu0 %v1306
        %1611 = vmatprep.subr.bf16.mxu0 0
        %1612 = vmatpush1.bf16.msra.mxu0 %v1307
        %1613 = vmatprep.subr.bf16.mxu0 0
        %1614 = vmatpush1.bf16.msra.mxu0 %v1308
        %1615 = vmatprep.subr.bf16.mxu0 0
        %1616 = vmatpush1.bf16.msra.mxu0 %v1309
        %1617 = vmatprep.mubr.bf16.mxu0 %v893
        %1618 = vmatmul.mubr.bf16.gmra.mrb[0].mxu0 %v892
        %v1619 = vpop.f32.mrb[0].mxu0
        %v1620 = vadd.f32 %v1555, %v1619
        %v1621 = vpop.f32.mrb[0].mxu0
        %v1622 = vpop.f32.mrb[0].mxu0
        %v1623 = vadd.f32 %v1558, %v1622
        %v1624 = vpop.f32.mrb[0].mxu0
        %1625 = vmatprep.mubr.bf16.mxu0 %v902
        %1626 = vmatmul.mubr.bf16.gmra.mrb[0].mxu0 %v901
        %v1627 = vpop.f32.mrb[0].mxu0
        %v1628 = vadd.f32 %v1563, %v1627
        %v1629 = vpop.f32.mrb[0].mxu0
        %v1630 = vpop.f32.mrb[0].mxu0
        %v1631 = vadd.f32 %v1566, %v1630
        %v1632 = vpop.f32.mrb[0].mxu0
        %1633 = vmatprep.mubr.bf16.mxu0 %v911
        %1634 = vmatmul.mubr.bf16.gmra.mrb[0].mxu0 %v910
        %v1635 = vpop.f32.mrb[0].mxu0
        %v1636 = vadd.f32 %v1571, %v1635
        %v1637 = vpop.f32.mrb[0].mxu0
        %v1638 = vpop.f32.mrb[0].mxu0
        %v1639 = vadd.f32 %v1574, %v1638
        %v1640 = vpop.f32.mrb[0].mxu0
        %1641 = vmatprep.mubr.bf16.mxu0 %v920
        %1642 = vmatmul.mubr.bf16.gmra.mrb[0].mxu0 %v919
        %v1643 = vpop.f32.mrb[0].mxu0
        %v1644 = vadd.f32 %v1579, %v1643
        %v1645 = vpop.f32.mrb[0].mxu0
        %v1646 = vpop.f32.mrb[0].mxu0
        %v1647 = vadd.f32 %v1582, %v1646
        %v1648 = vpop.f32.mrb[0].mxu0
        %1649 = vdwg.mxu0
        %1650 = vmatprep.subr.bf16.mxu0 0
        %1651 = vmatpush1.bf16.msra.mxu0 %v1310
        %1652 = vmatprep.subr.bf16.mxu0 0
        %1653 = vmatpush1.bf16.msra.mxu0 %v1311
        %1654 = vmatprep.subr.bf16.mxu0 0
        %1655 = vmatpush1.bf16.msra.mxu0 %v1312
        %1656 = vmatprep.subr.bf16.mxu0 0
        %1657 = vmatpush1.bf16.msra.mxu0 %v1313
        %1658 = vmatprep.subr.bf16.mxu0 0
        %1659 = vmatpush1.bf16.msra.mxu0 %v1314
        %1660 = vmatprep.subr.bf16.mxu0 0
        %1661 = vmatpush1.bf16.msra.mxu0 %v1315
        %1662 = vmatprep.subr.bf16.mxu0 0
        %1663 = vmatpush1.bf16.msra.mxu0 %v1316
        %1664 = vmatprep.subr.bf16.mxu0 0
        %1665 = vmatpush1.bf16.msra.mxu0 %v1317
        %1666 = vmatprep.subr.bf16.mxu0 0
        %1667 = vmatpush1.bf16.msra.mxu0 0
        %1668 = vmatprep.subr.bf16.mxu0 0
        %1669 = vmatpush1.bf16.msra.mxu0 0
        %1670 = vmatprep.subr.bf16.mxu0 0
        %1671 = vmatpush1.bf16.msra.mxu0 0
        %1672 = vmatprep.subr.bf16.mxu0 0
        %1673 = vmatpush1.bf16.msra.mxu0 0
        %1674 = vmatprep.subr.bf16.mxu0 0
        %1675 = vmatpush1.bf16.msra.mxu0 0
        %1676 = vmatprep.subr.bf16.mxu0 0
        %1677 = vmatpush1.bf16.msra.mxu0 0
        %1678 = vmatprep.subr.bf16.mxu0 0
        %1679 = vmatpush1.bf16.msra.mxu0 0
        %1680 = vmatprep.subr.bf16.mxu0 0
        %1681 = vmatpush1.bf16.msra.mxu0 0
        %1682 = vmatprep.mubr.bf16.mxu0 0
        %1683 = vmatmul.mubr.bf16.gmra.mrb[0].mxu0 %v894
        %v1684 = vpop.f32.mrb[0].mxu0
        %v1685 = vadd.f32 %v1620, %v1684
        %v1686 = vpop.f32.mrb[0].mxu0
        %v1687 = vpop.f32.mrb[0].mxu0
        %v1688 = vadd.f32 %v1623, %v1687
        %v1689 = vpop.f32.mrb[0].mxu0
        %1690 = vmatprep.mubr.bf16.mxu0 0
        %1691 = vmatmul.mubr.bf16.gmra.mrb[0].mxu0 %v903
        %v1692 = vpop.f32.mrb[0].mxu0
        %v1693 = vadd.f32 %v1628, %v1692
        %v1694 = vpop.f32.mrb[0].mxu0
        %v1695 = vpop.f32.mrb[0].mxu0
        %v1696 = vadd.f32 %v1631, %v1695
        %v1697 = vpop.f32.mrb[0].mxu0
        %1698 = vmatprep.mubr.bf16.mxu0 0
        %1699 = vmatmul.mubr.bf16.gmra.mrb[0].mxu0 %v912
        %v1700 = vpop.f32.mrb[0].mxu0
        %v1701 = vadd.f32 %v1636, %v1700
        %v1702 = vpop.f32.mrb[0].mxu0
        %v1703 = vpop.f32.mrb[0].mxu0
        %v1704 = vadd.f32 %v1639, %v1703
        %v1705 = vpop.f32.mrb[0].mxu0
        %1706 = vmatprep.mubr.bf16.mxu0 0
        %1707 = vmatmul.mubr.bf16.gmra.mrb[0].mxu0 %v921
        %v1708 = vpop.f32.mrb[0].mxu0
        %v1709 = vadd.f32 %v1644, %v1708
        %v1710 = vpop.f32.mrb[0].mxu0
        %v1711 = vpop.f32.mrb[0].mxu0
        %v1712 = vadd.f32 %v1647, %v1711
        %v1713 = vpop.f32.mrb[0].mxu0
        %1714 = vdwg.mxu0
        %v1715 = vld [vmem:[%s2] sm:$0x1]
        %v1717 = vlaneseq
        %v1718 = vshrl.u32 %v1717, 7
        %v1719 = vsub.s32 0, %v1718
        %v1720 = vrot.slane %v1715, %v1719
        %v1722 = vmul.f32 %v1685, %v1720
        %v1723 = vmul.f32 %v1688, %v1720
        %v1724 = vmul.f32 %v1693, %v1720
        %v1725 = vmul.f32 %v1696, %v1720
        %v1726 = vmul.f32 %v1701, %v1720
        %v1727 = vmul.f32 %v1704, %v1720
        %v1728 = vmul.f32 %v1709, %v1720
        %v1729 = vmul.f32 %v1712, %v1720
        %v1730 = vld [vmem:[%s3] sm:$0x1]
        %v1732 = vlaneseq
        %v1733 = vshrl.u32 %v1732, 7
        %v1734 = vsub.s32 0, %v1733
        %v1735 = vrot.slane %v1730, %v1734
        %v1737 = vadd.f32 %v1722, %v1735
        %v1738 = vadd.f32 %v1723, %v1735
        %v1739 = vadd.f32 %v1724, %v1735
        %v1740 = vadd.f32 %v1725, %v1735
        %v1741 = vadd.f32 %v1726, %v1735
        %v1742 = vadd.f32 %v1727, %v1735
        %v1743 = vadd.f32 %v1728, %v1735
        %v1744 = vadd.f32 %v1729, %v1735
        %v1745 = vxor.u32 %v1737, 2147483648
        %v1746 = vxor.u32 %v1738, 2147483648
        %v1747 = vxor.u32 %v1739, 2147483648
        %v1748 = vxor.u32 %v1740, 2147483648
        %v1749 = vxor.u32 %v1741, 2147483648
        %v1750 = vxor.u32 %v1742, 2147483648
        %v1751 = vxor.u32 %v1743, 2147483648
        %v1752 = vxor.u32 %v1744, 2147483648
        %v1753 = vmul.f32 %v1745, 1.442695
        %v1754 = vpow.pop %v1753
        %v1755 = vmul.f32 %v1746, 1.442695
        %v1756 = vpow.pop %v1755
        %v1757 = vmul.f32 %v1747, 1.442695
        %v1758 = vpow.pop %v1757
        %v1759 = vmul.f32 %v1748, 1.442695
        %v1760 = vpow.pop %v1759
        %v1761 = vmul.f32 %v1749, 1.442695
        %v1762 = vpow.pop %v1761
        %v1763 = vmul.f32 %v1750, 1.442695
        %v1764 = vpow.pop %v1763
        %v1765 = vmul.f32 %v1751, 1.442695
        %v1766 = vpow.pop %v1765
        %v1767 = vmul.f32 %v1752, 1.442695
        %v1768 = vpow.pop %v1767
        %v1769 = vadd.f32 %v1754, 1.0
        %v1770 = vadd.f32 %v1756, 1.0
        %v1771 = vadd.f32 %v1758, 1.0
        %v1772 = vadd.f32 %v1760, 1.0
        %v1773 = vadd.f32 %v1762, 1.0
        %v1774 = vadd.f32 %v1764, 1.0
        %v1775 = vadd.f32 %v1766, 1.0
        %v1776 = vadd.f32 %v1768, 1.0
        %v1777 = vrcp.pop %v1769
        %v1778 = vmul.f32 1.0, %v1777
        %v1779 = vrcp.pop %v1770
        %v1780 = vmul.f32 1.0, %v1779
        %v1781 = vrcp.pop %v1771
        %v1782 = vmul.f32 1.0, %v1781
        %v1783 = vrcp.pop %v1772
        %v1784 = vmul.f32 1.0, %v1783
        %v1785 = vrcp.pop %v1773
        %v1786 = vmul.f32 1.0, %v1785
        %v1787 = vrcp.pop %v1774
        %v1788 = vmul.f32 1.0, %v1787
        %v1789 = vrcp.pop %v1775
        %v1790 = vmul.f32 1.0, %v1789
        %v1791 = vrcp.pop %v1776
        %v1792 = vmul.f32 1.0, %v1791
        %v1793 = vmul.f32 %v1737, %v1778
        %v1794 = vmul.f32 %v1738, %v1780
        %v1795 = vmul.f32 %v1739, %v1782
        %v1796 = vmul.f32 %v1740, %v1784
        %v1797 = vmul.f32 %v1741, %v1786
        %v1798 = vmul.f32 %v1742, %v1788
        %v1799 = vmul.f32 %v1743, %v1790
        %v1800 = vmul.f32 %v1744, %v1792
        %v1801 = vadd.f32 %v1793, %v1794
        %v1802 = vadd.f32 %v1801, %v1795
        %v1803 = vadd.f32 %v1802, %v1796
        %v1804 = vadd.f32 %v1803, %v1797
        %v1805 = vadd.f32 %v1804, %v1798
        %v1806 = vadd.f32 %v1805, %v1799
        %v1807 = vadd.f32 %v1806, %v1800
        %v1808 = vrot.slane %v1807, 4
        %v1809 = vadd.f32 %v1807, %v1808
        %v1810 = vrot.slane %v1809, 2
        %v1811 = vadd.f32 %v1809, %v1810
        %v1812 = vrot.slane %v1811, 1
        %v1813 = vadd.f32 %v1811, %v1812
        %v1814 = vadd.f32 %v1813, 0.0
        %v1815 = vpack.c.bf16 %v1794, %v1793
        %v1816 = vpack.c.bf16 %v1796, %v1795
        %v1817 = vpack.c.bf16 %v1798, %v1797
        %v1818 = vpack.c.bf16 %v1800, %v1799
        %v1823 = vunpack.c.l.b16 %v1815
        %v1824 = vunpack.c.h.b16 %v1815
        %v1825 = vunpack.c.l.b16 %v1816
        %v1826 = vunpack.c.h.b16 %v1816
        %v1827 = vunpack.c.l.b16 %v1817
        %v1828 = vunpack.c.h.b16 %v1817
        %v1829 = vunpack.c.l.b16 %v1818
        %v1830 = vunpack.c.h.b16 %v1818
        %v1831 = vpack.c.b16 %v1823, %v1823
        %v1832 = vpack.c.b16 %v1824, %v1824
        %v1833 = vpack.c.b16 %v1825, %v1825
        %v1834 = vpack.c.b16 %v1826, %v1826
        %v1835 = vpack.c.b16 %v1827, %v1827
        %v1836 = vpack.c.b16 %v1828, %v1828
        %v1837 = vpack.c.b16 %v1829, %v1829
        %v1838 = vpack.c.b16 %v1830, %v1830
        %1847 = vst [vmem:[%s234] sm:$0xf] %v1831
        %1848 = vst [vmem:[%s234 + $0x4] sm:$0xf] %v1832
        %1849 = vst [vmem:[%s234 + $0x8] sm:$0xf] %v1833
        %1850 = vst [vmem:[%s234 + $0xc] sm:$0xf] %v1834
        %1851 = vst [vmem:[%s234 + $0x10] sm:$0xf] %v1835
        %1852 = vst [vmem:[%s234 + $0x14] sm:$0xf] %v1836
        %1853 = vst [vmem:[%s234 + $0x18] sm:$0xf] %v1837
        %1854 = vst [vmem:[%s234 + $0x1c] sm:$0xf] %v1838
        %1855 = vst [vmem:[%s224] sm:$0x1] %v1814
        %p1856 = scmp.lt.s32.totalorder %s20, 1
        %s1857 = scalar_select %p1856, %s20, 1
        %s1858 = smul.addr %s1857, 8
        %s1859 = smul.addr %s1858, 4
        %s1860 = scalar_lea.vmem %s4, %s1859
        %s1861 = sand.u32 %s143, 1
        %s1862 = scalar_lea.sflag [#allocation3], %s1861
        %s1863 = sand.u32 %s143, 1
        %s1864 = scalar_lea.vmem [#allocation2], %s1863
        // Predicated region
        $region37: #{_lambda_.6} parent=35 // pred_check
          %p1865 = pneg %p127
        $region38: #{_lambda_.6} parent=35 // pred_check_branch
          %1867 = sbr.rel (%p1865) target = $region40
        $region39: #{_lambda_.6} parent=35 // pred_region
          _
        $region40: #{_lambda_.6} parent=35 // pred_fallthru
          _
        // Predicated region
        $region41: #{_lambda_.6} parent=35 // pred_check
          %p1868 = pneg %p153
        $region42: #{_lambda_.6} parent=35 // pred_check_branch
          %1870 = sbr.rel (%p1868) target = $region44
        $region43: #{_lambda_.6} parent=35 // pred_region
          %s1872 = ssub.s32 16, 16
          %1873 = vsyncadd %s1862, %s1872
          %s1874 = smul.addr %s20, 16
          %s1875 = scalar_lea.hbm %s5, %s1874
          %s1877 = sshll.u32 %s1864, 4
          %s1878 = int_to_ptr.vmem [resolvable:$true] %s1877
          %1880 = dma.vmem_to_hbm [thread:$0]  %s1878, 16, %s1875, %s1862
        $region44: #{_lambda_.6} parent=35 // pred_fallthru
          _
      $region36: #{_lambda_.6} parent=5 // pred_fallthru
        _
      %p1881 = scmp.le.s32.totalorder 2, %s15
      // Predicated region
      $region45: #{_lambda_.6} parent=5 // pred_check
        %p1882 = pneg %p1881
      $region46: #{_lambda_.6} parent=5 // pred_check_branch
        %1884 = sbr.rel (%p1882) target = $region48
      $region47: #{_lambda_.6} parent=5 // pred_region
        %s1885 = ssub.s32 %s15, 2
        // Predicated region
        $region49: #{_lambda_.6} parent=47 // pred_check
          %p1886 = pneg %p133
        $region50: #{_lambda_.6} parent=47 // pred_check_branch
          %1888 = sbr.rel (%p1886) target = $region52
        $region51: #{_lambda_.6} parent=47 // pred_region
          %p1889 = scmp.lt.s32.totalorder %s21, 1
          %s1890 = scalar_select %p1889, %s21, 1
          %s1891 = smul.addr %s1890, 8
          %s1892 = smul.addr %s1891, 4
          %s1893 = scalar_lea.vmem %s4, %s1892
        $region52: #{_lambda_.6} parent=47 // pred_fallthru
          _
        // Predicated region
        $region53: #{_lambda_.6} parent=47 // pred_check
          %p1894 = pneg %p159
        $region54: #{_lambda_.6} parent=47 // pred_check_branch
          %1896 = sbr.rel (%p1894) target = $region56
        $region55: #{_lambda_.6} parent=47 // pred_region
          %s1897 = sand.u32 %s144, 1
          %s1898 = scalar_lea.sflag [#allocation3], %s1897
          %s1899 = sand.u32 %s144, 1
          %s1900 = scalar_lea.vmem [#allocation2], %s1899
          %1901 = dma.done %s1898, 16
        $region56: #{_lambda_.6} parent=47 // pred_fallthru
          _
      $region48: #{_lambda_.6} parent=5 // pred_fallthru
        _
    $region6: #{_lambda_.6} parent=1 // loop_footer
      %s19 = sadd.s32 1, %s15
    $region7: #{_lambda_.6} parent=1 // loop_footer_branch
      %14 = sbr.rel target = $region3
    $region8: #{_lambda_.6} parent=1 // loop_exit
      _
    %1902 = vsyncpa [#allocation3], 1
    %s1903 = scalar_lea.sflag [#allocation3], 1
    %1904 = vsyncpa %s1903, 1

// kernel: _lambda_.9
$region0: #{_lambda_.9}
  #allocation0 [shape = 'u32[]', space=smem, size = 0x4, offset = 0x4, fixed_abs, tag = 'smem constant byte address 0x4 - core index']
  #allocation1 [shape = 'u32[144,128]{1,0:T(1,128)}', space=vmem, size = 0x12000, scoped, tag = 'internal scratch']
  %s0 = inlined_call_operand.vmem [shape: bf16[128,128], index: 0, kind: input, shape index: {}]
  %s1 = inlined_call_operand.vmem [shape: bf16[128,128], index: 1, kind: input, shape index: {}]
  %s2 = inlined_call_operand.vmem [shape: bf16[128,128], index: 2, kind: input, shape index: {}]
  %s3 = inlined_call_operand.vmem [shape: bf16[128,128], index: 3, kind: input, shape index: {}]
  %s4 = inlined_call_operand.vmem [shape: f32[1,128], index: 4, kind: input, shape index: {}]
  %s5 = inlined_call_operand.vmem [shape: f32[1,128], index: 5, kind: input, shape index: {}]
  %s6 = inlined_call_operand.vmem [shape: bf16[128,128], index: 6, kind: output, shape index: {}]
  %s7 = sld [smem:[#allocation0]]
  $region57: #{_lambda_.9} parent=0
    _
  %s9 = ssub.s32 1, %s7
  %s10 = scalar_select 0, %s9, %s7
  loop: start=0, step=1, limit=4
  $region2: #{_lambda_.9} parent=0 // loop_pre_header
    _
  $region3: #{_lambda_.9} parent=0 // loop_header
    %s12 = sphi 0, %s16
    %p13 = scmp.ge.s32.totalorder %s12, 4
    %s22 = sphi 0, %s24
    %s25 = sphi 0, %s22
    %s26 = sphi 0, %s25
    %s42 = sphi 0, %s26
    %s48 = sphi 0, %s50
    %s51 = sphi 0, %s48
    %s52 = sphi 0, %s51
    %s68 = sphi 0, %s52
    %s72 = sphi 0, %s72
    %s74 = sphi 0, %s72
    %s75 = sphi 0, %s74
    %s89 = sphi 0, %s75
    %s93 = sphi 0, %s93
    %s95 = sphi 0, %s93
    %s96 = sphi 0, %s95
    %s110 = sphi 0, %s96
    %s114 = sphi 0, %s114
    %s116 = sphi 0, %s114
    %s117 = sphi 0, %s116
    %s131 = sphi 0, %s117
    %s135 = sphi 0, %s135
    %s137 = sphi 0, %s135
    %s138 = sphi 0, %s137
    %s152 = sphi 0, %s138
    %s158 = sphi 0, %s160
    %s161 = sphi 0, %s158
    %s162 = sphi 0, %s161
    %s178 = sphi 0, %s162
  $region4: #{_lambda_.9} parent=0 // loop_header_branch
    %15 = sbr.rel (%p13) target = $region8
  $region5: #{_lambda_.9} parent=0 // loop_body
    %s17 = ssub.s32 %s12, 1
    %s18 = ssub.s32 %s12, 2
    %s19 = sadd.s32 %s12, 1
    %s20 = ssub.s32 %s12, %s19
    %p21 = scmp.eq.s32.totalorder %s20, 0
    %s23 = sadd.s32 %s22, 1
    %s24 = scalar_select %p21, %s22, %s23
    %p27 = pneg %p21
    %p28 = scmp.eq.s32.totalorder %s12, 1
    %p29 = por %p27, %p28
    %p30 = scmp.ne.s32.totalorder %s22, %s25
    %p31 = scmp.eq.s32.totalorder %s12, 0
    %p32 = por %p30, %p31
    %p33 = scmp.ne.s32.totalorder %s22, %s25
    %p34 = scmp.eq.s32.totalorder %s17, 1
    %p35 = por %p33, %p34
    %p36 = scmp.ne.s32.totalorder %s25, %s26
    %p37 = scmp.eq.s32.totalorder %s17, 0
    %p38 = por %p36, %p37
    %p39 = scmp.ne.s32.totalorder %s25, %s26
    %p40 = scmp.eq.s32.totalorder %s18, 1
    %p41 = por %p39, %p40
    %p43 = scmp.ne.s32.totalorder %s26, %s42
    %p44 = scmp.eq.s32.totalorder %s18, 0
    %p45 = por %p43, %p44
    %s46 = ssub.s32 %s12, %s19
    %p47 = scmp.eq.s32.totalorder %s46, 0
    %s49 = sadd.s32 %s48, 1
    %s50 = scalar_select %p47, %s48, %s49
    %p53 = pneg %p47
    %p54 = scmp.eq.s32.totalorder %s12, 1
    %p55 = por %p53, %p54
    %p56 = scmp.ne.s32.totalorder %s48, %s51
    %p57 = scmp.eq.s32.totalorder %s12, 0
    %p58 = por %p56, %p57
    %p59 = scmp.ne.s32.totalorder %s48, %s51
    %p60 = scmp.eq.s32.totalorder %s17, 1
    %p61 = por %p59, %p60
    %p62 = scmp.ne.s32.totalorder %s51, %s52
    %p63 = scmp.eq.s32.totalorder %s17, 0
    %p64 = por %p62, %p63
    %p65 = scmp.ne.s32.totalorder %s51, %s52
    %p66 = scmp.eq.s32.totalorder %s18, 1
    %p67 = por %p65, %p66
    %p69 = scmp.ne.s32.totalorder %s52, %s68
    %p70 = scmp.eq.s32.totalorder %s18, 0
    %p71 = por %p69, %p70
    %s73 = sadd.s32 %s72, 1
    %p76 = scmp.eq.s32.totalorder %s12, 1
    %p77 = scmp.ne.s32.totalorder %s72, %s74
    %p78 = scmp.eq.s32.totalorder %s12, 0
    %p79 = por %p77, %p78
    %p80 = scmp.ne.s32.totalorder %s72, %s74
    %p81 = scmp.eq.s32.totalorder %s17, 1
    %p82 = por %p80, %p81
    %p83 = scmp.ne.s32.totalorder %s74, %s75
    %p84 = scmp.eq.s32.totalorder %s17, 0
    %p85 = por %p83, %p84
    %p86 = scmp.ne.s32.totalorder %s74, %s75
    %p87 = scmp.eq.s32.totalorder %s18, 1
    %p88 = por %p86, %p87
    %p90 = scmp.ne.s32.totalorder %s75, %s89
    %p91 = scmp.eq.s32.totalorder %s18, 0
    %p92 = por %p90, %p91
    %s94 = sadd.s32 %s93, 1
    %p97 = scmp.eq.s32.totalorder %s12, 1
    %p98 = scmp.ne.s32.totalorder %s93, %s95
    %p99 = scmp.eq.s32.totalorder %s12, 0
    %p100 = por %p98, %p99
    %p101 = scmp.ne.s32.totalorder %s93, %s95
    %p102 = scmp.eq.s32.totalorder %s17, 1
    %p103 = por %p101, %p102
    %p104 = scmp.ne.s32.totalorder %s95, %s96
    %p105 = scmp.eq.s32.totalorder %s17, 0
    %p106 = por %p104, %p105
    %p107 = scmp.ne.s32.totalorder %s95, %s96
    %p108 = scmp.eq.s32.totalorder %s18, 1
    %p109 = por %p107, %p108
    %p111 = scmp.ne.s32.totalorder %s96, %s110
    %p112 = scmp.eq.s32.totalorder %s18, 0
    %p113 = por %p111, %p112
    %s115 = sadd.s32 %s114, 1
    %p118 = scmp.eq.s32.totalorder %s12, 1
    %p119 = scmp.ne.s32.totalorder %s114, %s116
    %p120 = scmp.eq.s32.totalorder %s12, 0
    %p121 = por %p119, %p120
    %p122 = scmp.ne.s32.totalorder %s114, %s116
    %p123 = scmp.eq.s32.totalorder %s17, 1
    %p124 = por %p122, %p123
    %p125 = scmp.ne.s32.totalorder %s116, %s117
    %p126 = scmp.eq.s32.totalorder %s17, 0
    %p127 = por %p125, %p126
    %p128 = scmp.ne.s32.totalorder %s116, %s117
    %p129 = scmp.eq.s32.totalorder %s18, 1
    %p130 = por %p128, %p129
    %p132 = scmp.ne.s32.totalorder %s117, %s131
    %p133 = scmp.eq.s32.totalorder %s18, 0
    %p134 = por %p132, %p133
    %s136 = sadd.s32 %s135, 1
    %p139 = scmp.eq.s32.totalorder %s12, 1
    %p140 = scmp.ne.s32.totalorder %s135, %s137
    %p141 = scmp.eq.s32.totalorder %s12, 0
    %p142 = por %p140, %p141
    %p143 = scmp.ne.s32.totalorder %s135, %s137
    %p144 = scmp.eq.s32.totalorder %s17, 1
    %p145 = por %p143, %p144
    %p146 = scmp.ne.s32.totalorder %s137, %s138
    %p147 = scmp.eq.s32.totalorder %s17, 0
    %p148 = por %p146, %p147
    %p149 = scmp.ne.s32.totalorder %s137, %s138
    %p150 = scmp.eq.s32.totalorder %s18, 1
    %p151 = por %p149, %p150
    %p153 = scmp.ne.s32.totalorder %s138, %s152
    %p154 = scmp.eq.s32.totalorder %s18, 0
    %p155 = por %p153, %p154
    %s156 = ssub.s32 %s12, %s19
    %p157 = scmp.eq.s32.totalorder %s156, 0
    %s159 = sadd.s32 %s158, 1
    %s160 = scalar_select %p157, %s158, %s159
    %p163 = pneg %p157
    %p164 = scmp.eq.s32.totalorder %s12, 1
    %p165 = por %p163, %p164
    %p166 = scmp.ne.s32.totalorder %s158, %s161
    %p167 = scmp.eq.s32.totalorder %s12, 0
    %p168 = por %p166, %p167
    %p169 = scmp.ne.s32.totalorder %s158, %s161
    %p170 = scmp.eq.s32.totalorder %s17, 1
    %p171 = por %p169, %p170
    %p172 = scmp.ne.s32.totalorder %s161, %s162
    %p173 = scmp.eq.s32.totalorder %s17, 0
    %p174 = por %p172, %p173
    %p175 = scmp.ne.s32.totalorder %s161, %s162
    %p176 = scmp.eq.s32.totalorder %s18, 1
    %p177 = por %p175, %p176
    %p179 = scmp.ne.s32.totalorder %s162, %s178
    %p180 = scmp.eq.s32.totalorder %s18, 0
    %p181 = por %p179, %p180
    %p182 = scmp.le.s32.totalorder 1, %s12
    %p183 = scmp.lt.s32.totalorder %s12, 3
    %p184 = pnand %p182, %p183
    %p185 = pneg %p184
    // Predicated region
    $region9: #{_lambda_.9} parent=5 // pred_check
      _
    $region10: #{_lambda_.9} parent=5 // pred_check_branch
      %187 = sbr.rel (%p184) target = $region12
    $region11: #{_lambda_.9} parent=5 // pred_region
      %s188 = ssub.s32 %s12, 1
      // Predicated region
      $region13: #{_lambda_.9} parent=11 // pred_check
        %p189 = pneg %p85
      $region14: #{_lambda_.9} parent=11 // pred_check_branch
        %191 = sbr.rel (%p189) target = $region16
      $region15: #{_lambda_.9} parent=11 // pred_region
        _
      $region16: #{_lambda_.9} parent=11 // pred_fallthru
        _
      // Predicated region
      $region17: #{_lambda_.9} parent=11 // pred_check
        %p192 = pneg %p106
      $region18: #{_lambda_.9} parent=11 // pred_check_branch
        %194 = sbr.rel (%p192) target = $region20
      $region19: #{_lambda_.9} parent=11 // pred_region
        _
      $region20: #{_lambda_.9} parent=11 // pred_fallthru
        _
      // Predicated region
      $region21: #{_lambda_.9} parent=11 // pred_check
        %p195 = pneg %p127
      $region22: #{_lambda_.9} parent=11 // pred_check_branch
        %197 = sbr.rel (%p195) target = $region24
      $region23: #{_lambda_.9} parent=11 // pred_region
        _
      $region24: #{_lambda_.9} parent=11 // pred_fallthru
        _
      // Predicated region
      $region25: #{_lambda_.9} parent=11 // pred_check
        %p198 = pneg %p148
      $region26: #{_lambda_.9} parent=11 // pred_check_branch
        %200 = sbr.rel (%p198) target = $region28
      $region27: #{_lambda_.9} parent=11 // pred_region
        _
      $region28: #{_lambda_.9} parent=11 // pred_fallthru
        _
    $region12: #{_lambda_.9} parent=5 // pred_fallthru
      _
    %p201 = scmp.lt.s32.totalorder %s12, 2
    // Predicated region
    $region29: #{_lambda_.9} parent=5 // pred_check
      %p202 = pneg %p201
    $region30: #{_lambda_.9} parent=5 // pred_check_branch
      %204 = sbr.rel (%p202) target = $region32
    $region31: #{_lambda_.9} parent=5 // pred_region
      // Predicated region
      $region33: #{_lambda_.9} parent=31 // pred_check
        %p205 = pneg %p32
      $region34: #{_lambda_.9} parent=31 // pred_check_branch
        %207 = sbr.rel (%p205) target = $region36
      $region35: #{_lambda_.9} parent=31 // pred_region
        %s208 = smul.u32 8, %s12
        %p209 = scmp.lt.s32.totalorder %s208, 15
        %s210 = scalar_select %p209, %s208, 15
        %s211 = smul.addr %s210, 4
        %s212 = scalar_lea.vmem %s0, %s211
        %s213 = smul.u32 8, %s12
      $region36: #{_lambda_.9} parent=31 // pred_fallthru
        _
      // Predicated region
      $region37: #{_lambda_.9} parent=31 // pred_check
        %p214 = pneg %p58
      $region38: #{_lambda_.9} parent=31 // pred_check_branch
        %216 = sbr.rel (%p214) target = $region40
      $region39: #{_lambda_.9} parent=31 // pred_region
        %s217 = smul.u32 8, %s12
        %p218 = scmp.lt.s32.totalorder %s217, 15
        %s219 = scalar_select %p218, %s217, 15
        %s220 = smul.addr %s219, 4
        %s221 = scalar_lea.vmem %s1, %s220
        %s222 = smul.u32 8, %s12
      $region40: #{_lambda_.9} parent=31 // pred_fallthru
        _
    $region32: #{_lambda_.9} parent=5 // pred_fallthru
      _
    %p223 = scmp.le.s32.totalorder 1, %s12
    %p224 = scmp.lt.s32.totalorder %s12, 3
    %p225 = pnand %p223, %p224
    %p226 = pneg %p225
    // Predicated region
    $region41: #{_lambda_.9} parent=5 // pred_check
      _
    $region42: #{_lambda_.9} parent=5 // pred_check_branch
      %228 = sbr.rel (%p225) target = $region44
    $region43: #{_lambda_.9} parent=5 // pred_region
      %s229 = ssub.s32 %s12, 1
      %s230 = smul.u32 8, %s17
      %p231 = scmp.lt.s32.totalorder %s230, 15
      %s232 = scalar_select %p231, %s230, 15
      %s233 = smul.addr %s232, 4
      %s234 = scalar_lea.vmem %s0, %s233
      %p235 = pneg %p38
      %p236 = pneg %p35
      %s237 = smul.u32 8, %s17
      %p238 = scmp.lt.s32.totalorder %s237, 15
      %s239 = scalar_select %p238, %s237, 15
      %s240 = smul.addr %s239, 4
      %s241 = scalar_lea.vmem %s1, %s240
      %p242 = pneg %p64
      %p243 = pneg %p61
      %p244 = pneg %p85
      %p245 = pneg %p82
      %p246 = pneg %p106
      %p247 = pneg %p103
      %p248 = pneg %p127
      %p249 = pneg %p124
      %p250 = pneg %p148
      %p251 = pneg %p145
      %p252 = pneg %p174
      %p253 = pneg %p171
      %s254 = smul.u32 8, %s17
      %p255 = scmp.lt.s32.totalorder %s254, 15
      %s256 = scalar_select %p255, %s254, 15
      %s257 = smul.addr %s256, 4
      %s258 = scalar_lea.vmem %s6, %s257
      %s259 = smul.u32 8, %s17
      %p260 = scmp.lt.s32.totalorder %s259, 15
      %s261 = scalar_select %p260, %s259, 15
      %s262 = smul.addr %s261, 4
      %s263 = scalar_lea.vmem %s0, %s262
      %s264 = smul.u32 8, %s17
      %s265 = smul.u32 8, %s17
      %p266 = scmp.lt.s32.totalorder %s265, 15
      %s267 = scalar_select %p266, %s265, 15
      %s268 = smul.addr %s267, 4
      %s269 = scalar_lea.vmem %s1, %s268
      %s270 = smul.u32 8, %s17
      %s271 = smul.u32 8, %s17
      %p272 = scmp.lt.s32.totalorder %s271, 15
      %s273 = scalar_select %p272, %s271, 15
      %s274 = smul.addr %s273, 4
      %s275 = scalar_lea.vmem %s6, %s274
      %s276 = smul.u32 8, %s17
      %v278 = vld [vmem:[%s263] sm:$0xf]
      %v279 = vld [vmem:[%s263 + $0x4] sm:$0xf]
      %v280 = vld [vmem:[%s263 + $0x8] sm:$0xf]
      %v281 = vld [vmem:[%s263 + $0xc] sm:$0xf]
      %v282 = vld [vmem:[%s263 + $0x10] sm:$0xf]
      %v283 = vld [vmem:[%s263 + $0x14] sm:$0xf]
      %v284 = vld [vmem:[%s263 + $0x18] sm:$0xf]
      %v285 = vld [vmem:[%s263 + $0x1c] sm:$0xf]
      %v286 = vld [vmem:[%s2] sm:$0xf]
      %v287 = vld [vmem:[%s2 + $0x4] sm:$0xf]
      %v288 = vld [vmem:[%s2 + $0x8] sm:$0xf]
      %v289 = vld [vmem:[%s2 + $0xc] sm:$0xf]
      %v290 = vld [vmem:[%s2 + $0x10] sm:$0xf]
      %v291 = vld [vmem:[%s2 + $0x14] sm:$0xf]
      %v292 = vld [vmem:[%s2 + $0x18] sm:$0xf]
      %v293 = vld [vmem:[%s2 + $0x1c] sm:$0xf]
      %v294 = vld [vmem:[%s2 + $0x20] sm:$0xf]
      %v295 = vld [vmem:[%s2 + $0x24] sm:$0xf]
      %v296 = vld [vmem:[%s2 + $0x28] sm:$0xf]
      %v297 = vld [vmem:[%s2 + $0x2c] sm:$0xf]
      %v298 = vld [vmem:[%s2 + $0x30] sm:$0xf]
      %v299 = vld [vmem:[%s2 + $0x34] sm:$0xf]
      %v300 = vld [vmem:[%s2 + $0x38] sm:$0xf]
      %v301 = vld [vmem:[%s2 + $0x3c] sm:$0xf]
      %v302 = vld [vmem:[%s269] sm:$0xf]
      %v303 = vld [vmem:[%s269 + $0x4] sm:$0xf]
      %v304 = vld [vmem:[%s269 + $0x8] sm:$0xf]
      %v305 = vld [vmem:[%s269 + $0xc] sm:$0xf]
      %v306 = vld [vmem:[%s269 + $0x10] sm:$0xf]
      %v307 = vld [vmem:[%s269 + $0x14] sm:$0xf]
      %v308 = vld [vmem:[%s269 + $0x18] sm:$0xf]
      %v309 = vld [vmem:[%s269 + $0x1c] sm:$0xf]
      %v310 = vld [vmem:[%s3] sm:$0xf]
      %v311 = vld [vmem:[%s3 + $0x4] sm:$0xf]
      %v312 = vld [vmem:[%s3 + $0x8] sm:$0xf]
      %v313 = vld [vmem:[%s3 + $0xc] sm:$0xf]
      %v314 = vld [vmem:[%s3 + $0x10] sm:$0xf]
      %v315 = vld [vmem:[%s3 + $0x14] sm:$0xf]
      %v316 = vld [vmem:[%s3 + $0x18] sm:$0xf]
      %v317 = vld [vmem:[%s3 + $0x1c] sm:$0xf]
      %v318 = vld [vmem:[%s3 + $0x20] sm:$0xf]
      %v319 = vld [vmem:[%s3 + $0x24] sm:$0xf]
      %v320 = vld [vmem:[%s3 + $0x28] sm:$0xf]
      %v321 = vld [vmem:[%s3 + $0x2c] sm:$0xf]
      %v322 = vld [vmem:[%s3 + $0x30] sm:$0xf]
      %v323 = vld [vmem:[%s3 + $0x34] sm:$0xf]
      %v324 = vld [vmem:[%s3 + $0x38] sm:$0xf]
      %v325 = vld [vmem:[%s3 + $0x3c] sm:$0xf]
      %v334 = vunpack.c.l.b16 %v302
      %v335 = vunpack.c.l.b16 %v303
      %v336 = vunpack.c.l.b16 %v304
      %v337 = vunpack.c.l.b16 %v305
      %v338 = vunpack.c.l.b16 %v306
      %v339 = vunpack.c.l.b16 %v307
      %v340 = vunpack.c.l.b16 %v308
      %v341 = vunpack.c.l.b16 %v309
      %v342 = vpack.c.b16 %v335, %v334
      %v343 = vpack.c.b16 %v337, %v336
      %v344 = vpack.c.b16 %v339, %v338
      %v345 = vpack.c.b16 %v341, %v340
      %v366 = vunpack.c.l.b16 %v310
      %v367 = vunpack.c.l.b16 %v311
      %v368 = vunpack.c.l.b16 %v312
      %v369 = vunpack.c.l.b16 %v313
      %v370 = vunpack.c.l.b16 %v314
      %v371 = vunpack.c.l.b16 %v315
      %v372 = vunpack.c.l.b16 %v316
      %v373 = vunpack.c.l.b16 %v317
      %v374 = vunpack.c.l.b16 %v318
      %v375 = vunpack.c.l.b16 %v319
      %v376 = vunpack.c.l.b16 %v320
      %v377 = vunpack.c.l.b16 %v321
      %v378 = vunpack.c.l.b16 %v322
      %v379 = vunpack.c.l.b16 %v323
      %v380 = vunpack.c.l.b16 %v324
      %v381 = vunpack.c.l.b16 %v325
      %v382 = vpack.c.b16 %v367, %v366
      %v383 = vpack.c.b16 %v369, %v368
      %v384 = vpack.c.b16 %v371, %v370
      %v385 = vpack.c.b16 %v373, %v372
      %v386 = vpack.c.b16 %v375, %v374
      %v387 = vpack.c.b16 %v377, %v376
      %v388 = vpack.c.b16 %v379, %v378
      %v389 = vpack.c.b16 %v381, %v380
      %398 = vmatprep.subr.bf16.mxu0 0
      %399 = vmatpush1.bf16.msra.mxu0 %v382
      %400 = vmatprep.subr.bf16.mxu0 0
      %401 = vmatpush1.bf16.msra.mxu0 %v383
      %402 = vmatprep.subr.bf16.mxu0 0
      %403 = vmatpush1.bf16.msra.mxu0 %v384
      %404 = vmatprep.subr.bf16.mxu0 0
      %405 = vmatpush1.bf16.msra.mxu0 %v385
      %406 = vmatprep.subr.bf16.mxu0 0
      %407 = vmatpush1.bf16.msra.mxu0 %v386
      %408 = vmatprep.subr.bf16.mxu0 0
      %409 = vmatpush1.bf16.msra.mxu0 %v387
      %410 = vmatprep.subr.bf16.mxu0 0
      %411 = vmatpush1.bf16.msra.mxu0 %v388
      %412 = vmatprep.subr.bf16.mxu0 0
      %413 = vmatpush1.bf16.msra.mxu0 %v389
      %414 = vmatprep.subr.bf16.mxu0 0
      %415 = vmatpush1.bf16.msra.mxu0 0
      %416 = vmatprep.subr.bf16.mxu0 0
      %417 = vmatpush1.bf16.msra.mxu0 0
      %418 = vmatprep.subr.bf16.mxu0 0
      %419 = vmatpush1.bf16.msra.mxu0 0
      %420 = vmatprep.subr.bf16.mxu0 0
      %421 = vmatpush1.bf16.msra.mxu0 0
      %422 = vmatprep.subr.bf16.mxu0 0
      %423 = vmatpush1.bf16.msra.mxu0 0
      %424 = vmatprep.subr.bf16.mxu0 0
      %425 = vmatpush1.bf16.msra.mxu0 0
      %426 = vmatprep.subr.bf16.mxu0 0
      %427 = vmatpush1.bf16.msra.mxu0 0
      %428 = vmatprep.subr.bf16.mxu0 0
      %429 = vmatpush1.bf16.msra.mxu0 0
      %430 = vmatprep.mubr.bf16.mxu0 0
      %431 = vmatmul.mubr.bf16.gmra.mrb[0].mxu0 %v342
      %v432 = vpop.f32.mrb[0].mxu0
      %v433 = vadd.f32 0.0, %v432
      %v434 = vpop.f32.mrb[0].mxu0
      %v435 = vpop.f32.mrb[0].mxu0
      %v436 = vadd.f32 0.0, %v435
      %v437 = vpop.f32.mrb[0].mxu0
      %438 = vmatprep.mubr.bf16.mxu0 0
      %439 = vmatmul.mubr.bf16.gmra.mrb[0].mxu0 %v343
      %v440 = vpop.f32.mrb[0].mxu0
      %v441 = vadd.f32 0.0, %v440
      %v442 = vpop.f32.mrb[0].mxu0
      %v443 = vpop.f32.mrb[0].mxu0
      %v444 = vadd.f32 0.0, %v443
      %v445 = vpop.f32.mrb[0].mxu0
      %446 = vmatprep.mubr.bf16.mxu0 0
      %447 = vmatmul.mubr.bf16.gmra.mrb[0].mxu0 %v344
      %v448 = vpop.f32.mrb[0].mxu0
      %v449 = vadd.f32 0.0, %v448
      %v450 = vpop.f32.mrb[0].mxu0
      %v451 = vpop.f32.mrb[0].mxu0
      %v452 = vadd.f32 0.0, %v451
      %v453 = vpop.f32.mrb[0].mxu0
      %454 = vmatprep.mubr.bf16.mxu0 0
      %455 = vmatmul.mubr.bf16.gmra.mrb[0].mxu0 %v345
      %v456 = vpop.f32.mrb[0].mxu0
      %v457 = vadd.f32 0.0, %v456
      %v458 = vpop.f32.mrb[0].mxu0
      %v459 = vpop.f32.mrb[0].mxu0
      %v460 = vadd.f32 0.0, %v459
      %v461 = vpop.f32.mrb[0].mxu0
      %462 = vdwg.mxu0
      %v471 = vunpack.c.l.b16 %v278
      %v472 = vunpack.c.l.b16 %v279
      %v473 = vunpack.c.l.b16 %v280
      %v474 = vunpack.c.l.b16 %v281
      %v475 = vunpack.c.l.b16 %v282
      %v476 = vunpack.c.l.b16 %v283
      %v477 = vunpack.c.l.b16 %v284
      %v478 = vunpack.c.l.b16 %v285
      %v479 = vpack.c.b16 %v472, %v471
      %v480 = vpack.c.b16 %v474, %v473
      %v481 = vpack.c.b16 %v476, %v475
      %v482 = vpack.c.b16 %v478, %v477
      %v503 = vunpack.c.l.b16 %v286
      %v504 = vunpack.c.l.b16 %v287
      %v505 = vunpack.c.l.b16 %v288
      %v506 = vunpack.c.l.b16 %v289
      %v507 = vunpack.c.l.b16 %v290
      %v508 = vunpack.c.l.b16 %v291
      %v509 = vunpack.c.l.b16 %v292
      %v510 = vunpack.c.l.b16 %v293
      %v511 = vunpack.c.l.b16 %v294
      %v512 = vunpack.c.l.b16 %v295
      %v513 = vunpack.c.l.b16 %v296
      %v514 = vunpack.c.l.b16 %v297
      %v515 = vunpack.c.l.b16 %v298
      %v516 = vunpack.c.l.b16 %v299
      %v517 = vunpack.c.l.b16 %v300
      %v518 = vunpack.c.l.b16 %v301
      %v519 = vpack.c.b16 %v504, %v503
      %v520 = vpack.c.b16 %v506, %v505
      %v521 = vpack.c.b16 %v508, %v507
      %v522 = vpack.c.b16 %v510, %v509
      %v523 = vpack.c.b16 %v512, %v511
      %v524 = vpack.c.b16 %v514, %v513
      %v525 = vpack.c.b16 %v516, %v515
      %v526 = vpack.c.b16 %v518, %v517
      %535 = vmatprep.subr.bf16.mxu0 0
      %536 = vmatpush1.bf16.msra.mxu0 %v519
      %537 = vmatprep.subr.bf16.mxu0 0
      %538 = vmatpush1.bf16.msra.mxu0 %v520
      %539 = vmatprep.subr.bf16.mxu0 0
      %540 = vmatpush1.bf16.msra.mxu0 %v521
      %541 = vmatprep.subr.bf16.mxu0 0
      %542 = vmatpush1.bf16.msra.mxu0 %v522
      %543 = vmatprep.subr.bf16.mxu0 0
      %544 = vmatpush1.bf16.msra.mxu0 %v523
      %545 = vmatprep.subr.bf16.mxu0 0
      %546 = vmatpush1.bf16.msra.mxu0 %v524
      %547 = vmatprep.subr.bf16.mxu0 0
      %548 = vmatpush1.bf16.msra.mxu0 %v525
      %549 = vmatprep.subr.bf16.mxu0 0
      %550 = vmatpush1.bf16.msra.mxu0 %v526
      %551 = vmatprep.subr.bf16.mxu0 0
      %552 = vmatpush1.bf16.msra.mxu0 0
      %553 = vmatprep.subr.bf16.mxu0 0
      %554 = vmatpush1.bf16.msra.mxu0 0
      %555 = vmatprep.subr.bf16.mxu0 0
      %556 = vmatpush1.bf16.msra.mxu0 0
      %557 = vmatprep.subr.bf16.mxu0 0
      %558 = vmatpush1.bf16.msra.mxu0 0
      %559 = vmatprep.subr.bf16.mxu0 0
      %560 = vmatpush1.bf16.msra.mxu0 0
      %561 = vmatprep.subr.bf16.mxu0 0
      %562 = vmatpush1.bf16.msra.mxu0 0
      %563 = vmatprep.subr.bf16.mxu0 0
      %564 = vmatpush1.bf16.msra.mxu0 0
      %565 = vmatprep.subr.bf16.mxu0 0
      %566 = vmatpush1.bf16.msra.mxu0 0
      %567 = vmatprep.mubr.bf16.mxu0 0
      %568 = vmatmul.mubr.bf16.gmra.mrb[0].mxu0 %v479
      %v569 = vpop.f32.mrb[0].mxu0
      %v570 = vadd.f32 %v433, %v569
      %v571 = vpop.f32.mrb[0].mxu0
      %v572 = vpop.f32.mrb[0].mxu0
      %v573 = vadd.f32 %v436, %v572
      %v574 = vpop.f32.mrb[0].mxu0
      %575 = vmatprep.mubr.bf16.mxu0 0
      %576 = vmatmul.mubr.bf16.gmra.mrb[0].mxu0 %v480
      %v577 = vpop.f32.mrb[0].mxu0
      %v578 = vadd.f32 %v441, %v577
      %v579 = vpop.f32.mrb[0].mxu0
      %v580 = vpop.f32.mrb[0].mxu0
      %v581 = vadd.f32 %v444, %v580
      %v582 = vpop.f32.mrb[0].mxu0
      %583 = vmatprep.mubr.bf16.mxu0 0
      %584 = vmatmul.mubr.bf16.gmra.mrb[0].mxu0 %v481
      %v585 = vpop.f32.mrb[0].mxu0
      %v586 = vadd.f32 %v449, %v585
      %v587 = vpop.f32.mrb[0].mxu0
      %v588 = vpop.f32.mrb[0].mxu0
      %v589 = vadd.f32 %v452, %v588
      %v590 = vpop.f32.mrb[0].mxu0
      %591 = vmatprep.mubr.bf16.mxu0 0
      %592 = vmatmul.mubr.bf16.gmra.mrb[0].mxu0 %v482
      %v593 = vpop.f32.mrb[0].mxu0
      %v594 = vadd.f32 %v457, %v593
      %v595 = vpop.f32.mrb[0].mxu0
      %v596 = vpop.f32.mrb[0].mxu0
      %v597 = vadd.f32 %v460, %v596
      %v598 = vpop.f32.mrb[0].mxu0
      %599 = vdwg.mxu0
      %v600 = vld [vmem:[%s4] sm:$0x1]
      %v602 = vlaneseq
      %v603 = vshrl.u32 %v602, 7
      %v604 = vsub.s32 0, %v603
      %v605 = vrot.slane %v600, %v604
      %v607 = vmul.f32 %v570, %v605
      %v608 = vmul.f32 %v573, %v605
      %v609 = vmul.f32 %v578, %v605
      %v610 = vmul.f32 %v581, %v605
      %v611 = vmul.f32 %v586, %v605
      %v612 = vmul.f32 %v589, %v605
      %v613 = vmul.f32 %v594, %v605
      %v614 = vmul.f32 %v597, %v605
      %v615 = vld [vmem:[%s5] sm:$0x1]
      %v617 = vlaneseq
      %v618 = vshrl.u32 %v617, 7
      %v619 = vsub.s32 0, %v618
      %v620 = vrot.slane %v615, %v619
      %v622 = vadd.f32 %v607, %v620
      %v623 = vadd.f32 %v608, %v620
      %v624 = vadd.f32 %v609, %v620
      %v625 = vadd.f32 %v610, %v620
      %v626 = vadd.f32 %v611, %v620
      %v627 = vadd.f32 %v612, %v620
      %v628 = vadd.f32 %v613, %v620
      %v629 = vadd.f32 %v614, %v620
      %v630 = vxor.u32 %v622, 2147483648
      %v631 = vxor.u32 %v623, 2147483648
      %v632 = vxor.u32 %v624, 2147483648
      %v633 = vxor.u32 %v625, 2147483648
      %v634 = vxor.u32 %v626, 2147483648
      %v635 = vxor.u32 %v627, 2147483648
      %v636 = vxor.u32 %v628, 2147483648
      %v637 = vxor.u32 %v629, 2147483648
      %v638 = vmul.f32 %v630, 1.442695
      %v639 = vpow.pop %v638
      %v640 = vmul.f32 %v631, 1.442695
      %v641 = vpow.pop %v640
      %v642 = vmul.f32 %v632, 1.442695
      %v643 = vpow.pop %v642
      %v644 = vmul.f32 %v633, 1.442695
      %v645 = vpow.pop %v644
      %v646 = vmul.f32 %v634, 1.442695
      %v647 = vpow.pop %v646
      %v648 = vmul.f32 %v635, 1.442695
      %v649 = vpow.pop %v648
      %v650 = vmul.f32 %v636, 1.442695
      %v651 = vpow.pop %v650
      %v652 = vmul.f32 %v637, 1.442695
      %v653 = vpow.pop %v652
      %v654 = vadd.f32 %v639, 1.0
      %v655 = vadd.f32 %v641, 1.0
      %v656 = vadd.f32 %v643, 1.0
      %v657 = vadd.f32 %v645, 1.0
      %v658 = vadd.f32 %v647, 1.0
      %v659 = vadd.f32 %v649, 1.0
      %v660 = vadd.f32 %v651, 1.0
      %v661 = vadd.f32 %v653, 1.0
      %v662 = vrcp.pop %v654
      %v663 = vmul.f32 1.0, %v662
      %v664 = vrcp.pop %v655
      %v665 = vmul.f32 1.0, %v664
      %v666 = vrcp.pop %v656
      %v667 = vmul.f32 1.0, %v666
      %v668 = vrcp.pop %v657
      %v669 = vmul.f32 1.0, %v668
      %v670 = vrcp.pop %v658
      %v671 = vmul.f32 1.0, %v670
      %v672 = vrcp.pop %v659
      %v673 = vmul.f32 1.0, %v672
      %v674 = vrcp.pop %v660
      %v675 = vmul.f32 1.0, %v674
      %v676 = vrcp.pop %v661
      %v677 = vmul.f32 1.0, %v676
      %v678 = vmul.f32 %v622, %v663
      %v679 = vmul.f32 %v623, %v665
      %v680 = vmul.f32 %v624, %v667
      %v681 = vmul.f32 %v625, %v669
      %v682 = vmul.f32 %v626, %v671
      %v683 = vmul.f32 %v627, %v673
      %v684 = vmul.f32 %v628, %v675
      %v685 = vmul.f32 %v629, %v677
      %v686 = vpack.c.bf16 %v679, %v678
      %v687 = vpack.c.bf16 %v681, %v680
      %v688 = vpack.c.bf16 %v683, %v682
      %v689 = vpack.c.bf16 %v685, %v684
      %v694 = vunpack.c.l.b16 %v686
      %v695 = vunpack.c.h.b16 %v686
      %v696 = vunpack.c.l.b16 %v687
      %v697 = vunpack.c.h.b16 %v687
      %v698 = vunpack.c.l.b16 %v688
      %v699 = vunpack.c.h.b16 %v688
      %v700 = vunpack.c.l.b16 %v689
      %v701 = vunpack.c.h.b16 %v689
      %v702 = vpack.c.b16 %v694, %v694
      %v703 = vpack.c.b16 %v695, %v695
      %v704 = vpack.c.b16 %v696, %v696
      %v705 = vpack.c.b16 %v697, %v697
      %v706 = vpack.c.b16 %v698, %v698
      %v707 = vpack.c.b16 %v699, %v699
      %v708 = vpack.c.b16 %v700, %v700
      %v709 = vpack.c.b16 %v701, %v701
      %718 = vst [vmem:[%s275] sm:$0xf] %v702
      %719 = vst [vmem:[%s275 + $0x4] sm:$0xf] %v703
      %720 = vst [vmem:[%s275 + $0x8] sm:$0xf] %v704
      %721 = vst [vmem:[%s275 + $0xc] sm:$0xf] %v705
      %722 = vst [vmem:[%s275 + $0x10] sm:$0xf] %v706
      %723 = vst [vmem:[%s275 + $0x14] sm:$0xf] %v707
      %724 = vst [vmem:[%s275 + $0x18] sm:$0xf] %v708
      %725 = vst [vmem:[%s275 + $0x1c] sm:$0xf] %v709
      %s726 = smul.u32 8, %s17
      %p727 = scmp.lt.s32.totalorder %s726, 15
      %s728 = scalar_select %p727, %s726, 15
      %s729 = smul.addr %s728, 4
      %s730 = scalar_lea.vmem %s6, %s729
      // Predicated region
      $region45: #{_lambda_.9} parent=43 // pred_check
        %p731 = pneg %p171
      $region46: #{_lambda_.9} parent=43 // pred_check_branch
        %733 = sbr.rel (%p731) target = $region48
      $region47: #{_lambda_.9} parent=43 // pred_region
        %s734 = smul.u32 8, %s17
      $region48: #{_lambda_.9} parent=43 // pred_fallthru
        _
    $region44: #{_lambda_.9} parent=5 // pred_fallthru
      _
    %p735 = scmp.le.s32.totalorder 2, %s12
    // Predicated region
    $region49: #{_lambda_.9} parent=5 // pred_check
      %p736 = pneg %p735
    $region50: #{_lambda_.9} parent=5 // pred_check_branch
      %738 = sbr.rel (%p736) target = $region52
    $region51: #{_lambda_.9} parent=5 // pred_region
      %s739 = ssub.s32 %s12, 2
      // Predicated region
      $region53: #{_lambda_.9} parent=51 // pred_check
        %p740 = pneg %p177
      $region54: #{_lambda_.9} parent=51 // pred_check_branch
        %742 = sbr.rel (%p740) target = $region56
      $region55: #{_lambda_.9} parent=51 // pred_region
        %s743 = smul.u32 8, %s18
        %p744 = scmp.lt.s32.totalorder %s743, 15
        %s745 = scalar_select %p744, %s743, 15
        %s746 = smul.addr %s745, 4
        %s747 = scalar_lea.vmem %s6, %s746
      $region56: #{_lambda_.9} parent=51 // pred_fallthru
        _
    $region52: #{_lambda_.9} parent=5 // pred_fallthru
      _
  $region6: #{_lambda_.9} parent=0 // loop_footer
    %s16 = sadd.s32 1, %s12
  $region7: #{_lambda_.9} parent=0 // loop_footer_branch
    %11 = sbr.rel target = $region3
  $region8: #{_lambda_.9} parent=0 // loop_exit
    _

</llo_original>
